<compile_context>
chip_gen: v5e
topology: v5e:2x2
jax: 0.10.0
libtpu: 0.0.40
codegen_flags: <defaults>
</compile_context>

<pallas_src>
import functools

import jax
import jax.numpy as jnp
from jax import lax
from jax.experimental import pallas as pl
from jax.experimental.pallas import tpu as pltpu


# --------------------------------------------------------------------------------------
# Kernel
# --------------------------------------------------------------------------------------
def _bilstm_kernel(emb_ref,      # (1, T*TB, E)  bf16  batch-blocked, time-major embeddings
                   wihf_ref,     # (E, 4H)       bf16  input->gates, forward   [i|f|g|o]
                   wihb_ref,     # (E, 4H)       bf16  input->gates, backward
                   bf_ref,       # (1, 4H)       f32   bih_f + bhh_f
                   bb_ref,       # (1, 4H)       f32   bih_b + bhh_b
                   whhf_ref,     # (H, 4H)       bf16  hidden->gates, forward
                   whhb_ref,     # (H, 4H)       bf16  hidden->gates, backward
                   woutf_ref,    # (H, Op)       bf16  output projection, forward half
                   woutb_ref,    # (H, Op)       bf16  output projection, backward half
                   bout_ref,     # (1, Op)       f32
                   out_ref,      # (1, T*TB, Op) f32
                   gxf_ref,      # scratch (T*TB, 4H) bf16
                   gxb_ref,      # scratch (T*TB, 4H) bf16
                   hidf_ref,     # scratch (T*TB, H)  bf16
                   hidb_ref,     # scratch (T*TB, H)  bf16
                   *, T, TB):
    H = whhf_ref.shape[0]

    # ---- prologue: whole-block input->gates projection, one big MXU matmul per direction ----
    emb = emb_ref[0]                                            # (T*TB, E) bf16
    gxf_ref[...] = (jnp.dot(emb, wihf_ref[...], preferred_element_type=jnp.float32)
                    + bf_ref[...]).astype(gxf_ref.dtype)
    gxb_ref[...] = (jnp.dot(emb, wihb_ref[...], preferred_element_type=jnp.float32)
                    + bb_ref[...]).astype(gxb_ref.dtype)

    # loop-invariant recurrent weights, loaded once
    whhf = whhf_ref[...]
    whhb = whhb_ref[...]

    def _sig(x):
        # sigmoid(x) = 0.5*(tanh(0.5*x)+1): single EUP op + cheap VPU instead of exp+recip
        return 0.5 * jnp.tanh(0.5 * x) + 0.5

    def gates_to_hc(g, c):
        # PyTorch nn.LSTM gate order: [i | f | g | o]
        i = _sig(g[:, 0 * H:1 * H])
        f = _sig(g[:, 1 * H:2 * H])
        gg = jnp.tanh(g[:, 2 * H:3 * H])
        o = _sig(g[:, 3 * H:4 * H])
        c_new = f * c + i * gg
        return o * jnp.tanh(c_new), c_new

    def step(t, carry):
        h_f, h_b, c_f, c_b = carry                              # h: bf16 (TB,H), c: f32 (TB,H)
        tb = T - 1 - t
        rf = pl.multiple_of(t * TB, TB)
        rb = pl.multiple_of(tb * TB, TB)
        # two independent (TB,H)@(H,4H) matmuls; no zero-padded block-diagonal MACs
        g_f = (jnp.dot(h_f, whhf, preferred_element_type=jnp.float32)
               + gxf_ref[pl.ds(rf, TB), :])
        g_b = (jnp.dot(h_b, whhb, preferred_element_type=jnp.float32)
               + gxb_ref[pl.ds(rb, TB), :])
        hf32, c_f = gates_to_hc(g_f, c_f)
        hb32, c_b = gates_to_hc(g_b, c_b)
        h_f = hf32.astype(hidf_ref.dtype)
        h_b = hb32.astype(hidb_ref.dtype)
        hidf_ref[pl.ds(rf, TB), :] = h_f
        hidb_ref[pl.ds(rb, TB), :] = h_b
        return h_f, h_b, c_f, c_b

    zh = jnp.zeros((TB, H), hidf_ref.dtype)
    zc = jnp.zeros((TB, H), jnp.float32)
    unroll = True if T <= 16 else min(8, T)
    lax.fori_loop(0, T, step, (zh, zh, zc, zc), unroll=unroll)

    # ---- epilogue: output projection, two big matmuls + one dense lane-padded store ----
    y = (jnp.dot(hidf_ref[...], woutf_ref[...], preferred_element_type=jnp.float32)
         + jnp.dot(hidb_ref[...], woutb_ref[...], preferred_element_type=jnp.float32)
         + bout_ref[...])
    out_ref[0] = y


# --------------------------------------------------------------------------------------
# Wrapper
# --------------------------------------------------------------------------------------
def _vmem_capacity_bytes():
    cap = 64 * 2 ** 20                          # conservative default = v7x per-TC VMEM
    try:
        cap = int(getattr(pltpu.get_tpu_info(), "vmem_capacity_bytes", cap))
    except Exception:
        pass
    return cap


def bilstm_forward(tokens, params, *, max_batch_block=256):
    """tokens: (B, T) int32.  Returns logits (B, T, O) (PyTorch batch_first)."""
    emb_tbl = params["embedding"]               # (V, E), row 0 zeroed (padding_idx=0)
    B, T = tokens.shape
    E = emb_tbl.shape[1]
    H = params["whh_f"].shape[1]
    O = params["b_out"].shape[0]
    Op = ((O + 127) // 128) * 128               # lane-dense (128-padded) output width

    # ---- generation-aware VMEM budget: 25% headroom below physical capacity ----
    budget = int(_vmem_capacity_bytes() * 0.75)

    # bytes resident in VMEM per batch row of a block, per timestep
    per_row = T * (2 * 2 * E                    # emb input block, bf16, double-buffered
                   + 2 * 4 * Op                 # output block, f32, double-buffered
                   + 2 * 2 * 4 * H              # gx fwd+bwd scratch, bf16
                   + 2 * 2 * H)                 # hidden fwd+bwd scratch, bf16
    weight_bytes = (2 * 2 * (2 * E * 4 * H + 2 * H * 4 * H + 2 * H * Op)
                    + 4 * (2 * 4 * H + Op))

    # batch tile: multiple of 16 (bf16 sublane tile) so dynamic row slices stay aligned
    TB = max(16, min(max_batch_block, int((budget - weight_bytes) // max(per_row, 1))))
    TB = max(16, (TB // 16) * 16)
    B16 = -(-B // 16) * 16
    if TB >= B16:
        TB = B16
        if B16 >= 32:                           # keep >=2 blocks so the parallel axis can split over 2 TCs
            TB = (-(-(B16 // 2) // 16)) * 16
    TB = max(16, TB)
    nb = -(-B // TB)
    B_pad = nb * TB

    # pad batch with token 0 (zero embedding row); padded rows are sliced away at the end
    tokens_p = jnp.zeros((B_pad, T), tokens.dtype).at[:B, :].set(tokens)

    # batch-blocked, time-major embedding gather (glue stays in XLA): (nb, T*TB, E) bf16
    tok_blk = jnp.transpose(tokens_p.reshape(nb, TB, T), (0, 2, 1))      # (nb, T, TB)
    emb_blk = jnp.take(emb_tbl.astype(jnp.bfloat16), tok_blk, axis=0)    # (nb, T, TB, E)
    emb_blk = emb_blk.reshape(nb, T * TB, E)

    f32, bf16 = jnp.float32, jnp.bfloat16
    wihf = params["wih_f"].T.astype(bf16)                                # (E, 4H)
    wihb = params["wih_b"].T.astype(bf16)
    bf_ = (params["bih_f"] + params["bhh_f"]).reshape(1, 4 * H).astype(f32)
    bb_ = (params["bih_b"] + params["bhh_b"]).reshape(1, 4 * H).astype(f32)
    whhf = params["whh_f"].T.astype(bf16)                                # (H, 4H)
    whhb = params["whh_b"].T.astype(bf16)
    woutf = jnp.zeros((H, Op), f32).at[:, :O].set(params["w_out"][:, :H].T).astype(bf16)
    woutb = jnp.zeros((H, Op), f32).at[:, :O].set(params["w_out"][:, H:].T).astype(bf16)
    bout = jnp.zeros((1, Op), f32).at[:, :O].set(params["b_out"])

    resident = TB * per_row + weight_bytes
    vmem_limit = int(min(budget, max(int(resident * 1.5), 16 * 2 ** 20)))

    kernel = functools.partial(_bilstm_kernel, T=T, TB=TB)

    out = pl.pallas_call(
        kernel,
        out_shape=jax.ShapeDtypeStruct((nb, T * TB, Op), jnp.float32),
        grid=(nb,),
        in_specs=[
            pl.BlockSpec((1, T * TB, E), lambda i: (i, 0, 0)),
            pl.BlockSpec((E, 4 * H), lambda i: (0, 0)),
            pl.BlockSpec((E, 4 * H), lambda i: (0, 0)),
            pl.BlockSpec((1, 4 * H), lambda i: (0, 0)),
            pl.BlockSpec((1, 4 * H), lambda i: (0, 0)),
            pl.BlockSpec((H, 4 * H), lambda i: (0, 0)),
            pl.BlockSpec((H, 4 * H), lambda i: (0, 0)),
            pl.BlockSpec((H, Op), lambda i: (0, 0)),
            pl.BlockSpec((H, Op), lambda i: (0, 0)),
            pl.BlockSpec((1, Op), lambda i: (0, 0)),
        ],
        out_specs=pl.BlockSpec((1, T * TB, Op), lambda i: (i, 0, 0)),
        scratch_shapes=[
            pltpu.VMEM((T * TB, 4 * H), jnp.bfloat16),   # gx forward
            pltpu.VMEM((T * TB, 4 * H), jnp.bfloat16),   # gx backward
            pltpu.VMEM((T * TB, H), jnp.bfloat16),       # hidden forward
            pltpu.VMEM((T * TB, H), jnp.bfloat16),       # hidden backward
        ],
        compiler_params=pltpu.CompilerParams(
            dimension_semantics=("parallel",),
            vmem_limit_bytes=vmem_limit),
    )(emb_blk, wihf, wihb, bf_, bb_, whhf, whhb, woutf, woutb, bout)

    # (nb, T*TB, Op) -> (B, T, O); row within a block is t*TB + local_batch.
    out = out.reshape(nb, T, TB, Op)[..., :O]
    out = jnp.transpose(out, (0, 2, 1, 3)).reshape(B_pad, T, O)
    return out[:B]


# --------------------------------------------------------------------------------------
# Pure-JAX reference (matches PyTorch nn.LSTM / nn.Linear semantics)
# --------------------------------------------------------------------------------------
def _lstm_ref(emb, wih, whh, b):
    B, T, E = emb.shape
    H = whh.shape[1]

    def step(carry, x_t):
        h, c = carry
        g = x_t @ wih.T + h @ whh.T + b
        i = jax.nn.sigmoid(g[:, :H])
        f = jax.nn.sigmoid(g[:, H:2 * H])
        gg = jnp.tanh(g[:, 2 * H:3 * H])
        o = jax.nn.sigmoid(g[:, 3 * H:])
        c = f * c + i * gg
        h = o * jnp.tanh(c)
        return (h, c), h

    xs = jnp.swapaxes(emb, 0, 1)
    (_, _), hs = lax.scan(step, (jnp.zeros((B, H)), jnp.zeros((B, H))), xs)
    return jnp.swapaxes(hs, 0, 1)


def bilstm_reference(tokens, params):
    emb = jnp.take(params["embedding"], tokens, axis=0)
    b_f = params["bih_f"] + params["bhh_f"]
    b_b = params["bih_b"] + params["bhh_b"]
    hf = _lstm_ref(emb, params["wih_f"], params["whh_f"], b_f)
    hb = jnp.flip(_lstm_ref(jnp.flip(emb, axis=1),
                            params["wih_b"], params["whh_b"], b_b), axis=1)
    h = jnp.concatenate([hf, hb], axis=-1)
    return h @ params["w_out"].T + params["b_out"]


def init_params(key, vocab_size, embedding_dim, hidden_size, output_size):
    ks = jax.random.split(key, 12)
    u = lambda k, shape, s=0.1: jax.random.uniform(k, shape, jnp.float32, -s, s)
    V, E, H, O = vocab_size, embedding_dim, hidden_size, output_size
    emb = u(ks[0], (V, E))
    emb = emb.at[0].set(0.0)   # padding_idx=0
    return {
        "embedding": emb,
        "wih_f": u(ks[1], (4 * H, E)), "whh_f": u(ks[2], (4 * H, H)),
        "bih_f": u(ks[3], (4 * H,)),   "bhh_f": u(ks[4], (4 * H,)),
        "wih_b": u(ks[5], (4 * H, E)), "whh_b": u(ks[6], (4 * H, H)),
        "bih_b": u(ks[7], (4 * H,)),   "bhh_b": u(ks[8], (4 * H,)),
        "w_out": u(ks[9], (O, 2 * H)), "b_out": u(ks[10], (O,)),
    }


if __name__ == "__main__":
    V, E, H, O = 64, 16, 32, 8
    B, T = 2, 8

    key = jax.random.PRNGKey(0)
    kp, kt = jax.random.split(key)
    params = init_params(kp, V, E, H, O)
    tokens = jax.random.randint(kt, (B, T), 0, V, dtype=jnp.int32)

    out = jax.block_until_ready(bilstm_forward(tokens, params))
    ref = jax.block_until_ready(bilstm_reference(tokens, params))

    assert out.shape == (B, T, O), out.shape
    err = float(jnp.max(jnp.abs(out - ref)))
    if err > 2e-2:
        raise AssertionError(f"mismatch, max abs diff {err}")
    print("KERNEL_OK")
</pallas_src>

<mosaic_0001>
module attributes {stable_mosaic.version = 11 : i64} {
  func.func @_bilstm_kernel(%arg0: i32, %arg1: memref<1x128x16xbf16, #tpu.memory_space<vmem>>, %arg2: memref<16x128xbf16, #tpu.memory_space<vmem>>, %arg3: memref<16x128xbf16, #tpu.memory_space<vmem>>, %arg4: memref<1x128xf32, #tpu.memory_space<vmem>>, %arg5: memref<1x128xf32, #tpu.memory_space<vmem>>, %arg6: memref<32x128xbf16, #tpu.memory_space<vmem>>, %arg7: memref<32x128xbf16, #tpu.memory_space<vmem>>, %arg8: memref<32x128xbf16, #tpu.memory_space<vmem>>, %arg9: memref<32x128xbf16, #tpu.memory_space<vmem>>, %arg10: memref<1x128xf32, #tpu.memory_space<vmem>>, %arg11: memref<1x128x128xf32, #tpu.memory_space<vmem>>, %arg12: memref<128x128xbf16, #tpu.memory_space<vmem>>, %arg13: memref<128x128xbf16, #tpu.memory_space<vmem>>, %arg14: memref<128x32xbf16, #tpu.memory_space<vmem>>, %arg15: memref<128x32xbf16, #tpu.memory_space<vmem>>) attributes {dimension_semantics = [#tpu.dimension_semantics<parallel>], iteration_bounds = array<i64: 1>, scalar_prefetch = 0 : i64, scratch_operands = 4 : i64, tpu.core_type = #tpu.core_type<tc>, window_params = [{transform_indices = @transform_0, window_bounds = array<i64: 1, 128, 16>}, {pipeline_mode = #tpu.pipeline_mode<synchronous>, transform_indices = @transform_1, window_bounds = array<i64: 16, 128>}, {pipeline_mode = #tpu.pipeline_mode<synchronous>, transform_indices = @transform_2, window_bounds = array<i64: 16, 128>}, {pipeline_mode = #tpu.pipeline_mode<synchronous>, transform_indices = @transform_3, window_bounds = array<i64: 1, 128>}, {pipeline_mode = #tpu.pipeline_mode<synchronous>, transform_indices = @transform_4, window_bounds = array<i64: 1, 128>}, {pipeline_mode = #tpu.pipeline_mode<synchronous>, transform_indices = @transform_5, window_bounds = array<i64: 32, 128>}, {pipeline_mode = #tpu.pipeline_mode<synchronous>, transform_indices = @transform_6, window_bounds = array<i64: 32, 128>}, {pipeline_mode = #tpu.pipeline_mode<synchronous>, transform_indices = @transform_7, window_bounds = array<i64: 32, 128>}, {pipeline_mode = #tpu.pipeline_mode<synchronous>, transform_indices = @transform_8, window_bounds = array<i64: 32, 128>}, {pipeline_mode = #tpu.pipeline_mode<synchronous>, transform_indices = @transform_9, window_bounds = array<i64: 1, 128>}, {transform_indices = @transform_10, window_bounds = array<i64: 1, 128, 128>}]} {
    %c0 = arith.constant 0 : index
    %c0_0 = arith.constant 0 : index
    %c0_1 = arith.constant 0 : index
    %0 = vector.load %arg1[%c0, %c0_0, %c0_1] : memref<1x128x16xbf16, #tpu.memory_space<vmem>>, vector<1x128x16xbf16>
    %1 = vector.shape_cast %0 : vector<1x128x16xbf16> to vector<128x16xbf16>
    %c0_2 = arith.constant 0 : index
    %c0_3 = arith.constant 0 : index
    %2 = vector.load %arg2[%c0_2, %c0_3] : memref<16x128xbf16, #tpu.memory_space<vmem>>, vector<16x128xbf16>
    %cst = arith.constant dense<0.000000e+00> : vector<128x128xf32>
    %3 = tpu.matmul %1, %2, %cst {dimension_numbers = #tpu.dot_dimension_numbers<[1], [0], [0], [1], [0, 0, 1, 1], [], []>} : vector<128x16xbf16>, vector<16x128xbf16>, vector<128x128xf32> -> vector<128x128xf32>
    %c0_4 = arith.constant 0 : index
    %c0_5 = arith.constant 0 : index
    %4 = vector.load %arg4[%c0_4, %c0_5] : memref<1x128xf32, #tpu.memory_space<vmem>>, vector<1x128xf32>
    %5 = vector.broadcast %4 : vector<1x128xf32> to vector<128x128xf32>
    %6 = arith.addf %3, %5 : vector<128x128xf32>
    %7 = arith.truncf %6 : vector<128x128xf32> to vector<128x128xbf16>
    %c0_6 = arith.constant 0 : index
    %c0_7 = arith.constant 0 : index
    %8 = vector.load %arg12[%c0_6, %c0_7] : memref<128x128xbf16, #tpu.memory_space<vmem>>, vector<128x128xbf16>
    tpu.vector_store %arg12[%c0_6, %c0_7], %7 {strides = array<i32>} : memref<128x128xbf16, #tpu.memory_space<vmem>>, vector<128x128xbf16>,
    %c0_8 = arith.constant 0 : index
    %c0_9 = arith.constant 0 : index
    %9 = vector.load %arg3[%c0_8, %c0_9] : memref<16x128xbf16, #tpu.memory_space<vmem>>, vector<16x128xbf16>
    %cst_10 = arith.constant dense<0.000000e+00> : vector<128x128xf32>
    %10 = tpu.matmul %1, %9, %cst_10 {dimension_numbers = #tpu.dot_dimension_numbers<[1], [0], [0], [1], [0, 0, 1, 1], [], []>} : vector<128x16xbf16>, vector<16x128xbf16>, vector<128x128xf32> -> vector<128x128xf32>
    %c0_11 = arith.constant 0 : index
    %c0_12 = arith.constant 0 : index
    %11 = vector.load %arg5[%c0_11, %c0_12] : memref<1x128xf32, #tpu.memory_space<vmem>>, vector<1x128xf32>
    %12 = vector.broadcast %11 : vector<1x128xf32> to vector<128x128xf32>
    %13 = arith.addf %10, %12 : vector<128x128xf32>
    %14 = arith.truncf %13 : vector<128x128xf32> to vector<128x128xbf16>
    %c0_13 = arith.constant 0 : index
    %c0_14 = arith.constant 0 : index
    %15 = vector.load %arg13[%c0_13, %c0_14] : memref<128x128xbf16, #tpu.memory_space<vmem>>, vector<128x128xbf16>
    tpu.vector_store %arg13[%c0_13, %c0_14], %14 {strides = array<i32>} : memref<128x128xbf16, #tpu.memory_space<vmem>>, vector<128x128xbf16>,
    %c0_15 = arith.constant 0 : index
    %c0_16 = arith.constant 0 : index
    %16 = vector.load %arg6[%c0_15, %c0_16] : memref<32x128xbf16, #tpu.memory_space<vmem>>, vector<32x128xbf16>
    %c0_17 = arith.constant 0 : index
    %c0_18 = arith.constant 0 : index
    %17 = vector.load %arg7[%c0_17, %c0_18] : memref<32x128xbf16, #tpu.memory_space<vmem>>, vector<32x128xbf16>
    %cst_19 = arith.constant 0.000000e+00 : bf16
    %18 = vector.broadcast %cst_19 : bf16 to vector<16x32xbf16>
    %cst_20 = arith.constant 0.000000e+00 : f32
    %19 = vector.broadcast %cst_20 : f32 to vector<16x32xf32>
    %c0_i32 = arith.constant 0 : i32
    %c7_i32 = arith.constant 7 : i32
    %20 = arith.subi %c7_i32, %c0_i32 : i32
    %c16_i32 = arith.constant 16 : i32
    %21 = arith.muli %c0_i32, %c16_i32 : i32
    %22 = tpu.assume_multiple %21, 16 : i32
    %c16_i32_21 = arith.constant 16 : i32
    %23 = arith.muli %20, %c16_i32_21 : i32
    %24 = tpu.assume_multiple %23, 16 : i32
    %cst_22 = arith.constant dense<0.000000e+00> : vector<16x128xf32>
    %25 = tpu.matmul %18, %16, %cst_22 {dimension_numbers = #tpu.dot_dimension_numbers<[1], [0], [0], [1], [0, 0, 1, 1], [], []>} : vector<16x32xbf16>, vector<32x128xbf16>, vector<16x128xf32> -> vector<16x128xf32>
    %26 = arith.index_cast %22 : i32 to index
    %c0_23 = arith.constant 0 : index
    %27 = vector.load %arg12[%26, %c0_23] : memref<128x128xbf16, #tpu.memory_space<vmem>>, vector<16x128xbf16>
    %28 = arith.extf %27 : vector<16x128xbf16> to vector<16x128xf32>
    %29 = arith.addf %25, %28 : vector<16x128xf32>
    %cst_24 = arith.constant dense<0.000000e+00> : vector<16x128xf32>
    %30 = tpu.matmul %18, %17, %cst_24 {dimension_numbers = #tpu.dot_dimension_numbers<[1], [0], [0], [1], [0, 0, 1, 1], [], []>} : vector<16x32xbf16>, vector<32x128xbf16>, vector<16x128xf32> -> vector<16x128xf32>
    %31 = arith.index_cast %24 : i32 to index
    %c0_25 = arith.constant 0 : index
    %32 = vector.load %arg13[%31, %c0_25] : memref<128x128xbf16, #tpu.memory_space<vmem>>, vector<16x128xbf16>
    %33 = arith.extf %32 : vector<16x128xbf16> to vector<16x128xf32>
    %34 = arith.addf %30, %33 : vector<16x128xf32>
    %35 = vector.extract_strided_slice %29 {offsets = [0, 0], sizes = [16, 32], strides = [1, 1]} : vector<16x128xf32> to vector<16x32xf32>
    %cst_26 = arith.constant 5.000000e-01 : f32
    %36 = vector.broadcast %cst_26 : f32 to vector<16x32xf32>
    %37 = arith.mulf %36, %35 : vector<16x32xf32>
    %38 = math.tanh %37 : vector<16x32xf32>
    %cst_27 = arith.constant 5.000000e-01 : f32
    %39 = vector.broadcast %cst_27 : f32 to vector<16x32xf32>
    %40 = arith.mulf %39, %38 : vector<16x32xf32>
    %cst_28 = arith.constant 5.000000e-01 : f32
    %41 = vector.broadcast %cst_28 : f32 to vector<16x32xf32>
    %42 = arith.addf %40, %41 : vector<16x32xf32>
    %43 = vector.extract_strided_slice %29 {offsets = [0, 32], sizes = [16, 32], strides = [1, 1]} : vector<16x128xf32> to vector<16x32xf32>
    %cst_29 = arith.constant 5.000000e-01 : f32
    %44 = vector.broadcast %cst_29 : f32 to vector<16x32xf32>
    %45 = arith.mulf %44, %43 : vector<16x32xf32>
    %46 = math.tanh %45 : vector<16x32xf32>
    %cst_30 = arith.constant 5.000000e-01 : f32
    %47 = vector.broadcast %cst_30 : f32 to vector<16x32xf32>
    %48 = arith.mulf %47, %46 : vector<16x32xf32>
    %cst_31 = arith.constant 5.000000e-01 : f32
    %49 = vector.broadcast %cst_31 : f32 to vector<16x32xf32>
    %50 = arith.addf %48, %49 : vector<16x32xf32>
    %51 = vector.extract_strided_slice %29 {offsets = [0, 64], sizes = [16, 32], strides = [1, 1]} : vector<16x128xf32> to vector<16x32xf32>
    %52 = math.tanh %51 : vector<16x32xf32>
    %53 = vector.extract_strided_slice %29 {offsets = [0, 96], sizes = [16, 32], strides = [1, 1]} : vector<16x128xf32> to vector<16x32xf32>
    %cst_32 = arith.constant 5.000000e-01 : f32
    %54 = vector.broadcast %cst_32 : f32 to vector<16x32xf32>
    %55 = arith.mulf %54, %53 : vector<16x32xf32>
    %56 = math.tanh %55 : vector<16x32xf32>
    %cst_33 = arith.constant 5.000000e-01 : f32
    %57 = vector.broadcast %cst_33 : f32 to vector<16x32xf32>
    %58 = arith.mulf %57, %56 : vector<16x32xf32>
    %cst_34 = arith.constant 5.000000e-01 : f32
    %59 = vector.broadcast %cst_34 : f32 to vector<16x32xf32>
    %60 = arith.addf %58, %59 : vector<16x32xf32>
    %61 = arith.mulf %50, %19 : vector<16x32xf32>
    %62 = arith.mulf %42, %52 : vector<16x32xf32>
    %63 = arith.addf %61, %62 : vector<16x32xf32>
    %64 = math.tanh %63 : vector<16x32xf32>
    %65 = arith.mulf %60, %64 : vector<16x32xf32>
    %66 = vector.extract_strided_slice %34 {offsets = [0, 0], sizes = [16, 32], strides = [1, 1]} : vector<16x128xf32> to vector<16x32xf32>
    %cst_35 = arith.constant 5.000000e-01 : f32
    %67 = vector.broadcast %cst_35 : f32 to vector<16x32xf32>
    %68 = arith.mulf %67, %66 : vector<16x32xf32>
    %69 = math.tanh %68 : vector<16x32xf32>
    %cst_36 = arith.constant 5.000000e-01 : f32
    %70 = vector.broadcast %cst_36 : f32 to vector<16x32xf32>
    %71 = arith.mulf %70, %69 : vector<16x32xf32>
    %cst_37 = arith.constant 5.000000e-01 : f32
    %72 = vector.broadcast %cst_37 : f32 to vector<16x32xf32>
    %73 = arith.addf %71, %72 : vector<16x32xf32>
    %74 = vector.extract_strided_slice %34 {offsets = [0, 32], sizes = [16, 32], strides = [1, 1]} : vector<16x128xf32> to vector<16x32xf32>
    %cst_38 = arith.constant 5.000000e-01 : f32
    %75 = vector.broadcast %cst_38 : f32 to vector<16x32xf32>
    %76 = arith.mulf %75, %74 : vector<16x32xf32>
    %77 = math.tanh %76 : vector<16x32xf32>
    %cst_39 = arith.constant 5.000000e-01 : f32
    %78 = vector.broadcast %cst_39 : f32 to vector<16x32xf32>
    %79 = arith.mulf %78, %77 : vector<16x32xf32>
    %cst_40 = arith.constant 5.000000e-01 : f32
    %80 = vector.broadcast %cst_40 : f32 to vector<16x32xf32>
    %81 = arith.addf %79, %80 : vector<16x32xf32>
    %82 = vector.extract_strided_slice %34 {offsets = [0, 64], sizes = [16, 32], strides = [1, 1]} : vector<16x128xf32> to vector<16x32xf32>
    %83 = math.tanh %82 : vector<16x32xf32>
    %84 = vector.extract_strided_slice %34 {offsets = [0, 96], sizes = [16, 32], strides = [1, 1]} : vector<16x128xf32> to vector<16x32xf32>
    %cst_41 = arith.constant 5.000000e-01 : f32
    %85 = vector.broadcast %cst_41 : f32 to vector<16x32xf32>
    %86 = arith.mulf %85, %84 : vector<16x32xf32>
    %87 = math.tanh %86 : vector<16x32xf32>
    %cst_42 = arith.constant 5.000000e-01 : f32
    %88 = vector.broadcast %cst_42 : f32 to vector<16x32xf32>
    %89 = arith.mulf %88, %87 : vector<16x32xf32>
    %cst_43 = arith.constant 5.000000e-01 : f32
    %90 = vector.broadcast %cst_43 : f32 to vector<16x32xf32>
    %91 = arith.addf %89, %90 : vector<16x32xf32>
    %92 = arith.mulf %81, %19 : vector<16x32xf32>
    %93 = arith.mulf %73, %83 : vector<16x32xf32>
    %94 = arith.addf %92, %93 : vector<16x32xf32>
    %95 = math.tanh %94 : vector<16x32xf32>
    %96 = arith.mulf %91, %95 : vector<16x32xf32>
    %97 = arith.truncf %65 : vector<16x32xf32> to vector<16x32xbf16>
    %98 = arith.truncf %96 : vector<16x32xf32> to vector<16x32xbf16>
    %99 = arith.index_cast %22 : i32 to index
    %c0_44 = arith.constant 0 : index
    %100 = vector.load %arg14[%99, %c0_44] : memref<128x32xbf16, #tpu.memory_space<vmem>>, vector<16x32xbf16>
    tpu.vector_store %arg14[%99, %c0_44], %97 {strides = array<i32>} : memref<128x32xbf16, #tpu.memory_space<vmem>>, vector<16x32xbf16>,
    %101 = arith.index_cast %24 : i32 to index
    %c0_45 = arith.constant 0 : index
    %102 = vector.load %arg15[%101, %c0_45] : memref<128x32xbf16, #tpu.memory_space<vmem>>, vector<16x32xbf16>
    tpu.vector_store %arg15[%101, %c0_45], %98 {strides = array<i32>} : memref<128x32xbf16, #tpu.memory_space<vmem>>, vector<16x32xbf16>,
    %c1_i32 = arith.constant 1 : i32
    %c7_i32_46 = arith.constant 7 : i32
    %103 = arith.subi %c7_i32_46, %c1_i32 : i32
    %c16_i32_47 = arith.constant 16 : i32
    %104 = arith.muli %c1_i32, %c16_i32_47 : i32
    %105 = tpu.assume_multiple %104, 16 : i32
    %c16_i32_48 = arith.constant 16 : i32
    %106 = arith.muli %103, %c16_i32_48 : i32
    %107 = tpu.assume_multiple %106, 16 : i32
    %cst_49 = arith.constant dense<0.000000e+00> : vector<16x128xf32>
    %108 = tpu.matmul %97, %16, %cst_49 {dimension_numbers = #tpu.dot_dimension_numbers<[1], [0], [0], [1], [0, 0, 1, 1], [], []>} : vector<16x32xbf16>, vector<32x128xbf16>, vector<16x128xf32> -> vector<16x128xf32>
    %109 = arith.index_cast %105 : i32 to index
    %c0_50 = arith.constant 0 : index
    %110 = vector.load %arg12[%109, %c0_50] : memref<128x128xbf16, #tpu.memory_space<vmem>>, vector<16x128xbf16>
    %111 = arith.extf %110 : vector<16x128xbf16> to vector<16x128xf32>
    %112 = arith.addf %108, %111 : vector<16x128xf32>
    %cst_51 = arith.constant dense<0.000000e+00> : vector<16x128xf32>
    %113 = tpu.matmul %98, %17, %cst_51 {dimension_numbers = #tpu.dot_dimension_numbers<[1], [0], [0], [1], [0, 0, 1, 1], [], []>} : vector<16x32xbf16>, vector<32x128xbf16>, vector<16x128xf32> -> vector<16x128xf32>
    %114 = arith.index_cast %107 : i32 to index
    %c0_52 = arith.constant 0 : index
    %115 = vector.load %arg13[%114, %c0_52] : memref<128x128xbf16, #tpu.memory_space<vmem>>, vector<16x128xbf16>
    %116 = arith.extf %115 : vector<16x128xbf16> to vector<16x128xf32>
    %117 = arith.addf %113, %116 : vector<16x128xf32>
    %118 = vector.extract_strided_slice %112 {offsets = [0, 0], sizes = [16, 32], strides = [1, 1]} : vector<16x128xf32> to vector<16x32xf32>
    %cst_53 = arith.constant 5.000000e-01 : f32
    %119 = vector.broadcast %cst_53 : f32 to vector<16x32xf32>
    %120 = arith.mulf %119, %118 : vector<16x32xf32>
    %121 = math.tanh %120 : vector<16x32xf32>
    %cst_54 = arith.constant 5.000000e-01 : f32
    %122 = vector.broadcast %cst_54 : f32 to vector<16x32xf32>
    %123 = arith.mulf %122, %121 : vector<16x32xf32>
    %cst_55 = arith.constant 5.000000e-01 : f32
    %124 = vector.broadcast %cst_55 : f32 to vector<16x32xf32>
    %125 = arith.addf %123, %124 : vector<16x32xf32>
    %126 = vector.extract_strided_slice %112 {offsets = [0, 32], sizes = [16, 32], strides = [1, 1]} : vector<16x128xf32> to vector<16x32xf32>
    %cst_56 = arith.constant 5.000000e-01 : f32
    %127 = vector.broadcast %cst_56 : f32 to vector<16x32xf32>
    %128 = arith.mulf %127, %126 : vector<16x32xf32>
    %129 = math.tanh %128 : vector<16x32xf32>
    %cst_57 = arith.constant 5.000000e-01 : f32
    %130 = vector.broadcast %cst_57 : f32 to vector<16x32xf32>
    %131 = arith.mulf %130, %129 : vector<16x32xf32>
    %cst_58 = arith.constant 5.000000e-01 : f32
    %132 = vector.broadcast %cst_58 : f32 to vector<16x32xf32>
    %133 = arith.addf %131, %132 : vector<16x32xf32>
    %134 = vector.extract_strided_slice %112 {offsets = [0, 64], sizes = [16, 32], strides = [1, 1]} : vector<16x128xf32> to vector<16x32xf32>
    %135 = math.tanh %134 : vector<16x32xf32>
    %136 = vector.extract_strided_slice %112 {offsets = [0, 96], sizes = [16, 32], strides = [1, 1]} : vector<16x128xf32> to vector<16x32xf32>
    %cst_59 = arith.constant 5.000000e-01 : f32
    %137 = vector.broadcast %cst_59 : f32 to vector<16x32xf32>
    %138 = arith.mulf %137, %136 : vector<16x32xf32>
    %139 = math.tanh %138 : vector<16x32xf32>
    %cst_60 = arith.constant 5.000000e-01 : f32
    %140 = vector.broadcast %cst_60 : f32 to vector<16x32xf32>
    %141 = arith.mulf %140, %139 : vector<16x32xf32>
    %cst_61 = arith.constant 5.000000e-01 : f32
    %142 = vector.broadcast %cst_61 : f32 to vector<16x32xf32>
    %143 = arith.addf %141, %142 : vector<16x32xf32>
    %144 = arith.mulf %133, %63 : vector<16x32xf32>
    %145 = arith.mulf %125, %135 : vector<16x32xf32>
    %146 = arith.addf %144, %145 : vector<16x32xf32>
    %147 = math.tanh %146 : vector<16x32xf32>
    %148 = arith.mulf %143, %147 : vector<16x32xf32>
    %149 = vector.extract_strided_slice %117 {offsets = [0, 0], sizes = [16, 32], strides = [1, 1]} : vector<16x128xf32> to vector<16x32xf32>
    %cst_62 = arith.constant 5.000000e-01 : f32
    %150 = vector.broadcast %cst_62 : f32 to vector<16x32xf32>
    %151 = arith.mulf %150, %149 : vector<16x32xf32>
    %152 = math.tanh %151 : vector<16x32xf32>
    %cst_63 = arith.constant 5.000000e-01 : f32
    %153 = vector.broadcast %cst_63 : f32 to vector<16x32xf32>
    %154 = arith.mulf %153, %152 : vector<16x32xf32>
    %cst_64 = arith.constant 5.000000e-01 : f32
    %155 = vector.broadcast %cst_64 : f32 to vector<16x32xf32>
    %156 = arith.addf %154, %155 : vector<16x32xf32>
    %157 = vector.extract_strided_slice %117 {offsets = [0, 32], sizes = [16, 32], strides = [1, 1]} : vector<16x128xf32> to vector<16x32xf32>
    %cst_65 = arith.constant 5.000000e-01 : f32
    %158 = vector.broadcast %cst_65 : f32 to vector<16x32xf32>
    %159 = arith.mulf %158, %157 : vector<16x32xf32>
    %160 = math.tanh %159 : vector<16x32xf32>
    %cst_66 = arith.constant 5.000000e-01 : f32
    %161 = vector.broadcast %cst_66 : f32 to vector<16x32xf32>
    %162 = arith.mulf %161, %160 : vector<16x32xf32>
    %cst_67 = arith.constant 5.000000e-01 : f32
    %163 = vector.broadcast %cst_67 : f32 to vector<16x32xf32>
    %164 = arith.addf %162, %163 : vector<16x32xf32>
    %165 = vector.extract_strided_slice %117 {offsets = [0, 64], sizes = [16, 32], strides = [1, 1]} : vector<16x128xf32> to vector<16x32xf32>
    %166 = math.tanh %165 : vector<16x32xf32>
    %167 = vector.extract_strided_slice %117 {offsets = [0, 96], sizes = [16, 32], strides = [1, 1]} : vector<16x128xf32> to vector<16x32xf32>
    %cst_68 = arith.constant 5.000000e-01 : f32
    %168 = vector.broadcast %cst_68 : f32 to vector<16x32xf32>
    %169 = arith.mulf %168, %167 : vector<16x32xf32>
    %170 = math.tanh %169 : vector<16x32xf32>
    %cst_69 = arith.constant 5.000000e-01 : f32
    %171 = vector.broadcast %cst_69 : f32 to vector<16x32xf32>
    %172 = arith.mulf %171, %170 : vector<16x32xf32>
    %cst_70 = arith.constant 5.000000e-01 : f32
    %173 = vector.broadcast %cst_70 : f32 to vector<16x32xf32>
    %174 = arith.addf %172, %173 : vector<16x32xf32>
    %175 = arith.mulf %164, %94 : vector<16x32xf32>
    %176 = arith.mulf %156, %166 : vector<16x32xf32>
    %177 = arith.addf %175, %176 : vector<16x32xf32>
    %178 = math.tanh %177 : vector<16x32xf32>
    %179 = arith.mulf %174, %178 : vector<16x32xf32>
    %180 = arith.truncf %148 : vector<16x32xf32> to vector<16x32xbf16>
    %181 = arith.truncf %179 : vector<16x32xf32> to vector<16x32xbf16>
    %182 = arith.index_cast %105 : i32 to index
    %c0_71 = arith.constant 0 : index
    %183 = vector.load %arg14[%182, %c0_71] : memref<128x32xbf16, #tpu.memory_space<vmem>>, vector<16x32xbf16>
    tpu.vector_store %arg14[%182, %c0_71], %180 {strides = array<i32>} : memref<128x32xbf16, #tpu.memory_space<vmem>>, vector<16x32xbf16>,
    %184 = arith.index_cast %107 : i32 to index
    %c0_72 = arith.constant 0 : index
    %185 = vector.load %arg15[%184, %c0_72] : memref<128x32xbf16, #tpu.memory_space<vmem>>, vector<16x32xbf16>
    tpu.vector_store %arg15[%184, %c0_72], %181 {strides = array<i32>} : memref<128x32xbf16, #tpu.memory_space<vmem>>, vector<16x32xbf16>,
    %c2_i32 = arith.constant 2 : i32
    %c7_i32_73 = arith.constant 7 : i32
    %186 = arith.subi %c7_i32_73, %c2_i32 : i32
    %c16_i32_74 = arith.constant 16 : i32
    %187 = arith.muli %c2_i32, %c16_i32_74 : i32
    %188 = tpu.assume_multiple %187, 16 : i32
    %c16_i32_75 = arith.constant 16 : i32
    %189 = arith.muli %186, %c16_i32_75 : i32
    %190 = tpu.assume_multiple %189, 16 : i32
    %cst_76 = arith.constant dense<0.000000e+00> : vector<16x128xf32>
    %191 = tpu.matmul %180, %16, %cst_76 {dimension_numbers = #tpu.dot_dimension_numbers<[1], [0], [0], [1], [0, 0, 1, 1], [], []>} : vector<16x32xbf16>, vector<32x128xbf16>, vector<16x128xf32> -> vector<16x128xf32>
    %192 = arith.index_cast %188 : i32 to index
    %c0_77 = arith.constant 0 : index
    %193 = vector.load %arg12[%192, %c0_77] : memref<128x128xbf16, #tpu.memory_space<vmem>>, vector<16x128xbf16>
    %194 = arith.extf %193 : vector<16x128xbf16> to vector<16x128xf32>
    %195 = arith.addf %191, %194 : vector<16x128xf32>
    %cst_78 = arith.constant dense<0.000000e+00> : vector<16x128xf32>
    %196 = tpu.matmul %181, %17, %cst_78 {dimension_numbers = #tpu.dot_dimension_numbers<[1], [0], [0], [1], [0, 0, 1, 1], [], []>} : vector<16x32xbf16>, vector<32x128xbf16>, vector<16x128xf32> -> vector<16x128xf32>
    %197 = arith.index_cast %190 : i32 to index
    %c0_79 = arith.constant 0 : index
    %198 = vector.load %arg13[%197, %c0_79] : memref<128x128xbf16, #tpu.memory_space<vmem>>, vector<16x128xbf16>
    %199 = arith.extf %198 : vector<16x128xbf16> to vector<16x128xf32>
    %200 = arith.addf %196, %199 : vector<16x128xf32>
    %201 = vector.extract_strided_slice %195 {offsets = [0, 0], sizes = [16, 32], strides = [1, 1]} : vector<16x128xf32> to vector<16x32xf32>
    %cst_80 = arith.constant 5.000000e-01 : f32
    %202 = vector.broadcast %cst_80 : f32 to vector<16x32xf32>
    %203 = arith.mulf %202, %201 : vector<16x32xf32>
    %204 = math.tanh %203 : vector<16x32xf32>
    %cst_81 = arith.constant 5.000000e-01 : f32
    %205 = vector.broadcast %cst_81 : f32 to vector<16x32xf32>
    %206 = arith.mulf %205, %204 : vector<16x32xf32>
    %cst_82 = arith.constant 5.000000e-01 : f32
    %207 = vector.broadcast %cst_82 : f32 to vector<16x32xf32>
    %208 = arith.addf %206, %207 : vector<16x32xf32>
    %209 = vector.extract_strided_slice %195 {offsets = [0, 32], sizes = [16, 32], strides = [1, 1]} : vector<16x128xf32> to vector<16x32xf32>
    %cst_83 = arith.constant 5.000000e-01 : f32
    %210 = vector.broadcast %cst_83 : f32 to vector<16x32xf32>
    %211 = arith.mulf %210, %209 : vector<16x32xf32>
    %212 = math.tanh %211 : vector<16x32xf32>
    %cst_84 = arith.constant 5.000000e-01 : f32
    %213 = vector.broadcast %cst_84 : f32 to vector<16x32xf32>
    %214 = arith.mulf %213, %212 : vector<16x32xf32>
    %cst_85 = arith.constant 5.000000e-01 : f32
    %215 = vector.broadcast %cst_85 : f32 to vector<16x32xf32>
    %216 = arith.addf %214, %215 : vector<16x32xf32>
    %217 = vector.extract_strided_slice %195 {offsets = [0, 64], sizes = [16, 32], strides = [1, 1]} : vector<16x128xf32> to vector<16x32xf32>
    %218 = math.tanh %217 : vector<16x32xf32>
    %219 = vector.extract_strided_slice %195 {offsets = [0, 96], sizes = [16, 32], strides = [1, 1]} : vector<16x128xf32> to vector<16x32xf32>
    %cst_86 = arith.constant 5.000000e-01 : f32
    %220 = vector.broadcast %cst_86 : f32 to vector<16x32xf32>
    %221 = arith.mulf %220, %219 : vector<16x32xf32>
    %222 = math.tanh %221 : vector<16x32xf32>
    %cst_87 = arith.constant 5.000000e-01 : f32
    %223 = vector.broadcast %cst_87 : f32 to vector<16x32xf32>
    %224 = arith.mulf %223, %222 : vector<16x32xf32>
    %cst_88 = arith.constant 5.000000e-01 : f32
    %225 = vector.broadcast %cst_88 : f32 to vector<16x32xf32>
    %226 = arith.addf %224, %225 : vector<16x32xf32>
    %227 = arith.mulf %216, %146 : vector<16x32xf32>
    %228 = arith.mulf %208, %218 : vector<16x32xf32>
    %229 = arith.addf %227, %228 : vector<16x32xf32>
    %230 = math.tanh %229 : vector<16x32xf32>
    %231 = arith.mulf %226, %230 : vector<16x32xf32>
    %232 = vector.extract_strided_slice %200 {offsets = [0, 0], sizes = [16, 32], strides = [1, 1]} : vector<16x128xf32> to vector<16x32xf32>
    %cst_89 = arith.constant 5.000000e-01 : f32
    %233 = vector.broadcast %cst_89 : f32 to vector<16x32xf32>
    %234 = arith.mulf %233, %232 : vector<16x32xf32>
    %235 = math.tanh %234 : vector<16x32xf32>
    %cst_90 = arith.constant 5.000000e-01 : f32
    %236 = vector.broadcast %cst_90 : f32 to vector<16x32xf32>
    %237 = arith.mulf %236, %235 : vector<16x32xf32>
    %cst_91 = arith.constant 5.000000e-01 : f32
    %238 = vector.broadcast %cst_91 : f32 to vector<16x32xf32>
    %239 = arith.addf %237, %238 : vector<16x32xf32>
    %240 = vector.extract_strided_slice %200 {offsets = [0, 32], sizes = [16, 32], strides = [1, 1]} : vector<16x128xf32> to vector<16x32xf32>
    %cst_92 = arith.constant 5.000000e-01 : f32
    %241 = vector.broadcast %cst_92 : f32 to vector<16x32xf32>
    %242 = arith.mulf %241, %240 : vector<16x32xf32>
    %243 = math.tanh %242 : vector<16x32xf32>
    %cst_93 = arith.constant 5.000000e-01 : f32
    %244 = vector.broadcast %cst_93 : f32 to vector<16x32xf32>
    %245 = arith.mulf %244, %243 : vector<16x32xf32>
    %cst_94 = arith.constant 5.000000e-01 : f32
    %246 = vector.broadcast %cst_94 : f32 to vector<16x32xf32>
    %247 = arith.addf %245, %246 : vector<16x32xf32>
    %248 = vector.extract_strided_slice %200 {offsets = [0, 64], sizes = [16, 32], strides = [1, 1]} : vector<16x128xf32> to vector<16x32xf32>
    %249 = math.tanh %248 : vector<16x32xf32>
    %250 = vector.extract_strided_slice %200 {offsets = [0, 96], sizes = [16, 32], strides = [1, 1]} : vector<16x128xf32> to vector<16x32xf32>
    %cst_95 = arith.constant 5.000000e-01 : f32
    %251 = vector.broadcast %cst_95 : f32 to vector<16x32xf32>
    %252 = arith.mulf %251, %250 : vector<16x32xf32>
    %253 = math.tanh %252 : vector<16x32xf32>
    %cst_96 = arith.constant 5.000000e-01 : f32
    %254 = vector.broadcast %cst_96 : f32 to vector<16x32xf32>
    %255 = arith.mulf %254, %253 : vector<16x32xf32>
    %cst_97 = arith.constant 5.000000e-01 : f32
    %256 = vector.broadcast %cst_97 : f32 to vector<16x32xf32>
    %257 = arith.addf %255, %256 : vector<16x32xf32>
    %258 = arith.mulf %247, %177 : vector<16x32xf32>
    %259 = arith.mulf %239, %249 : vector<16x32xf32>
    %260 = arith.addf %258, %259 : vector<16x32xf32>
    %261 = math.tanh %260 : vector<16x32xf32>
    %262 = arith.mulf %257, %261 : vector<16x32xf32>
    %263 = arith.truncf %231 : vector<16x32xf32> to vector<16x32xbf16>
    %264 = arith.truncf %262 : vector<16x32xf32> to vector<16x32xbf16>
    %265 = arith.index_cast %188 : i32 to index
    %c0_98 = arith.constant 0 : index
    %266 = vector.load %arg14[%265, %c0_98] : memref<128x32xbf16, #tpu.memory_space<vmem>>, vector<16x32xbf16>
    tpu.vector_store %arg14[%265, %c0_98], %263 {strides = array<i32>} : memref<128x32xbf16, #tpu.memory_space<vmem>>, vector<16x32xbf16>,
    %267 = arith.index_cast %190 : i32 to index
    %c0_99 = arith.constant 0 : index
    %268 = vector.load %arg15[%267, %c0_99] : memref<128x32xbf16, #tpu.memory_space<vmem>>, vector<16x32xbf16>
    tpu.vector_store %arg15[%267, %c0_99], %264 {strides = array<i32>} : memref<128x32xbf16, #tpu.memory_space<vmem>>, vector<16x32xbf16>,
    %c3_i32 = arith.constant 3 : i32
    %c7_i32_100 = arith.constant 7 : i32
    %269 = arith.subi %c7_i32_100, %c3_i32 : i32
    %c16_i32_101 = arith.constant 16 : i32
    %270 = arith.muli %c3_i32, %c16_i32_101 : i32
    %271 = tpu.assume_multiple %270, 16 : i32
    %c16_i32_102 = arith.constant 16 : i32
    %272 = arith.muli %269, %c16_i32_102 : i32
    %273 = tpu.assume_multiple %272, 16 : i32
    %cst_103 = arith.constant dense<0.000000e+00> : vector<16x128xf32>
    %274 = tpu.matmul %263, %16, %cst_103 {dimension_numbers = #tpu.dot_dimension_numbers<[1], [0], [0], [1], [0, 0, 1, 1], [], []>} : vector<16x32xbf16>, vector<32x128xbf16>, vector<16x128xf32> -> vector<16x128xf32>
    %275 = arith.index_cast %271 : i32 to index
    %c0_104 = arith.constant 0 : index
    %276 = vector.load %arg12[%275, %c0_104] : memref<128x128xbf16, #tpu.memory_space<vmem>>, vector<16x128xbf16>
    %277 = arith.extf %276 : vector<16x128xbf16> to vector<16x128xf32>
    %278 = arith.addf %274, %277 : vector<16x128xf32>
    %cst_105 = arith.constant dense<0.000000e+00> : vector<16x128xf32>
    %279 = tpu.matmul %264, %17, %cst_105 {dimension_numbers = #tpu.dot_dimension_numbers<[1], [0], [0], [1], [0, 0, 1, 1], [], []>} : vector<16x32xbf16>, vector<32x128xbf16>, vector<16x128xf32> -> vector<16x128xf32>
    %280 = arith.index_cast %273 : i32 to index
    %c0_106 = arith.constant 0 : index
    %281 = vector.load %arg13[%280, %c0_106] : memref<128x128xbf16, #tpu.memory_space<vmem>>, vector<16x128xbf16>
    %282 = arith.extf %281 : vector<16x128xbf16> to vector<16x128xf32>
    %283 = arith.addf %279, %282 : vector<16x128xf32>
    %284 = vector.extract_strided_slice %278 {offsets = [0, 0], sizes = [16, 32], strides = [1, 1]} : vector<16x128xf32> to vector<16x32xf32>
    %cst_107 = arith.constant 5.000000e-01 : f32
    %285 = vector.broadcast %cst_107 : f32 to vector<16x32xf32>
    %286 = arith.mulf %285, %284 : vector<16x32xf32>
    %287 = math.tanh %286 : vector<16x32xf32>
    %cst_108 = arith.constant 5.000000e-01 : f32
    %288 = vector.broadcast %cst_108 : f32 to vector<16x32xf32>
    %289 = arith.mulf %288, %287 : vector<16x32xf32>
    %cst_109 = arith.constant 5.000000e-01 : f32
    %290 = vector.broadcast %cst_109 : f32 to vector<16x32xf32>
    %291 = arith.addf %289, %290 : vector<16x32xf32>
    %292 = vector.extract_strided_slice %278 {offsets = [0, 32], sizes = [16, 32], strides = [1, 1]} : vector<16x128xf32> to vector<16x32xf32>
    %cst_110 = arith.constant 5.000000e-01 : f32
    %293 = vector.broadcast %cst_110 : f32 to vector<16x32xf32>
    %294 = arith.mulf %293, %292 : vector<16x32xf32>
    %295 = math.tanh %294 : vector<16x32xf32>
    %cst_111 = arith.constant 5.000000e-01 : f32
    %296 = vector.broadcast %cst_111 : f32 to vector<16x32xf32>
    %297 = arith.mulf %296, %295 : vector<16x32xf32>
    %cst_112 = arith.constant 5.000000e-01 : f32
    %298 = vector.broadcast %cst_112 : f32 to vector<16x32xf32>
    %299 = arith.addf %297, %298 : vector<16x32xf32>
    %300 = vector.extract_strided_slice %278 {offsets = [0, 64], sizes = [16, 32], strides = [1, 1]} : vector<16x128xf32> to vector<16x32xf32>
    %301 = math.tanh %300 : vector<16x32xf32>
    %302 = vector.extract_strided_slice %278 {offsets = [0, 96], sizes = [16, 32], strides = [1, 1]} : vector<16x128xf32> to vector<16x32xf32>
    %cst_113 = arith.constant 5.000000e-01 : f32
    %303 = vector.broadcast %cst_113 : f32 to vector<16x32xf32>
    %304 = arith.mulf %303, %302 : vector<16x32xf32>
    %305 = math.tanh %304 : vector<16x32xf32>
    %cst_114 = arith.constant 5.000000e-01 : f32
    %306 = vector.broadcast %cst_114 : f32 to vector<16x32xf32>
    %307 = arith.mulf %306, %305 : vector<16x32xf32>
    %cst_115 = arith.constant 5.000000e-01 : f32
    %308 = vector.broadcast %cst_115 : f32 to vector<16x32xf32>
    %309 = arith.addf %307, %308 : vector<16x32xf32>
    %310 = arith.mulf %299, %229 : vector<16x32xf32>
    %311 = arith.mulf %291, %301 : vector<16x32xf32>
    %312 = arith.addf %310, %311 : vector<16x32xf32>
    %313 = math.tanh %312 : vector<16x32xf32>
    %314 = arith.mulf %309, %313 : vector<16x32xf32>
    %315 = vector.extract_strided_slice %283 {offsets = [0, 0], sizes = [16, 32], strides = [1, 1]} : vector<16x128xf32> to vector<16x32xf32>
    %cst_116 = arith.constant 5.000000e-01 : f32
    %316 = vector.broadcast %cst_116 : f32 to vector<16x32xf32>
    %317 = arith.mulf %316, %315 : vector<16x32xf32>
    %318 = math.tanh %317 : vector<16x32xf32>
    %cst_117 = arith.constant 5.000000e-01 : f32
    %319 = vector.broadcast %cst_117 : f32 to vector<16x32xf32>
    %320 = arith.mulf %319, %318 : vector<16x32xf32>
    %cst_118 = arith.constant 5.000000e-01 : f32
    %321 = vector.broadcast %cst_118 : f32 to vector<16x32xf32>
    %322 = arith.addf %320, %321 : vector<16x32xf32>
    %323 = vector.extract_strided_slice %283 {offsets = [0, 32], sizes = [16, 32], strides = [1, 1]} : vector<16x128xf32> to vector<16x32xf32>
    %cst_119 = arith.constant 5.000000e-01 : f32
    %324 = vector.broadcast %cst_119 : f32 to vector<16x32xf32>
    %325 = arith.mulf %324, %323 : vector<16x32xf32>
    %326 = math.tanh %325 : vector<16x32xf32>
    %cst_120 = arith.constant 5.000000e-01 : f32
    %327 = vector.broadcast %cst_120 : f32 to vector<16x32xf32>
    %328 = arith.mulf %327, %326 : vector<16x32xf32>
    %cst_121 = arith.constant 5.000000e-01 : f32
    %329 = vector.broadcast %cst_121 : f32 to vector<16x32xf32>
    %330 = arith.addf %328, %329 : vector<16x32xf32>
    %331 = vector.extract_strided_slice %283 {offsets = [0, 64], sizes = [16, 32], strides = [1, 1]} : vector<16x128xf32> to vector<16x32xf32>
    %332 = math.tanh %331 : vector<16x32xf32>
    %333 = vector.extract_strided_slice %283 {offsets = [0, 96], sizes = [16, 32], strides = [1, 1]} : vector<16x128xf32> to vector<16x32xf32>
    %cst_122 = arith.constant 5.000000e-01 : f32
    %334 = vector.broadcast %cst_122 : f32 to vector<16x32xf32>
    %335 = arith.mulf %334, %333 : vector<16x32xf32>
    %336 = math.tanh %335 : vector<16x32xf32>
    %cst_123 = arith.constant 5.000000e-01 : f32
    %337 = vector.broadcast %cst_123 : f32 to vector<16x32xf32>
    %338 = arith.mulf %337, %336 : vector<16x32xf32>
    %cst_124 = arith.constant 5.000000e-01 : f32
    %339 = vector.broadcast %cst_124 : f32 to vector<16x32xf32>
    %340 = arith.addf %338, %339 : vector<16x32xf32>
    %341 = arith.mulf %330, %260 : vector<16x32xf32>
    %342 = arith.mulf %322, %332 : vector<16x32xf32>
    %343 = arith.addf %341, %342 : vector<16x32xf32>
    %344 = math.tanh %343 : vector<16x32xf32>
    %345 = arith.mulf %340, %344 : vector<16x32xf32>
    %346 = arith.truncf %314 : vector<16x32xf32> to vector<16x32xbf16>
    %347 = arith.truncf %345 : vector<16x32xf32> to vector<16x32xbf16>
    %348 = arith.index_cast %271 : i32 to index
    %c0_125 = arith.constant 0 : index
    %349 = vector.load %arg14[%348, %c0_125] : memref<128x32xbf16, #tpu.memory_space<vmem>>, vector<16x32xbf16>
    tpu.vector_store %arg14[%348, %c0_125], %346 {strides = array<i32>} : memref<128x32xbf16, #tpu.memory_space<vmem>>, vector<16x32xbf16>,
    %350 = arith.index_cast %273 : i32 to index
    %c0_126 = arith.constant 0 : index
    %351 = vector.load %arg15[%350, %c0_126] : memref<128x32xbf16, #tpu.memory_space<vmem>>, vector<16x32xbf16>
    tpu.vector_store %arg15[%350, %c0_126], %347 {strides = array<i32>} : memref<128x32xbf16, #tpu.memory_space<vmem>>, vector<16x32xbf16>,
    %c4_i32 = arith.constant 4 : i32
    %c7_i32_127 = arith.constant 7 : i32
    %352 = arith.subi %c7_i32_127, %c4_i32 : i32
    %c16_i32_128 = arith.constant 16 : i32
    %353 = arith.muli %c4_i32, %c16_i32_128 : i32
    %354 = tpu.assume_multiple %353, 16 : i32
    %c16_i32_129 = arith.constant 16 : i32
    %355 = arith.muli %352, %c16_i32_129 : i32
    %356 = tpu.assume_multiple %355, 16 : i32
    %cst_130 = arith.constant dense<0.000000e+00> : vector<16x128xf32>
    %357 = tpu.matmul %346, %16, %cst_130 {dimension_numbers = #tpu.dot_dimension_numbers<[1], [0], [0], [1], [0, 0, 1, 1], [], []>} : vector<16x32xbf16>, vector<32x128xbf16>, vector<16x128xf32> -> vector<16x128xf32>
    %358 = arith.index_cast %354 : i32 to index
    %c0_131 = arith.constant 0 : index
    %359 = vector.load %arg12[%358, %c0_131] : memref<128x128xbf16, #tpu.memory_space<vmem>>, vector<16x128xbf16>
    %360 = arith.extf %359 : vector<16x128xbf16> to vector<16x128xf32>
    %361 = arith.addf %357, %360 : vector<16x128xf32>
    %cst_132 = arith.constant dense<0.000000e+00> : vector<16x128xf32>
    %362 = tpu.matmul %347, %17, %cst_132 {dimension_numbers = #tpu.dot_dimension_numbers<[1], [0], [0], [1], [0, 0, 1, 1], [], []>} : vector<16x32xbf16>, vector<32x128xbf16>, vector<16x128xf32> -> vector<16x128xf32>
    %363 = arith.index_cast %356 : i32 to index
    %c0_133 = arith.constant 0 : index
    %364 = vector.load %arg13[%363, %c0_133] : memref<128x128xbf16, #tpu.memory_space<vmem>>, vector<16x128xbf16>
    %365 = arith.extf %364 : vector<16x128xbf16> to vector<16x128xf32>
    %366 = arith.addf %362, %365 : vector<16x128xf32>
    %367 = vector.extract_strided_slice %361 {offsets = [0, 0], sizes = [16, 32], strides = [1, 1]} : vector<16x128xf32> to vector<16x32xf32>
    %cst_134 = arith.constant 5.000000e-01 : f32
    %368 = vector.broadcast %cst_134 : f32 to vector<16x32xf32>
    %369 = arith.mulf %368, %367 : vector<16x32xf32>
    %370 = math.tanh %369 : vector<16x32xf32>
    %cst_135 = arith.constant 5.000000e-01 : f32
    %371 = vector.broadcast %cst_135 : f32 to vector<16x32xf32>
    %372 = arith.mulf %371, %370 : vector<16x32xf32>
    %cst_136 = arith.constant 5.000000e-01 : f32
    %373 = vector.broadcast %cst_136 : f32 to vector<16x32xf32>
    %374 = arith.addf %372, %373 : vector<16x32xf32>
    %375 = vector.extract_strided_slice %361 {offsets = [0, 32], sizes = [16, 32], strides = [1, 1]} : vector<16x128xf32> to vector<16x32xf32>
    %cst_137 = arith.constant 5.000000e-01 : f32
    %376 = vector.broadcast %cst_137 : f32 to vector<16x32xf32>
    %377 = arith.mulf %376, %375 : vector<16x32xf32>
    %378 = math.tanh %377 : vector<16x32xf32>
    %cst_138 = arith.constant 5.000000e-01 : f32
    %379 = vector.broadcast %cst_138 : f32 to vector<16x32xf32>
    %380 = arith.mulf %379, %378 : vector<16x32xf32>
    %cst_139 = arith.constant 5.000000e-01 : f32
    %381 = vector.broadcast %cst_139 : f32 to vector<16x32xf32>
    %382 = arith.addf %380, %381 : vector<16x32xf32>
    %383 = vector.extract_strided_slice %361 {offsets = [0, 64], sizes = [16, 32], strides = [1, 1]} : vector<16x128xf32> to vector<16x32xf32>
    %384 = math.tanh %383 : vector<16x32xf32>
    %385 = vector.extract_strided_slice %361 {offsets = [0, 96], sizes = [16, 32], strides = [1, 1]} : vector<16x128xf32> to vector<16x32xf32>
    %cst_140 = arith.constant 5.000000e-01 : f32
    %386 = vector.broadcast %cst_140 : f32 to vector<16x32xf32>
    %387 = arith.mulf %386, %385 : vector<16x32xf32>
    %388 = math.tanh %387 : vector<16x32xf32>
    %cst_141 = arith.constant 5.000000e-01 : f32
    %389 = vector.broadcast %cst_141 : f32 to vector<16x32xf32>
    %390 = arith.mulf %389, %388 : vector<16x32xf32>
    %cst_142 = arith.constant 5.000000e-01 : f32
    %391 = vector.broadcast %cst_142 : f32 to vector<16x32xf32>
    %392 = arith.addf %390, %391 : vector<16x32xf32>
    %393 = arith.mulf %382, %312 : vector<16x32xf32>
    %394 = arith.mulf %374, %384 : vector<16x32xf32>
    %395 = arith.addf %393, %394 : vector<16x32xf32>
    %396 = math.tanh %395 : vector<16x32xf32>
    %397 = arith.mulf %392, %396 : vector<16x32xf32>
    %398 = vector.extract_strided_slice %366 {offsets = [0, 0], sizes = [16, 32], strides = [1, 1]} : vector<16x128xf32> to vector<16x32xf32>
    %cst_143 = arith.constant 5.000000e-01 : f32
    %399 = vector.broadcast %cst_143 : f32 to vector<16x32xf32>
    %400 = arith.mulf %399, %398 : vector<16x32xf32>
    %401 = math.tanh %400 : vector<16x32xf32>
    %cst_144 = arith.constant 5.000000e-01 : f32
    %402 = vector.broadcast %cst_144 : f32 to vector<16x32xf32>
    %403 = arith.mulf %402, %401 : vector<16x32xf32>
    %cst_145 = arith.constant 5.000000e-01 : f32
    %404 = vector.broadcast %cst_145 : f32 to vector<16x32xf32>
    %405 = arith.addf %403, %404 : vector<16x32xf32>
    %406 = vector.extract_strided_slice %366 {offsets = [0, 32], sizes = [16, 32], strides = [1, 1]} : vector<16x128xf32> to vector<16x32xf32>
    %cst_146 = arith.constant 5.000000e-01 : f32
    %407 = vector.broadcast %cst_146 : f32 to vector<16x32xf32>
    %408 = arith.mulf %407, %406 : vector<16x32xf32>
    %409 = math.tanh %408 : vector<16x32xf32>
    %cst_147 = arith.constant 5.000000e-01 : f32
    %410 = vector.broadcast %cst_147 : f32 to vector<16x32xf32>
    %411 = arith.mulf %410, %409 : vector<16x32xf32>
    %cst_148 = arith.constant 5.000000e-01 : f32
    %412 = vector.broadcast %cst_148 : f32 to vector<16x32xf32>
    %413 = arith.addf %411, %412 : vector<16x32xf32>
    %414 = vector.extract_strided_slice %366 {offsets = [0, 64], sizes = [16, 32], strides = [1, 1]} : vector<16x128xf32> to vector<16x32xf32>
    %415 = math.tanh %414 : vector<16x32xf32>
    %416 = vector.extract_strided_slice %366 {offsets = [0, 96], sizes = [16, 32], strides = [1, 1]} : vector<16x128xf32> to vector<16x32xf32>
    %cst_149 = arith.constant 5.000000e-01 : f32
    %417 = vector.broadcast %cst_149 : f32 to vector<16x32xf32>
    %418 = arith.mulf %417, %416 : vector<16x32xf32>
    %419 = math.tanh %418 : vector<16x32xf32>
    %cst_150 = arith.constant 5.000000e-01 : f32
    %420 = vector.broadcast %cst_150 : f32 to vector<16x32xf32>
    %421 = arith.mulf %420, %419 : vector<16x32xf32>
    %cst_151 = arith.constant 5.000000e-01 : f32
    %422 = vector.broadcast %cst_151 : f32 to vector<16x32xf32>
    %423 = arith.addf %421, %422 : vector<16x32xf32>
    %424 = arith.mulf %413, %343 : vector<16x32xf32>
    %425 = arith.mulf %405, %415 : vector<16x32xf32>
    %426 = arith.addf %424, %425 : vector<16x32xf32>
    %427 = math.tanh %426 : vector<16x32xf32>
    %428 = arith.mulf %423, %427 : vector<16x32xf32>
    %429 = arith.truncf %397 : vector<16x32xf32> to vector<16x32xbf16>
    %430 = arith.truncf %428 : vector<16x32xf32> to vector<16x32xbf16>
    %431 = arith.index_cast %354 : i32 to index
    %c0_152 = arith.constant 0 : index
    %432 = vector.load %arg14[%431, %c0_152] : memref<128x32xbf16, #tpu.memory_space<vmem>>, vector<16x32xbf16>
    tpu.vector_store %arg14[%431, %c0_152], %429 {strides = array<i32>} : memref<128x32xbf16, #tpu.memory_space<vmem>>, vector<16x32xbf16>,
    %433 = arith.index_cast %356 : i32 to index
    %c0_153 = arith.constant 0 : index
    %434 = vector.load %arg15[%433, %c0_153] : memref<128x32xbf16, #tpu.memory_space<vmem>>, vector<16x32xbf16>
    tpu.vector_store %arg15[%433, %c0_153], %430 {strides = array<i32>} : memref<128x32xbf16, #tpu.memory_space<vmem>>, vector<16x32xbf16>,
    %c5_i32 = arith.constant 5 : i32
    %c7_i32_154 = arith.constant 7 : i32
    %435 = arith.subi %c7_i32_154, %c5_i32 : i32
    %c16_i32_155 = arith.constant 16 : i32
    %436 = arith.muli %c5_i32, %c16_i32_155 : i32
    %437 = tpu.assume_multiple %436, 16 : i32
    %c16_i32_156 = arith.constant 16 : i32
    %438 = arith.muli %435, %c16_i32_156 : i32
    %439 = tpu.assume_multiple %438, 16 : i32
    %cst_157 = arith.constant dense<0.000000e+00> : vector<16x128xf32>
    %440 = tpu.matmul %429, %16, %cst_157 {dimension_numbers = #tpu.dot_dimension_numbers<[1], [0], [0], [1], [0, 0, 1, 1], [], []>} : vector<16x32xbf16>, vector<32x128xbf16>, vector<16x128xf32> -> vector<16x128xf32>
    %441 = arith.index_cast %437 : i32 to index
    %c0_158 = arith.constant 0 : index
    %442 = vector.load %arg12[%441, %c0_158] : memref<128x128xbf16, #tpu.memory_space<vmem>>, vector<16x128xbf16>
    %443 = arith.extf %442 : vector<16x128xbf16> to vector<16x128xf32>
    %444 = arith.addf %440, %443 : vector<16x128xf32>
    %cst_159 = arith.constant dense<0.000000e+00> : vector<16x128xf32>
    %445 = tpu.matmul %430, %17, %cst_159 {dimension_numbers = #tpu.dot_dimension_numbers<[1], [0], [0], [1], [0, 0, 1, 1], [], []>} : vector<16x32xbf16>, vector<32x128xbf16>, vector<16x128xf32> -> vector<16x128xf32>
    %446 = arith.index_cast %439 : i32 to index
    %c0_160 = arith.constant 0 : index
    %447 = vector.load %arg13[%446, %c0_160] : memref<128x128xbf16, #tpu.memory_space<vmem>>, vector<16x128xbf16>
    %448 = arith.extf %447 : vector<16x128xbf16> to vector<16x128xf32>
    %449 = arith.addf %445, %448 : vector<16x128xf32>
    %450 = vector.extract_strided_slice %444 {offsets = [0, 0], sizes = [16, 32], strides = [1, 1]} : vector<16x128xf32> to vector<16x32xf32>
    %cst_161 = arith.constant 5.000000e-01 : f32
    %451 = vector.broadcast %cst_161 : f32 to vector<16x32xf32>
    %452 = arith.mulf %451, %450 : vector<16x32xf32>
    %453 = math.tanh %452 : vector<16x32xf32>
    %cst_162 = arith.constant 5.000000e-01 : f32
    %454 = vector.broadcast %cst_162 : f32 to vector<16x32xf32>
    %455 = arith.mulf %454, %453 : vector<16x32xf32>
    %cst_163 = arith.constant 5.000000e-01 : f32
    %456 = vector.broadcast %cst_163 : f32 to vector<16x32xf32>
    %457 = arith.addf %455, %456 : vector<16x32xf32>
    %458 = vector.extract_strided_slice %444 {offsets = [0, 32], sizes = [16, 32], strides = [1, 1]} : vector<16x128xf32> to vector<16x32xf32>
    %cst_164 = arith.constant 5.000000e-01 : f32
    %459 = vector.broadcast %cst_164 : f32 to vector<16x32xf32>
    %460 = arith.mulf %459, %458 : vector<16x32xf32>
    %461 = math.tanh %460 : vector<16x32xf32>
    %cst_165 = arith.constant 5.000000e-01 : f32
    %462 = vector.broadcast %cst_165 : f32 to vector<16x32xf32>
    %463 = arith.mulf %462, %461 : vector<16x32xf32>
    %cst_166 = arith.constant 5.000000e-01 : f32
    %464 = vector.broadcast %cst_166 : f32 to vector<16x32xf32>
    %465 = arith.addf %463, %464 : vector<16x32xf32>
    %466 = vector.extract_strided_slice %444 {offsets = [0, 64], sizes = [16, 32], strides = [1, 1]} : vector<16x128xf32> to vector<16x32xf32>
    %467 = math.tanh %466 : vector<16x32xf32>
    %468 = vector.extract_strided_slice %444 {offsets = [0, 96], sizes = [16, 32], strides = [1, 1]} : vector<16x128xf32> to vector<16x32xf32>
    %cst_167 = arith.constant 5.000000e-01 : f32
    %469 = vector.broadcast %cst_167 : f32 to vector<16x32xf32>
    %470 = arith.mulf %469, %468 : vector<16x32xf32>
    %471 = math.tanh %470 : vector<16x32xf32>
    %cst_168 = arith.constant 5.000000e-01 : f32
    %472 = vector.broadcast %cst_168 : f32 to vector<16x32xf32>
    %473 = arith.mulf %472, %471 : vector<16x32xf32>
    %cst_169 = arith.constant 5.000000e-01 : f32
    %474 = vector.broadcast %cst_169 : f32 to vector<16x32xf32>
    %475 = arith.addf %473, %474 : vector<16x32xf32>
    %476 = arith.mulf %465, %395 : vector<16x32xf32>
    %477 = arith.mulf %457, %467 : vector<16x32xf32>
    %478 = arith.addf %476, %477 : vector<16x32xf32>
    %479 = math.tanh %478 : vector<16x32xf32>
    %480 = arith.mulf %475, %479 : vector<16x32xf32>
    %481 = vector.extract_strided_slice %449 {offsets = [0, 0], sizes = [16, 32], strides = [1, 1]} : vector<16x128xf32> to vector<16x32xf32>
    %cst_170 = arith.constant 5.000000e-01 : f32
    %482 = vector.broadcast %cst_170 : f32 to vector<16x32xf32>
    %483 = arith.mulf %482, %481 : vector<16x32xf32>
    %484 = math.tanh %483 : vector<16x32xf32>
    %cst_171 = arith.constant 5.000000e-01 : f32
    %485 = vector.broadcast %cst_171 : f32 to vector<16x32xf32>
    %486 = arith.mulf %485, %484 : vector<16x32xf32>
    %cst_172 = arith.constant 5.000000e-01 : f32
    %487 = vector.broadcast %cst_172 : f32 to vector<16x32xf32>
    %488 = arith.addf %486, %487 : vector<16x32xf32>
    %489 = vector.extract_strided_slice %449 {offsets = [0, 32], sizes = [16, 32], strides = [1, 1]} : vector<16x128xf32> to vector<16x32xf32>
    %cst_173 = arith.constant 5.000000e-01 : f32
    %490 = vector.broadcast %cst_173 : f32 to vector<16x32xf32>
    %491 = arith.mulf %490, %489 : vector<16x32xf32>
    %492 = math.tanh %491 : vector<16x32xf32>
    %cst_174 = arith.constant 5.000000e-01 : f32
    %493 = vector.broadcast %cst_174 : f32 to vector<16x32xf32>
    %494 = arith.mulf %493, %492 : vector<16x32xf32>
    %cst_175 = arith.constant 5.000000e-01 : f32
    %495 = vector.broadcast %cst_175 : f32 to vector<16x32xf32>
    %496 = arith.addf %494, %495 : vector<16x32xf32>
    %497 = vector.extract_strided_slice %449 {offsets = [0, 64], sizes = [16, 32], strides = [1, 1]} : vector<16x128xf32> to vector<16x32xf32>
    %498 = math.tanh %497 : vector<16x32xf32>
    %499 = vector.extract_strided_slice %449 {offsets = [0, 96], sizes = [16, 32], strides = [1, 1]} : vector<16x128xf32> to vector<16x32xf32>
    %cst_176 = arith.constant 5.000000e-01 : f32
    %500 = vector.broadcast %cst_176 : f32 to vector<16x32xf32>
    %501 = arith.mulf %500, %499 : vector<16x32xf32>
    %502 = math.tanh %501 : vector<16x32xf32>
    %cst_177 = arith.constant 5.000000e-01 : f32
    %503 = vector.broadcast %cst_177 : f32 to vector<16x32xf32>
    %504 = arith.mulf %503, %502 : vector<16x32xf32>
    %cst_178 = arith.constant 5.000000e-01 : f32
    %505 = vector.broadcast %cst_178 : f32 to vector<16x32xf32>
    %506 = arith.addf %504, %505 : vector<16x32xf32>
    %507 = arith.mulf %496, %426 : vector<16x32xf32>
    %508 = arith.mulf %488, %498 : vector<16x32xf32>
    %509 = arith.addf %507, %508 : vector<16x32xf32>
    %510 = math.tanh %509 : vector<16x32xf32>
    %511 = arith.mulf %506, %510 : vector<16x32xf32>
    %512 = arith.truncf %480 : vector<16x32xf32> to vector<16x32xbf16>
    %513 = arith.truncf %511 : vector<16x32xf32> to vector<16x32xbf16>
    %514 = arith.index_cast %437 : i32 to index
    %c0_179 = arith.constant 0 : index
    %515 = vector.load %arg14[%514, %c0_179] : memref<128x32xbf16, #tpu.memory_space<vmem>>, vector<16x32xbf16>
    tpu.vector_store %arg14[%514, %c0_179], %512 {strides = array<i32>} : memref<128x32xbf16, #tpu.memory_space<vmem>>, vector<16x32xbf16>,
    %516 = arith.index_cast %439 : i32 to index
    %c0_180 = arith.constant 0 : index
    %517 = vector.load %arg15[%516, %c0_180] : memref<128x32xbf16, #tpu.memory_space<vmem>>, vector<16x32xbf16>
    tpu.vector_store %arg15[%516, %c0_180], %513 {strides = array<i32>} : memref<128x32xbf16, #tpu.memory_space<vmem>>, vector<16x32xbf16>,
    %c6_i32 = arith.constant 6 : i32
    %c7_i32_181 = arith.constant 7 : i32
    %518 = arith.subi %c7_i32_181, %c6_i32 : i32
    %c16_i32_182 = arith.constant 16 : i32
    %519 = arith.muli %c6_i32, %c16_i32_182 : i32
    %520 = tpu.assume_multiple %519, 16 : i32
    %c16_i32_183 = arith.constant 16 : i32
    %521 = arith.muli %518, %c16_i32_183 : i32
    %522 = tpu.assume_multiple %521, 16 : i32
    %cst_184 = arith.constant dense<0.000000e+00> : vector<16x128xf32>
    %523 = tpu.matmul %512, %16, %cst_184 {dimension_numbers = #tpu.dot_dimension_numbers<[1], [0], [0], [1], [0, 0, 1, 1], [], []>} : vector<16x32xbf16>, vector<32x128xbf16>, vector<16x128xf32> -> vector<16x128xf32>
    %524 = arith.index_cast %520 : i32 to index
    %c0_185 = arith.constant 0 : index
    %525 = vector.load %arg12[%524, %c0_185] : memref<128x128xbf16, #tpu.memory_space<vmem>>, vector<16x128xbf16>
    %526 = arith.extf %525 : vector<16x128xbf16> to vector<16x128xf32>
    %527 = arith.addf %523, %526 : vector<16x128xf32>
    %cst_186 = arith.constant dense<0.000000e+00> : vector<16x128xf32>
    %528 = tpu.matmul %513, %17, %cst_186 {dimension_numbers = #tpu.dot_dimension_numbers<[1], [0], [0], [1], [0, 0, 1, 1], [], []>} : vector<16x32xbf16>, vector<32x128xbf16>, vector<16x128xf32> -> vector<16x128xf32>
    %529 = arith.index_cast %522 : i32 to index
    %c0_187 = arith.constant 0 : index
    %530 = vector.load %arg13[%529, %c0_187] : memref<128x128xbf16, #tpu.memory_space<vmem>>, vector<16x128xbf16>
    %531 = arith.extf %530 : vector<16x128xbf16> to vector<16x128xf32>
    %532 = arith.addf %528, %531 : vector<16x128xf32>
    %533 = vector.extract_strided_slice %527 {offsets = [0, 0], sizes = [16, 32], strides = [1, 1]} : vector<16x128xf32> to vector<16x32xf32>
    %cst_188 = arith.constant 5.000000e-01 : f32
    %534 = vector.broadcast %cst_188 : f32 to vector<16x32xf32>
    %535 = arith.mulf %534, %533 : vector<16x32xf32>
    %536 = math.tanh %535 : vector<16x32xf32>
    %cst_189 = arith.constant 5.000000e-01 : f32
    %537 = vector.broadcast %cst_189 : f32 to vector<16x32xf32>
    %538 = arith.mulf %537, %536 : vector<16x32xf32>
    %cst_190 = arith.constant 5.000000e-01 : f32
    %539 = vector.broadcast %cst_190 : f32 to vector<16x32xf32>
    %540 = arith.addf %538, %539 : vector<16x32xf32>
    %541 = vector.extract_strided_slice %527 {offsets = [0, 32], sizes = [16, 32], strides = [1, 1]} : vector<16x128xf32> to vector<16x32xf32>
    %cst_191 = arith.constant 5.000000e-01 : f32
    %542 = vector.broadcast %cst_191 : f32 to vector<16x32xf32>
    %543 = arith.mulf %542, %541 : vector<16x32xf32>
    %544 = math.tanh %543 : vector<16x32xf32>
    %cst_192 = arith.constant 5.000000e-01 : f32
    %545 = vector.broadcast %cst_192 : f32 to vector<16x32xf32>
    %546 = arith.mulf %545, %544 : vector<16x32xf32>
    %cst_193 = arith.constant 5.000000e-01 : f32
    %547 = vector.broadcast %cst_193 : f32 to vector<16x32xf32>
    %548 = arith.addf %546, %547 : vector<16x32xf32>
    %549 = vector.extract_strided_slice %527 {offsets = [0, 64], sizes = [16, 32], strides = [1, 1]} : vector<16x128xf32> to vector<16x32xf32>
    %550 = math.tanh %549 : vector<16x32xf32>
    %551 = vector.extract_strided_slice %527 {offsets = [0, 96], sizes = [16, 32], strides = [1, 1]} : vector<16x128xf32> to vector<16x32xf32>
    %cst_194 = arith.constant 5.000000e-01 : f32
    %552 = vector.broadcast %cst_194 : f32 to vector<16x32xf32>
    %553 = arith.mulf %552, %551 : vector<16x32xf32>
    %554 = math.tanh %553 : vector<16x32xf32>
    %cst_195 = arith.constant 5.000000e-01 : f32
    %555 = vector.broadcast %cst_195 : f32 to vector<16x32xf32>
    %556 = arith.mulf %555, %554 : vector<16x32xf32>
    %cst_196 = arith.constant 5.000000e-01 : f32
    %557 = vector.broadcast %cst_196 : f32 to vector<16x32xf32>
    %558 = arith.addf %556, %557 : vector<16x32xf32>
    %559 = arith.mulf %548, %478 : vector<16x32xf32>
    %560 = arith.mulf %540, %550 : vector<16x32xf32>
    %561 = arith.addf %559, %560 : vector<16x32xf32>
    %562 = math.tanh %561 : vector<16x32xf32>
    %563 = arith.mulf %558, %562 : vector<16x32xf32>
    %564 = vector.extract_strided_slice %532 {offsets = [0, 0], sizes = [16, 32], strides = [1, 1]} : vector<16x128xf32> to vector<16x32xf32>
    %cst_197 = arith.constant 5.000000e-01 : f32
    %565 = vector.broadcast %cst_197 : f32 to vector<16x32xf32>
    %566 = arith.mulf %565, %564 : vector<16x32xf32>
    %567 = math.tanh %566 : vector<16x32xf32>
    %cst_198 = arith.constant 5.000000e-01 : f32
    %568 = vector.broadcast %cst_198 : f32 to vector<16x32xf32>
    %569 = arith.mulf %568, %567 : vector<16x32xf32>
    %cst_199 = arith.constant 5.000000e-01 : f32
    %570 = vector.broadcast %cst_199 : f32 to vector<16x32xf32>
    %571 = arith.addf %569, %570 : vector<16x32xf32>
    %572 = vector.extract_strided_slice %532 {offsets = [0, 32], sizes = [16, 32], strides = [1, 1]} : vector<16x128xf32> to vector<16x32xf32>
    %cst_200 = arith.constant 5.000000e-01 : f32
    %573 = vector.broadcast %cst_200 : f32 to vector<16x32xf32>
    %574 = arith.mulf %573, %572 : vector<16x32xf32>
    %575 = math.tanh %574 : vector<16x32xf32>
    %cst_201 = arith.constant 5.000000e-01 : f32
    %576 = vector.broadcast %cst_201 : f32 to vector<16x32xf32>
    %577 = arith.mulf %576, %575 : vector<16x32xf32>
    %cst_202 = arith.constant 5.000000e-01 : f32
    %578 = vector.broadcast %cst_202 : f32 to vector<16x32xf32>
    %579 = arith.addf %577, %578 : vector<16x32xf32>
    %580 = vector.extract_strided_slice %532 {offsets = [0, 64], sizes = [16, 32], strides = [1, 1]} : vector<16x128xf32> to vector<16x32xf32>
    %581 = math.tanh %580 : vector<16x32xf32>
    %582 = vector.extract_strided_slice %532 {offsets = [0, 96], sizes = [16, 32], strides = [1, 1]} : vector<16x128xf32> to vector<16x32xf32>
    %cst_203 = arith.constant 5.000000e-01 : f32
    %583 = vector.broadcast %cst_203 : f32 to vector<16x32xf32>
    %584 = arith.mulf %583, %582 : vector<16x32xf32>
    %585 = math.tanh %584 : vector<16x32xf32>
    %cst_204 = arith.constant 5.000000e-01 : f32
    %586 = vector.broadcast %cst_204 : f32 to vector<16x32xf32>
    %587 = arith.mulf %586, %585 : vector<16x32xf32>
    %cst_205 = arith.constant 5.000000e-01 : f32
    %588 = vector.broadcast %cst_205 : f32 to vector<16x32xf32>
    %589 = arith.addf %587, %588 : vector<16x32xf32>
    %590 = arith.mulf %579, %509 : vector<16x32xf32>
    %591 = arith.mulf %571, %581 : vector<16x32xf32>
    %592 = arith.addf %590, %591 : vector<16x32xf32>
    %593 = math.tanh %592 : vector<16x32xf32>
    %594 = arith.mulf %589, %593 : vector<16x32xf32>
    %595 = arith.truncf %563 : vector<16x32xf32> to vector<16x32xbf16>
    %596 = arith.truncf %594 : vector<16x32xf32> to vector<16x32xbf16>
    %597 = arith.index_cast %520 : i32 to index
    %c0_206 = arith.constant 0 : index
    %598 = vector.load %arg14[%597, %c0_206] : memref<128x32xbf16, #tpu.memory_space<vmem>>, vector<16x32xbf16>
    tpu.vector_store %arg14[%597, %c0_206], %595 {strides = array<i32>} : memref<128x32xbf16, #tpu.memory_space<vmem>>, vector<16x32xbf16>,
    %599 = arith.index_cast %522 : i32 to index
    %c0_207 = arith.constant 0 : index
    %600 = vector.load %arg15[%599, %c0_207] : memref<128x32xbf16, #tpu.memory_space<vmem>>, vector<16x32xbf16>
    tpu.vector_store %arg15[%599, %c0_207], %596 {strides = array<i32>} : memref<128x32xbf16, #tpu.memory_space<vmem>>, vector<16x32xbf16>,
    %c7_i32_208 = arith.constant 7 : i32
    %c7_i32_209 = arith.constant 7 : i32
    %601 = arith.subi %c7_i32_209, %c7_i32_208 : i32
    %c16_i32_210 = arith.constant 16 : i32
    %602 = arith.muli %c7_i32_208, %c16_i32_210 : i32
    %603 = tpu.assume_multiple %602, 16 : i32
    %c16_i32_211 = arith.constant 16 : i32
    %604 = arith.muli %601, %c16_i32_211 : i32
    %605 = tpu.assume_multiple %604, 16 : i32
    %cst_212 = arith.constant dense<0.000000e+00> : vector<16x128xf32>
    %606 = tpu.matmul %595, %16, %cst_212 {dimension_numbers = #tpu.dot_dimension_numbers<[1], [0], [0], [1], [0, 0, 1, 1], [], []>} : vector<16x32xbf16>, vector<32x128xbf16>, vector<16x128xf32> -> vector<16x128xf32>
    %607 = arith.index_cast %603 : i32 to index
    %c0_213 = arith.constant 0 : index
    %608 = vector.load %arg12[%607, %c0_213] : memref<128x128xbf16, #tpu.memory_space<vmem>>, vector<16x128xbf16>
    %609 = arith.extf %608 : vector<16x128xbf16> to vector<16x128xf32>
    %610 = arith.addf %606, %609 : vector<16x128xf32>
    %cst_214 = arith.constant dense<0.000000e+00> : vector<16x128xf32>
    %611 = tpu.matmul %596, %17, %cst_214 {dimension_numbers = #tpu.dot_dimension_numbers<[1], [0], [0], [1], [0, 0, 1, 1], [], []>} : vector<16x32xbf16>, vector<32x128xbf16>, vector<16x128xf32> -> vector<16x128xf32>
    %612 = arith.index_cast %605 : i32 to index
    %c0_215 = arith.constant 0 : index
    %613 = vector.load %arg13[%612, %c0_215] : memref<128x128xbf16, #tpu.memory_space<vmem>>, vector<16x128xbf16>
    %614 = arith.extf %613 : vector<16x128xbf16> to vector<16x128xf32>
    %615 = arith.addf %611, %614 : vector<16x128xf32>
    %616 = vector.extract_strided_slice %610 {offsets = [0, 0], sizes = [16, 32], strides = [1, 1]} : vector<16x128xf32> to vector<16x32xf32>
    %cst_216 = arith.constant 5.000000e-01 : f32
    %617 = vector.broadcast %cst_216 : f32 to vector<16x32xf32>
    %618 = arith.mulf %617, %616 : vector<16x32xf32>
    %619 = math.tanh %618 : vector<16x32xf32>
    %cst_217 = arith.constant 5.000000e-01 : f32
    %620 = vector.broadcast %cst_217 : f32 to vector<16x32xf32>
    %621 = arith.mulf %620, %619 : vector<16x32xf32>
    %cst_218 = arith.constant 5.000000e-01 : f32
    %622 = vector.broadcast %cst_218 : f32 to vector<16x32xf32>
    %623 = arith.addf %621, %622 : vector<16x32xf32>
    %624 = vector.extract_strided_slice %610 {offsets = [0, 32], sizes = [16, 32], strides = [1, 1]} : vector<16x128xf32> to vector<16x32xf32>
    %cst_219 = arith.constant 5.000000e-01 : f32
    %625 = vector.broadcast %cst_219 : f32 to vector<16x32xf32>
    %626 = arith.mulf %625, %624 : vector<16x32xf32>
    %627 = math.tanh %626 : vector<16x32xf32>
    %cst_220 = arith.constant 5.000000e-01 : f32
    %628 = vector.broadcast %cst_220 : f32 to vector<16x32xf32>
    %629 = arith.mulf %628, %627 : vector<16x32xf32>
    %cst_221 = arith.constant 5.000000e-01 : f32
    %630 = vector.broadcast %cst_221 : f32 to vector<16x32xf32>
    %631 = arith.addf %629, %630 : vector<16x32xf32>
    %632 = vector.extract_strided_slice %610 {offsets = [0, 64], sizes = [16, 32], strides = [1, 1]} : vector<16x128xf32> to vector<16x32xf32>
    %633 = math.tanh %632 : vector<16x32xf32>
    %634 = vector.extract_strided_slice %610 {offsets = [0, 96], sizes = [16, 32], strides = [1, 1]} : vector<16x128xf32> to vector<16x32xf32>
    %cst_222 = arith.constant 5.000000e-01 : f32
    %635 = vector.broadcast %cst_222 : f32 to vector<16x32xf32>
    %636 = arith.mulf %635, %634 : vector<16x32xf32>
    %637 = math.tanh %636 : vector<16x32xf32>
    %cst_223 = arith.constant 5.000000e-01 : f32
    %638 = vector.broadcast %cst_223 : f32 to vector<16x32xf32>
    %639 = arith.mulf %638, %637 : vector<16x32xf32>
    %cst_224 = arith.constant 5.000000e-01 : f32
    %640 = vector.broadcast %cst_224 : f32 to vector<16x32xf32>
    %641 = arith.addf %639, %640 : vector<16x32xf32>
    %642 = arith.mulf %631, %561 : vector<16x32xf32>
    %643 = arith.mulf %623, %633 : vector<16x32xf32>
    %644 = arith.addf %642, %643 : vector<16x32xf32>
    %645 = math.tanh %644 : vector<16x32xf32>
    %646 = arith.mulf %641, %645 : vector<16x32xf32>
    %647 = vector.extract_strided_slice %615 {offsets = [0, 0], sizes = [16, 32], strides = [1, 1]} : vector<16x128xf32> to vector<16x32xf32>
    %cst_225 = arith.constant 5.000000e-01 : f32
    %648 = vector.broadcast %cst_225 : f32 to vector<16x32xf32>
    %649 = arith.mulf %648, %647 : vector<16x32xf32>
    %650 = math.tanh %649 : vector<16x32xf32>
    %cst_226 = arith.constant 5.000000e-01 : f32
    %651 = vector.broadcast %cst_226 : f32 to vector<16x32xf32>
    %652 = arith.mulf %651, %650 : vector<16x32xf32>
    %cst_227 = arith.constant 5.000000e-01 : f32
    %653 = vector.broadcast %cst_227 : f32 to vector<16x32xf32>
    %654 = arith.addf %652, %653 : vector<16x32xf32>
    %655 = vector.extract_strided_slice %615 {offsets = [0, 32], sizes = [16, 32], strides = [1, 1]} : vector<16x128xf32> to vector<16x32xf32>
    %cst_228 = arith.constant 5.000000e-01 : f32
    %656 = vector.broadcast %cst_228 : f32 to vector<16x32xf32>
    %657 = arith.mulf %656, %655 : vector<16x32xf32>
    %658 = math.tanh %657 : vector<16x32xf32>
    %cst_229 = arith.constant 5.000000e-01 : f32
    %659 = vector.broadcast %cst_229 : f32 to vector<16x32xf32>
    %660 = arith.mulf %659, %658 : vector<16x32xf32>
    %cst_230 = arith.constant 5.000000e-01 : f32
    %661 = vector.broadcast %cst_230 : f32 to vector<16x32xf32>
    %662 = arith.addf %660, %661 : vector<16x32xf32>
    %663 = vector.extract_strided_slice %615 {offsets = [0, 64], sizes = [16, 32], strides = [1, 1]} : vector<16x128xf32> to vector<16x32xf32>
    %664 = math.tanh %663 : vector<16x32xf32>
    %665 = vector.extract_strided_slice %615 {offsets = [0, 96], sizes = [16, 32], strides = [1, 1]} : vector<16x128xf32> to vector<16x32xf32>
    %cst_231 = arith.constant 5.000000e-01 : f32
    %666 = vector.broadcast %cst_231 : f32 to vector<16x32xf32>
    %667 = arith.mulf %666, %665 : vector<16x32xf32>
    %668 = math.tanh %667 : vector<16x32xf32>
    %cst_232 = arith.constant 5.000000e-01 : f32
    %669 = vector.broadcast %cst_232 : f32 to vector<16x32xf32>
    %670 = arith.mulf %669, %668 : vector<16x32xf32>
    %cst_233 = arith.constant 5.000000e-01 : f32
    %671 = vector.broadcast %cst_233 : f32 to vector<16x32xf32>
    %672 = arith.addf %670, %671 : vector<16x32xf32>
    %673 = arith.mulf %662, %592 : vector<16x32xf32>
    %674 = arith.mulf %654, %664 : vector<16x32xf32>
    %675 = arith.addf %673, %674 : vector<16x32xf32>
    %676 = math.tanh %675 : vector<16x32xf32>
    %677 = arith.mulf %672, %676 : vector<16x32xf32>
    %678 = arith.truncf %646 : vector<16x32xf32> to vector<16x32xbf16>
    %679 = arith.truncf %677 : vector<16x32xf32> to vector<16x32xbf16>
    %680 = arith.index_cast %603 : i32 to index
    %c0_234 = arith.constant 0 : index
    %681 = vector.load %arg14[%680, %c0_234] : memref<128x32xbf16, #tpu.memory_space<vmem>>, vector<16x32xbf16>
    tpu.vector_store %arg14[%680, %c0_234], %678 {strides = array<i32>} : memref<128x32xbf16, #tpu.memory_space<vmem>>, vector<16x32xbf16>,
    %682 = arith.index_cast %605 : i32 to index
    %c0_235 = arith.constant 0 : index
    %683 = vector.load %arg15[%682, %c0_235] : memref<128x32xbf16, #tpu.memory_space<vmem>>, vector<16x32xbf16>
    tpu.vector_store %arg15[%682, %c0_235], %679 {strides = array<i32>} : memref<128x32xbf16, #tpu.memory_space<vmem>>, vector<16x32xbf16>,
    %c8_i32 = arith.constant 8 : i32
    %c0_236 = arith.constant 0 : index
    %c0_237 = arith.constant 0 : index
    %684 = vector.load %arg14[%c0_236, %c0_237] : memref<128x32xbf16, #tpu.memory_space<vmem>>, vector<128x32xbf16>
    %c0_238 = arith.constant 0 : index
    %c0_239 = arith.constant 0 : index
    %685 = vector.load %arg8[%c0_238, %c0_239] : memref<32x128xbf16, #tpu.memory_space<vmem>>, vector<32x128xbf16>
    %cst_240 = arith.constant dense<0.000000e+00> : vector<128x128xf32>
    %686 = tpu.matmul %684, %685, %cst_240 {dimension_numbers = #tpu.dot_dimension_numbers<[1], [0], [0], [1], [0, 0, 1, 1], [], []>} : vector<128x32xbf16>, vector<32x128xbf16>, vector<128x128xf32> -> vector<128x128xf32>
    %c0_241 = arith.constant 0 : index
    %c0_242 = arith.constant 0 : index
    %687 = vector.load %arg15[%c0_241, %c0_242] : memref<128x32xbf16, #tpu.memory_space<vmem>>, vector<128x32xbf16>
    %c0_243 = arith.constant 0 : index
    %c0_244 = arith.constant 0 : index
    %688 = vector.load %arg9[%c0_243, %c0_244] : memref<32x128xbf16, #tpu.memory_space<vmem>>, vector<32x128xbf16>
    %cst_245 = arith.constant dense<0.000000e+00> : vector<128x128xf32>
    %689 = tpu.matmul %687, %688, %cst_245 {dimension_numbers = #tpu.dot_dimension_numbers<[1], [0], [0], [1], [0, 0, 1, 1], [], []>} : vector<128x32xbf16>, vector<32x128xbf16>, vector<128x128xf32> -> vector<128x128xf32>
    %690 = arith.addf %686, %689 : vector<128x128xf32>
    %c0_246 = arith.constant 0 : index
    %c0_247 = arith.constant 0 : index
    %691 = vector.load %arg10[%c0_246, %c0_247] : memref<1x128xf32, #tpu.memory_space<vmem>>, vector<1x128xf32>
    %692 = vector.broadcast %691 : vector<1x128xf32> to vector<128x128xf32>
    %693 = arith.addf %690, %692 : vector<128x128xf32>
    %c0_248 = arith.constant 0 : index
    %c0_249 = arith.constant 0 : index
    %c0_250 = arith.constant 0 : index
    %694 = vector.load %arg11[%c0_248, %c0_249, %c0_250] : memref<1x128x128xf32, #tpu.memory_space<vmem>>, vector<1x128x128xf32>
    %695 = vector.shape_cast %694 : vector<1x128x128xf32> to vector<128x128xf32>
    %696 = vector.shape_cast %693 : vector<128x128xf32> to vector<1x128x128xf32>
    tpu.vector_store %arg11[%c0_248, %c0_249, %c0_250], %696 {strides = array<i32>} : memref<1x128x128xf32, #tpu.memory_space<vmem>>, vector<1x128x128xf32>,
    return
  }
  func.func @transform_0(%arg0: i32) -> (i32, i32, i32) {
    %c0_i32 = arith.constant 0 : i32
    %c0_i32_0 = arith.constant 0 : i32
    %c0_i32_1 = arith.constant 0 : i32
    return %arg0, %c0_i32, %c0_i32_0 : i32, i32, i32
  }
  func.func @transform_1(%arg0: i32) -> (i32, i32) {
    %c0_i32 = arith.constant 0 : i32
    %c0_i32_0 = arith.constant 0 : i32
    %c0_i32_1 = arith.constant 0 : i32
    return %c0_i32, %c0_i32_0 : i32, i32
  }
  func.func @transform_2(%arg0: i32) -> (i32, i32) {
    %c0_i32 = arith.constant 0 : i32
    %c0_i32_0 = arith.constant 0 : i32
    %c0_i32_1 = arith.constant 0 : i32
    return %c0_i32, %c0_i32_0 : i32, i32
  }
  func.func @transform_3(%arg0: i32) -> (i32, i32) {
    %c0_i32 = arith.constant 0 : i32
    %c0_i32_0 = arith.constant 0 : i32
    %c0_i32_1 = arith.constant 0 : i32
    return %c0_i32, %c0_i32_0 : i32, i32
  }
  func.func @transform_4(%arg0: i32) -> (i32, i32) {
    %c0_i32 = arith.constant 0 : i32
    %c0_i32_0 = arith.constant 0 : i32
    %c0_i32_1 = arith.constant 0 : i32
    return %c0_i32, %c0_i32_0 : i32, i32
  }
  func.func @transform_5(%arg0: i32) -> (i32, i32) {
    %c0_i32 = arith.constant 0 : i32
    %c0_i32_0 = arith.constant 0 : i32
    %c0_i32_1 = arith.constant 0 : i32
    return %c0_i32, %c0_i32_0 : i32, i32
  }
  func.func @transform_6(%arg0: i32) -> (i32, i32) {
    %c0_i32 = arith.constant 0 : i32
    %c0_i32_0 = arith.constant 0 : i32
    %c0_i32_1 = arith.constant 0 : i32
    return %c0_i32, %c0_i32_0 : i32, i32
  }
  func.func @transform_7(%arg0: i32) -> (i32, i32) {
    %c0_i32 = arith.constant 0 : i32
    %c0_i32_0 = arith.constant 0 : i32
    %c0_i32_1 = arith.constant 0 : i32
    return %c0_i32, %c0_i32_0 : i32, i32
  }
  func.func @transform_8(%arg0: i32) -> (i32, i32) {
    %c0_i32 = arith.constant 0 : i32
    %c0_i32_0 = arith.constant 0 : i32
    %c0_i32_1 = arith.constant 0 : i32
    return %c0_i32, %c0_i32_0 : i32, i32
  }
  func.func @transform_9(%arg0: i32) -> (i32, i32) {
    %c0_i32 = arith.constant 0 : i32
    %c0_i32_0 = arith.constant 0 : i32
    %c0_i32_1 = arith.constant 0 : i32
    return %c0_i32, %c0_i32_0 : i32, i32
  }
  func.func @transform_10(%arg0: i32) -> (i32, i32, i32) {
    %c0_i32 = arith.constant 0 : i32
    %c0_i32_0 = arith.constant 0 : i32
    %c0_i32_1 = arith.constant 0 : i32
    return %arg0, %c0_i32, %c0_i32_0 : i32, i32, i32
  }
}

</mosaic_0001>

<llo_original>
// kernel: tpu_custom_call.1
$region0: #{tpu_custom_call.1}
  #allocation0 [shape = 'u32[]', space=smem, size = 0x4, offset = 0x4, fixed_abs, tag = 'smem constant byte address 0x4 - core index']
  #allocation1 [shape = 'u32[72,128]{1,0:T(1,128)}', space=vmem, size = 0x9000, scoped, tag = 'internal scratch']
  #allocation2 [shape = 'bf16[128,128]{1,0:T(8,128)(2,1)}', space=vmem, size = 0x8000, scoped, tag = 'scratch operand']
  #allocation3 [shape = 'bf16[128,128]{1,0:T(8,128)(2,1)}', space=vmem, size = 0x8000, scoped, tag = 'scratch operand']
  #allocation4 [shape = 'bf16[128,32]{1,0:T(8,128)(2,1)}', space=vmem, size = 0x8000, scoped, tag = 'scratch operand']
  #allocation5 [shape = 'bf16[128,32]{1,0:T(8,128)(2,1)}', space=vmem, size = 0x8000, scoped, tag = 'scratch operand']
  %s0 = inlined_call_operand.vmem [shape: bf16[1,128,16], index: 0, kind: input, shape index: {}]
  %s1 = inlined_call_operand.vmem [shape: bf16[16,128], index: 1, kind: input, shape index: {}]
  %s2 = inlined_call_operand.hbm [shape: bf16[16,128], index: 2, kind: input, shape index: {}]
  %s3 = inlined_call_operand.vmem [shape: f32[1,128], index: 3, kind: input, shape index: {}]
  %s4 = inlined_call_operand.vmem [shape: f32[1,128], index: 4, kind: input, shape index: {}]
  %s5 = inlined_call_operand.vmem [shape: bf16[32,128], index: 5, kind: input, shape index: {}]
  %s6 = inlined_call_operand.vmem [shape: bf16[32,128], index: 6, kind: input, shape index: {}]
  %s7 = inlined_call_operand.vmem [shape: bf16[32,128], index: 7, kind: input, shape index: {}]
  %s8 = inlined_call_operand.vmem [shape: bf16[32,128], index: 8, kind: input, shape index: {}]
  %s9 = inlined_call_operand.vmem [shape: f32[1,128], index: 9, kind: input, shape index: {}]
  %s10 = inlined_call_operand.hbm [shape: f32[1,128,128], index: 10, kind: output, shape index: {}]
  %s11 = sld [smem:[#allocation0]]
  $region54: #{tpu_custom_call.1} parent=0
    _
  %s13 = ssub.s32 1, %s11
  %s14 = scalar_select 0, %s13, %s11
  $region1: #{tpu_custom_call.1} parent=0
    #allocation6 [shape = 'u8[4096]{0}', space=vmem, size = 0x1000, scoped, tag = 'input window, operand 2, single buffered']
    #allocation7 [shape = 's32[1]{0}', space=sflag, size = 0x4, scoped, tag = 'scoped memory for tpu_custom_call.1']
    #allocation8 [shape = 's32[1]{0}', space=sflag, size = 0x4, scoped, tag = 'scoped memory for tpu_custom_call.1']
    #allocation9 [shape = 'u8[65536]{0}', space=vmem, size = 0x10000, scoped, tag = 'output window, operand 0, single buffered']
    %15 = vsyncpa [#allocation7], 0
    %16 = vsyncpa [#allocation8], 0
    // Predicated region
    $region2: #{tpu_custom_call.1} parent=1 // pred_check
      _
    $region3: #{tpu_custom_call.1} parent=1 // pred_check_branch
      %18 = sbr.rel (0) target = $region5
    $region4: #{tpu_custom_call.1} parent=1 // pred_region
      _
    $region5: #{tpu_custom_call.1} parent=1 // pred_fallthru
      _
    // Predicated region
    $region6: #{tpu_custom_call.1} parent=1 // pred_check
      _
    $region7: #{tpu_custom_call.1} parent=1 // pred_check_branch
      %20 = sbr.rel (0) target = $region9
    $region8: #{tpu_custom_call.1} parent=1 // pred_region
      _
    $region9: #{tpu_custom_call.1} parent=1 // pred_fallthru
      _
    // Predicated region
    $region10: #{tpu_custom_call.1} parent=1 // pred_check
      _
    $region11: #{tpu_custom_call.1} parent=1 // pred_check_branch
      %22 = sbr.rel (0) target = $region13
    $region12: #{tpu_custom_call.1} parent=1 // pred_region
      %24 = vsyncadd [#allocation7], 0
      %s25 = sshll.u32 %s2, 4
      %s26 = int_to_ptr.hbm [resolvable:$true] %s25
      %s27 = sshll.u32 [#allocation6], 4
      %s28 = int_to_ptr.vmem [resolvable:$true] %s27
      %33 = dma.hbm_to_vmem [thread:$0]  %s26, 128, %s28, [#allocation7], 64, 64, 4
    $region13: #{tpu_custom_call.1} parent=1 // pred_fallthru
      _
    // Predicated region
    $region14: #{tpu_custom_call.1} parent=1 // pred_check
      _
    $region15: #{tpu_custom_call.1} parent=1 // pred_check_branch
      %35 = sbr.rel (0) target = $region17
    $region16: #{tpu_custom_call.1} parent=1 // pred_region
      _
    $region17: #{tpu_custom_call.1} parent=1 // pred_fallthru
      _
    // Predicated region
    $region18: #{tpu_custom_call.1} parent=1 // pred_check
      _
    $region19: #{tpu_custom_call.1} parent=1 // pred_check_branch
      %37 = sbr.rel (0) target = $region21
    $region20: #{tpu_custom_call.1} parent=1 // pred_region
      _
    $region21: #{tpu_custom_call.1} parent=1 // pred_fallthru
      _
    // Predicated region
    $region22: #{tpu_custom_call.1} parent=1 // pred_check
      _
    $region23: #{tpu_custom_call.1} parent=1 // pred_check_branch
      %39 = sbr.rel (0) target = $region25
    $region24: #{tpu_custom_call.1} parent=1 // pred_region
      _
    $region25: #{tpu_custom_call.1} parent=1 // pred_fallthru
      _
    // Predicated region
    $region26: #{tpu_custom_call.1} parent=1 // pred_check
      _
    $region27: #{tpu_custom_call.1} parent=1 // pred_check_branch
      %41 = sbr.rel (0) target = $region29
    $region28: #{tpu_custom_call.1} parent=1 // pred_region
      _
    $region29: #{tpu_custom_call.1} parent=1 // pred_fallthru
      _
    // Predicated region
    $region30: #{tpu_custom_call.1} parent=1 // pred_check
      _
    $region31: #{tpu_custom_call.1} parent=1 // pred_check_branch
      %43 = sbr.rel (0) target = $region33
    $region32: #{tpu_custom_call.1} parent=1 // pred_region
      _
    $region33: #{tpu_custom_call.1} parent=1 // pred_fallthru
      _
    // Predicated region
    $region34: #{tpu_custom_call.1} parent=1 // pred_check
      _
    $region35: #{tpu_custom_call.1} parent=1 // pred_check_branch
      %45 = sbr.rel (0) target = $region37
    $region36: #{tpu_custom_call.1} parent=1 // pred_region
      _
    $region37: #{tpu_custom_call.1} parent=1 // pred_fallthru
      _
    // Predicated region
    $region38: #{tpu_custom_call.1} parent=1 // pred_check
      _
    $region39: #{tpu_custom_call.1} parent=1 // pred_check_branch
      %47 = sbr.rel (0) target = $region41
    $region40: #{tpu_custom_call.1} parent=1 // pred_region
      _
    $region41: #{tpu_custom_call.1} parent=1 // pred_fallthru
      _
    // Predicated region
    $region42: #{tpu_custom_call.1} parent=1 // pred_check
      _
    $region43: #{tpu_custom_call.1} parent=1 // pred_check_branch
      %49 = sbr.rel (0) target = $region45
    $region44: #{tpu_custom_call.1} parent=1 // pred_region
      %51 = dma.done [#allocation7], 128
    $region45: #{tpu_custom_call.1} parent=1 // pred_fallthru
      _
    %v53 = vld [vmem:[%s0] sm:$0xf]
    %v54 = vld [vmem:[%s0 + $0x4] sm:$0xf]
    %v55 = vld [vmem:[%s0 + $0x8] sm:$0xf]
    %v56 = vld [vmem:[%s0 + $0xc] sm:$0xf]
    %v57 = vld [vmem:[%s0 + $0x10] sm:$0xf]
    %v58 = vld [vmem:[%s0 + $0x14] sm:$0xf]
    %v59 = vld [vmem:[%s0 + $0x18] sm:$0xf]
    %v60 = vld [vmem:[%s0 + $0x1c] sm:$0xf]
    %v61 = vld [vmem:[%s0 + $0x20] sm:$0xf]
    %v62 = vld [vmem:[%s0 + $0x24] sm:$0xf]
    %v63 = vld [vmem:[%s0 + $0x28] sm:$0xf]
    %v64 = vld [vmem:[%s0 + $0x2c] sm:$0xf]
    %v65 = vld [vmem:[%s0 + $0x30] sm:$0xf]
    %v66 = vld [vmem:[%s0 + $0x34] sm:$0xf]
    %v67 = vld [vmem:[%s0 + $0x38] sm:$0xf]
    %v68 = vld [vmem:[%s0 + $0x3c] sm:$0xf]
    %v69 = vld [vmem:[%s1] sm:$0xf]
    %v70 = vld [vmem:[%s1 + $0x4] sm:$0xf]
    %v71 = vld [vmem:[%s3] sm:$0x1]
    %v73 = vperm.slane %v71, 0
    %v91 = vunpack.c.l.b16 %v53
    %v92 = vunpack.c.l.b16 %v54
    %v93 = vunpack.c.l.b16 %v55
    %v94 = vunpack.c.l.b16 %v56
    %v95 = vunpack.c.l.b16 %v57
    %v96 = vunpack.c.l.b16 %v58
    %v97 = vunpack.c.l.b16 %v59
    %v98 = vunpack.c.l.b16 %v60
    %v99 = vunpack.c.l.b16 %v61
    %v100 = vunpack.c.l.b16 %v62
    %v101 = vunpack.c.l.b16 %v63
    %v102 = vunpack.c.l.b16 %v64
    %v103 = vunpack.c.l.b16 %v65
    %v104 = vunpack.c.l.b16 %v66
    %v105 = vunpack.c.l.b16 %v67
    %v106 = vunpack.c.l.b16 %v68
    %v107 = vpack.c.b16 %v92, %v91
    %v108 = vpack.c.b16 %v94, %v93
    %v109 = vpack.c.b16 %v96, %v95
    %v110 = vpack.c.b16 %v98, %v97
    %v111 = vpack.c.b16 %v100, %v99
    %v112 = vpack.c.b16 %v102, %v101
    %v113 = vpack.c.b16 %v104, %v103
    %v114 = vpack.c.b16 %v106, %v105
    %v117 = vunpack.c.l.b16 %v69
    %v118 = vunpack.c.l.b16 %v70
    %v119 = vpack.c.b16 %v118, %v117
    %vm121 = vcmask 130048
    %v123 = vsel %vm121, %v107, 0
    %v126 = vsel %vm121, %v108, 0
    %v129 = vsel %vm121, %v109, 0
    %v132 = vsel %vm121, %v110, 0
    %v135 = vsel %vm121, %v111, 0
    %v138 = vsel %vm121, %v112, 0
    %v141 = vsel %vm121, %v113, 0
    %v144 = vsel %vm121, %v114, 0
    %146 = vmatpush.bf16.msra.mxu0 0
    %147 = vmatpush.bf16.msra.mxu0 0
    %148 = vmatpush.bf16.msra.mxu0 0
    %149 = vmatpush.bf16.msra.mxu0 0
    %150 = vmatpush.bf16.msra.mxu0 0
    %151 = vmatpush.bf16.msra.mxu0 0
    %152 = vmatpush.bf16.msra.mxu0 0
    %153 = vmatpush.bf16.msra.mxu0 %v119
    %154 = vmatmul.bf16.gmra.mxu0 %v123
    %v155 = vpop.f32.mrf.mxu0
    %v156 = vadd.f32 %v73, %v155
    %v157 = vpop.f32.mrf.mxu0
    %v158 = vadd.f32 %v73, %v157
    %159 = vmatmul.bf16.gmra.mxu0 %v126
    %v160 = vpop.f32.mrf.mxu0
    %v161 = vadd.f32 %v73, %v160
    %v162 = vpop.f32.mrf.mxu0
    %v163 = vadd.f32 %v73, %v162
    %164 = vmatmul.bf16.gmra.mxu0 %v129
    %v165 = vpop.f32.mrf.mxu0
    %v166 = vadd.f32 %v73, %v165
    %v167 = vpop.f32.mrf.mxu0
    %v168 = vadd.f32 %v73, %v167
    %169 = vmatmul.bf16.gmra.mxu0 %v132
    %v170 = vpop.f32.mrf.mxu0
    %v171 = vadd.f32 %v73, %v170
    %v172 = vpop.f32.mrf.mxu0
    %v173 = vadd.f32 %v73, %v172
    %174 = vmatmul.bf16.gmra.mxu0 %v135
    %v175 = vpop.f32.mrf.mxu0
    %v176 = vadd.f32 %v73, %v175
    %v177 = vpop.f32.mrf.mxu0
    %v178 = vadd.f32 %v73, %v177
    %179 = vmatmul.bf16.gmra.mxu0 %v138
    %v180 = vpop.f32.mrf.mxu0
    %v181 = vadd.f32 %v73, %v180
    %v182 = vpop.f32.mrf.mxu0
    %v183 = vadd.f32 %v73, %v182
    %184 = vmatmul.bf16.gmra.mxu0 %v141
    %v185 = vpop.f32.mrf.mxu0
    %v186 = vadd.f32 %v73, %v185
    %v187 = vpop.f32.mrf.mxu0
    %v188 = vadd.f32 %v73, %v187
    %189 = vmatmul.bf16.gmra.mxu0 %v144
    %v190 = vpop.f32.mrf.mxu0
    %v191 = vadd.f32 %v73, %v190
    %v192 = vpop.f32.mrf.mxu0
    %v193 = vadd.f32 %v73, %v192
    %194 = vdwg.mxu0
    %v195 = vpack.c.bf16 %v156, %v156
    %v196 = vpack.c.bf16 %v158, %v158
    %v197 = vpack.c.bf16 %v161, %v161
    %v198 = vpack.c.bf16 %v163, %v163
    %v199 = vpack.c.bf16 %v166, %v166
    %v200 = vpack.c.bf16 %v168, %v168
    %v201 = vpack.c.bf16 %v171, %v171
    %v202 = vpack.c.bf16 %v173, %v173
    %v203 = vpack.c.bf16 %v176, %v176
    %v204 = vpack.c.bf16 %v178, %v178
    %v205 = vpack.c.bf16 %v181, %v181
    %v206 = vpack.c.bf16 %v183, %v183
    %v207 = vpack.c.bf16 %v186, %v186
    %v208 = vpack.c.bf16 %v188, %v188
    %v209 = vpack.c.bf16 %v191, %v191
    %v210 = vpack.c.bf16 %v193, %v193
    %211 = vst [vmem:[#allocation2] sm:$0xf] %v195
    %212 = vst [vmem:[#allocation2 + $0x4] sm:$0xf] %v196
    %213 = vst [vmem:[#allocation2 + $0x8] sm:$0xf] %v197
    %214 = vst [vmem:[#allocation2 + $0xc] sm:$0xf] %v198
    %215 = vst [vmem:[#allocation2 + $0x10] sm:$0xf] %v199
    %216 = vst [vmem:[#allocation2 + $0x14] sm:$0xf] %v200
    %217 = vst [vmem:[#allocation2 + $0x18] sm:$0xf] %v201
    %218 = vst [vmem:[#allocation2 + $0x1c] sm:$0xf] %v202
    %219 = vst [vmem:[#allocation2 + $0x20] sm:$0xf] %v203
    %220 = vst [vmem:[#allocation2 + $0x24] sm:$0xf] %v204
    %221 = vst [vmem:[#allocation2 + $0x28] sm:$0xf] %v205
    %222 = vst [vmem:[#allocation2 + $0x2c] sm:$0xf] %v206
    %223 = vst [vmem:[#allocation2 + $0x30] sm:$0xf] %v207
    %224 = vst [vmem:[#allocation2 + $0x34] sm:$0xf] %v208
    %225 = vst [vmem:[#allocation2 + $0x38] sm:$0xf] %v209
    %226 = vst [vmem:[#allocation2 + $0x3c] sm:$0xf] %v210
    %v227 = vld [vmem:[#allocation6] sm:$0xf]
    %v228 = vld [vmem:[#allocation6 + $0x4] sm:$0xf]
    %v229 = vld [vmem:[%s4] sm:$0x1]
    %v231 = vperm.slane %v229, 0
    %v235 = vunpack.c.l.b16 %v227
    %v236 = vunpack.c.l.b16 %v228
    %v237 = vpack.c.b16 %v236, %v235
    %239 = vmatpush.bf16.msra.mxu0 0
    %240 = vmatpush.bf16.msra.mxu0 0
    %241 = vmatpush.bf16.msra.mxu0 0
    %242 = vmatpush.bf16.msra.mxu0 0
    %243 = vmatpush.bf16.msra.mxu0 0
    %244 = vmatpush.bf16.msra.mxu0 0
    %245 = vmatpush.bf16.msra.mxu0 0
    %246 = vmatpush.bf16.msra.mxu0 %v237
    %247 = vmatmul.bf16.gmra.mxu0 %v123
    %v248 = vpop.f32.mrf.mxu0
    %v249 = vadd.f32 %v231, %v248
    %v250 = vpop.f32.mrf.mxu0
    %v251 = vadd.f32 %v231, %v250
    %252 = vmatmul.bf16.gmra.mxu0 %v126
    %v253 = vpop.f32.mrf.mxu0
    %v254 = vadd.f32 %v231, %v253
    %v255 = vpop.f32.mrf.mxu0
    %v256 = vadd.f32 %v231, %v255
    %257 = vmatmul.bf16.gmra.mxu0 %v129
    %v258 = vpop.f32.mrf.mxu0
    %v259 = vadd.f32 %v231, %v258
    %v260 = vpop.f32.mrf.mxu0
    %v261 = vadd.f32 %v231, %v260
    %262 = vmatmul.bf16.gmra.mxu0 %v132
    %v263 = vpop.f32.mrf.mxu0
    %v264 = vadd.f32 %v231, %v263
    %v265 = vpop.f32.mrf.mxu0
    %v266 = vadd.f32 %v231, %v265
    %267 = vmatmul.bf16.gmra.mxu0 %v135
    %v268 = vpop.f32.mrf.mxu0
    %v269 = vadd.f32 %v231, %v268
    %v270 = vpop.f32.mrf.mxu0
    %v271 = vadd.f32 %v231, %v270
    %272 = vmatmul.bf16.gmra.mxu0 %v138
    %v273 = vpop.f32.mrf.mxu0
    %v274 = vadd.f32 %v231, %v273
    %v275 = vpop.f32.mrf.mxu0
    %v276 = vadd.f32 %v231, %v275
    %277 = vmatmul.bf16.gmra.mxu0 %v141
    %v278 = vpop.f32.mrf.mxu0
    %v279 = vadd.f32 %v231, %v278
    %v280 = vpop.f32.mrf.mxu0
    %v281 = vadd.f32 %v231, %v280
    %282 = vmatmul.bf16.gmra.mxu0 %v144
    %v283 = vpop.f32.mrf.mxu0
    %v284 = vadd.f32 %v231, %v283
    %v285 = vpop.f32.mrf.mxu0
    %v286 = vadd.f32 %v231, %v285
    %287 = vdwg.mxu0
    %v288 = vpack.c.bf16 %v249, %v249
    %v289 = vpack.c.bf16 %v251, %v251
    %v290 = vpack.c.bf16 %v254, %v254
    %v291 = vpack.c.bf16 %v256, %v256
    %v292 = vpack.c.bf16 %v259, %v259
    %v293 = vpack.c.bf16 %v261, %v261
    %v294 = vpack.c.bf16 %v264, %v264
    %v295 = vpack.c.bf16 %v266, %v266
    %v296 = vpack.c.bf16 %v269, %v269
    %v297 = vpack.c.bf16 %v271, %v271
    %v298 = vpack.c.bf16 %v274, %v274
    %v299 = vpack.c.bf16 %v276, %v276
    %v300 = vpack.c.bf16 %v279, %v279
    %v301 = vpack.c.bf16 %v281, %v281
    %v302 = vpack.c.bf16 %v284, %v284
    %v303 = vpack.c.bf16 %v286, %v286
    %304 = vst [vmem:[#allocation3] sm:$0xf] %v288
    %305 = vst [vmem:[#allocation3 + $0x4] sm:$0xf] %v289
    %306 = vst [vmem:[#allocation3 + $0x8] sm:$0xf] %v290
    %307 = vst [vmem:[#allocation3 + $0xc] sm:$0xf] %v291
    %308 = vst [vmem:[#allocation3 + $0x10] sm:$0xf] %v292
    %309 = vst [vmem:[#allocation3 + $0x14] sm:$0xf] %v293
    %310 = vst [vmem:[#allocation3 + $0x18] sm:$0xf] %v294
    %311 = vst [vmem:[#allocation3 + $0x1c] sm:$0xf] %v295
    %312 = vst [vmem:[#allocation3 + $0x20] sm:$0xf] %v296
    %313 = vst [vmem:[#allocation3 + $0x24] sm:$0xf] %v297
    %314 = vst [vmem:[#allocation3 + $0x28] sm:$0xf] %v298
    %315 = vst [vmem:[#allocation3 + $0x2c] sm:$0xf] %v299
    %316 = vst [vmem:[#allocation3 + $0x30] sm:$0xf] %v300
    %317 = vst [vmem:[#allocation3 + $0x34] sm:$0xf] %v301
    %318 = vst [vmem:[#allocation3 + $0x38] sm:$0xf] %v302
    %319 = vst [vmem:[#allocation3 + $0x3c] sm:$0xf] %v303
    %v320 = vld [vmem:[%s5] sm:$0xf]
    %v321 = vld [vmem:[%s5 + $0x4] sm:$0xf]
    %v322 = vld [vmem:[%s5 + $0x8] sm:$0xf]
    %v323 = vld [vmem:[%s5 + $0xc] sm:$0xf]
    %v324 = vld [vmem:[%s6] sm:$0xf]
    %v325 = vld [vmem:[%s6 + $0x4] sm:$0xf]
    %v326 = vld [vmem:[%s6 + $0x8] sm:$0xf]
    %v327 = vld [vmem:[%s6 + $0xc] sm:$0xf]
    %v328 = vld [vmem:[#allocation2] sm:$0xf]
    %v329 = vld [vmem:[#allocation2 + $0x4] sm:$0xf]
    %v330 = vunpack.c.l.bf16 %v328
    %v331 = vunpack.c.l.bf16 %v329
    %v336 = vunpack.c.l.b16 %v320
    %v337 = vunpack.c.l.b16 %v321
    %v338 = vunpack.c.l.b16 %v322
    %v339 = vunpack.c.l.b16 %v323
    %v340 = vpack.c.b16 %v337, %v336
    %v341 = vpack.c.b16 %v339, %v338
    %vm344 = vcmask 261120
    %v346 = vsel %vm344, 0, 0
    %348 = vmatpush.bf16.msra.mxu0 0
    %349 = vmatpush.bf16.msra.mxu0 0
    %350 = vmatpush.bf16.msra.mxu0 0
    %351 = vmatpush.bf16.msra.mxu0 0
    %352 = vmatpush.bf16.msra.mxu0 0
    %353 = vmatpush.bf16.msra.mxu0 0
    %354 = vmatpush.bf16.msra.mxu0 %v341
    %355 = vmatpush.bf16.msra.mxu0 %v340
    %356 = vmatmul.bf16.gmra.mxu0 %v346
    %v357 = vpop.f32.mrf.mxu0
    %v358 = vadd.f32 %v330, %v357
    %v359 = vpop.f32.mrf.mxu0
    %v360 = vadd.f32 %v331, %v359
    %361 = vdwg.mxu0
    %s362 = scalar_lea.vmem [#allocation3], 56
    %v363 = vld [vmem:[%s362] sm:$0xf]
    %v364 = vld [vmem:[%s362 + $0x4] sm:$0xf]
    %v365 = vunpack.c.l.bf16 %v363
    %v366 = vunpack.c.l.bf16 %v364
    %v371 = vunpack.c.l.b16 %v324
    %v372 = vunpack.c.l.b16 %v325
    %v373 = vunpack.c.l.b16 %v326
    %v374 = vunpack.c.l.b16 %v327
    %v375 = vpack.c.b16 %v372, %v371
    %v376 = vpack.c.b16 %v374, %v373
    %379 = vmatpush.bf16.msra.mxu0 0
    %380 = vmatpush.bf16.msra.mxu0 0
    %381 = vmatpush.bf16.msra.mxu0 0
    %382 = vmatpush.bf16.msra.mxu0 0
    %383 = vmatpush.bf16.msra.mxu0 0
    %384 = vmatpush.bf16.msra.mxu0 0
    %385 = vmatpush.bf16.msra.mxu0 %v376
    %386 = vmatpush.bf16.msra.mxu0 %v375
    %387 = vmatmul.bf16.gmra.mxu0 %v346
    %v388 = vpop.f32.mrf.mxu0
    %v389 = vadd.f32 %v365, %v388
    %v390 = vpop.f32.mrf.mxu0
    %v391 = vadd.f32 %v366, %v390
    %392 = vdwg.mxu0
    %v393 = vmul.f32 %v358, 0.5
    %v394 = vmul.f32 %v360, 0.5
    %v395 = vtanh.pop %v393
    %v396 = vtanh.pop %v394
    %v397 = vmul.f32 %v395, 0.5
    %v398 = vmul.f32 %v396, 0.5
    %v399 = vadd.f32 %v397, 0.5
    %v400 = vadd.f32 %v398, 0.5
    %v401 = vtanh.pop %v358
    %v402 = vtanh.pop %v360
    %v403 = vmul.f32 %v399, 0.0
    %v404 = vmul.f32 %v400, 0.0
    %407 = vrot.lane.b32.xlu0 %v401, 64
    %v408 = vpop.permute.xlu0 %407
    %409 = vrot.lane.b32.xlu0 %v402, 64
    %v410 = vpop.permute.xlu0 %409
    %v413 = vmul.f32 %v399, %v408
    %v414 = vmul.f32 %v400, %v410
    %417 = vrot.lane.b32.xlu0 %v413, 32
    %v418 = vpop.permute.xlu0 %417
    %419 = vrot.lane.b32.xlu0 %v414, 32
    %v420 = vpop.permute.xlu0 %419
    %v423 = vadd.f32 %v403, %v418
    %v424 = vadd.f32 %v404, %v420
    %v425 = vtanh.pop %v423
    %v426 = vtanh.pop %v424
    %429 = vrot.lane.b32.xlu0 %v425, 64
    %v430 = vpop.permute.xlu0 %429
    %431 = vrot.lane.b32.xlu0 %v426, 64
    %v432 = vpop.permute.xlu0 %431
    %v435 = vmul.f32 %v399, %v430
    %v436 = vmul.f32 %v400, %v432
    %v437 = vmul.f32 %v389, 0.5
    %v438 = vmul.f32 %v391, 0.5
    %v439 = vtanh.pop %v437
    %v440 = vtanh.pop %v438
    %v441 = vmul.f32 %v439, 0.5
    %v442 = vmul.f32 %v440, 0.5
    %v443 = vadd.f32 %v441, 0.5
    %v444 = vadd.f32 %v442, 0.5
    %v445 = vtanh.pop %v389
    %v446 = vtanh.pop %v391
    %v447 = vmul.f32 %v443, 0.0
    %v448 = vmul.f32 %v444, 0.0
    %451 = vrot.lane.b32.xlu0 %v445, 64
    %v452 = vpop.permute.xlu0 %451
    %453 = vrot.lane.b32.xlu0 %v446, 64
    %v454 = vpop.permute.xlu0 %453
    %v457 = vmul.f32 %v443, %v452
    %v458 = vmul.f32 %v444, %v454
    %461 = vrot.lane.b32.xlu0 %v457, 32
    %v462 = vpop.permute.xlu0 %461
    %463 = vrot.lane.b32.xlu0 %v458, 32
    %v464 = vpop.permute.xlu0 %463
    %v467 = vadd.f32 %v447, %v462
    %v468 = vadd.f32 %v448, %v464
    %v469 = vtanh.pop %v467
    %v470 = vtanh.pop %v468
    %473 = vrot.lane.b32.xlu0 %v469, 64
    %v474 = vpop.permute.xlu0 %473
    %475 = vrot.lane.b32.xlu0 %v470, 64
    %v476 = vpop.permute.xlu0 %475
    %v479 = vmul.f32 %v443, %v474
    %v480 = vmul.f32 %v444, %v476
    %v481 = vpack.c.bf16 %v435, %v435
    %v482 = vpack.c.bf16 %v436, %v436
    %v483 = vpack.c.bf16 %v479, %v479
    %v484 = vpack.c.bf16 %v480, %v480
    %487 = vrot.lane.b32.xlu0 %v481, 32
    %v488 = vpop.permute.xlu0 %487
    %489 = vrot.lane.b32.xlu0 %v482, 32
    %v490 = vpop.permute.xlu0 %489
    %vm493 = vcmask 257024
    %494 = vst.msk [vmem:[#allocation4] sm:$0xf] %vm493, %v488
    %495 = vst.msk [vmem:[#allocation4 + $0x4] sm:$0xf] %vm493, %v490
    %498 = vrot.lane.b32.xlu0 %v483, 32
    %v499 = vpop.permute.xlu0 %498
    %500 = vrot.lane.b32.xlu0 %v484, 32
    %v501 = vpop.permute.xlu0 %500
    %s504 = scalar_lea.vmem [#allocation5], 56
    %505 = vst.msk [vmem:[%s504] sm:$0xf] %vm493, %v499
    %506 = vst.msk [vmem:[%s504 + $0x4] sm:$0xf] %vm493, %v501
    %s507 = scalar_lea.vmem [#allocation2], 8
    %v508 = vld [vmem:[%s507] sm:$0xf]
    %v509 = vld [vmem:[%s507 + $0x4] sm:$0xf]
    %v510 = vunpack.c.l.bf16 %v508
    %v511 = vunpack.c.l.bf16 %v509
    %v512 = vunpack.c.l.b16 %v481
    %v513 = vunpack.c.l.b16 %v482
    %v514 = vpack.c.b16 %v513, %v512
    %515 = vrot.lane.b32.xlu0 %v514, 32
    %v516 = vpop.permute.xlu0 %515
    %v518 = vsel %vm344, %v516, 0
    %520 = vmatpush.bf16.msra.mxu0 0
    %521 = vmatpush.bf16.msra.mxu0 0
    %522 = vmatpush.bf16.msra.mxu0 0
    %523 = vmatpush.bf16.msra.mxu0 0
    %524 = vmatpush.bf16.msra.mxu0 0
    %525 = vmatpush.bf16.msra.mxu0 0
    %526 = vmatpush.bf16.msra.mxu0 %v341
    %527 = vmatpush.bf16.msra.mxu0 %v340
    %528 = vmatmul.bf16.gmra.mxu0 %v518
    %v529 = vpop.f32.mrf.mxu0
    %v530 = vadd.f32 %v510, %v529
    %v531 = vpop.f32.mrf.mxu0
    %v532 = vadd.f32 %v511, %v531
    %533 = vdwg.mxu0
    %s534 = scalar_lea.vmem [#allocation3], 48
    %v535 = vld [vmem:[%s534] sm:$0xf]
    %v536 = vld [vmem:[%s534 + $0x4] sm:$0xf]
    %v537 = vunpack.c.l.bf16 %v535
    %v538 = vunpack.c.l.bf16 %v536
    %v539 = vunpack.c.l.b16 %v483
    %v540 = vunpack.c.l.b16 %v484
    %v541 = vpack.c.b16 %v540, %v539
    %542 = vrot.lane.b32.xlu0 %v541, 32
    %v543 = vpop.permute.xlu0 %542
    %v545 = vsel %vm344, %v543, 0
    %547 = vmatpush.bf16.msra.mxu0 0
    %548 = vmatpush.bf16.msra.mxu0 0
    %549 = vmatpush.bf16.msra.mxu0 0
    %550 = vmatpush.bf16.msra.mxu0 0
    %551 = vmatpush.bf16.msra.mxu0 0
    %552 = vmatpush.bf16.msra.mxu0 0
    %553 = vmatpush.bf16.msra.mxu0 %v376
    %554 = vmatpush.bf16.msra.mxu0 %v375
    %555 = vmatmul.bf16.gmra.mxu0 %v545
    %v556 = vpop.f32.mrf.mxu0
    %v557 = vadd.f32 %v537, %v556
    %v558 = vpop.f32.mrf.mxu0
    %v559 = vadd.f32 %v538, %v558
    %560 = vdwg.mxu0
    %v561 = vmul.f32 %v530, 0.5
    %v562 = vmul.f32 %v532, 0.5
    %v563 = vtanh.pop %v561
    %v564 = vtanh.pop %v562
    %v565 = vmul.f32 %v563, 0.5
    %v566 = vmul.f32 %v564, 0.5
    %v567 = vadd.f32 %v565, 0.5
    %v568 = vadd.f32 %v566, 0.5
    %v569 = vtanh.pop %v530
    %v570 = vtanh.pop %v532
    %v571 = vmul.f32 %v567, %v423
    %v572 = vmul.f32 %v568, %v424
    %575 = vrot.lane.b32.xlu0 %v569, 64
    %v576 = vpop.permute.xlu0 %575
    %577 = vrot.lane.b32.xlu0 %v570, 64
    %v578 = vpop.permute.xlu0 %577
    %v581 = vmul.f32 %v567, %v576
    %v582 = vmul.f32 %v568, %v578
    %585 = vrot.lane.b32.xlu0 %v581, 32
    %v586 = vpop.permute.xlu0 %585
    %587 = vrot.lane.b32.xlu0 %v582, 32
    %v588 = vpop.permute.xlu0 %587
    %v591 = vadd.f32 %v571, %v586
    %v592 = vadd.f32 %v572, %v588
    %v593 = vtanh.pop %v591
    %v594 = vtanh.pop %v592
    %597 = vrot.lane.b32.xlu0 %v593, 64
    %v598 = vpop.permute.xlu0 %597
    %599 = vrot.lane.b32.xlu0 %v594, 64
    %v600 = vpop.permute.xlu0 %599
    %v603 = vmul.f32 %v567, %v598
    %v604 = vmul.f32 %v568, %v600
    %v605 = vmul.f32 %v557, 0.5
    %v606 = vmul.f32 %v559, 0.5
    %v607 = vtanh.pop %v605
    %v608 = vtanh.pop %v606
    %v609 = vmul.f32 %v607, 0.5
    %v610 = vmul.f32 %v608, 0.5
    %v611 = vadd.f32 %v609, 0.5
    %v612 = vadd.f32 %v610, 0.5
    %v613 = vtanh.pop %v557
    %v614 = vtanh.pop %v559
    %v615 = vmul.f32 %v611, %v467
    %v616 = vmul.f32 %v612, %v468
    %619 = vrot.lane.b32.xlu0 %v613, 64
    %v620 = vpop.permute.xlu0 %619
    %621 = vrot.lane.b32.xlu0 %v614, 64
    %v622 = vpop.permute.xlu0 %621
    %v625 = vmul.f32 %v611, %v620
    %v626 = vmul.f32 %v612, %v622
    %629 = vrot.lane.b32.xlu0 %v625, 32
    %v630 = vpop.permute.xlu0 %629
    %631 = vrot.lane.b32.xlu0 %v626, 32
    %v632 = vpop.permute.xlu0 %631
    %v635 = vadd.f32 %v615, %v630
    %v636 = vadd.f32 %v616, %v632
    %v637 = vtanh.pop %v635
    %v638 = vtanh.pop %v636
    %641 = vrot.lane.b32.xlu0 %v637, 64
    %v642 = vpop.permute.xlu0 %641
    %643 = vrot.lane.b32.xlu0 %v638, 64
    %v644 = vpop.permute.xlu0 %643
    %v647 = vmul.f32 %v611, %v642
    %v648 = vmul.f32 %v612, %v644
    %v649 = vpack.c.bf16 %v603, %v603
    %v650 = vpack.c.bf16 %v604, %v604
    %v651 = vpack.c.bf16 %v647, %v647
    %v652 = vpack.c.bf16 %v648, %v648
    %655 = vrot.lane.b32.xlu0 %v649, 32
    %v656 = vpop.permute.xlu0 %655
    %657 = vrot.lane.b32.xlu0 %v650, 32
    %v658 = vpop.permute.xlu0 %657
    %s661 = scalar_lea.vmem [#allocation4], 8
    %662 = vst.msk [vmem:[%s661] sm:$0xf] %vm493, %v656
    %663 = vst.msk [vmem:[%s661 + $0x4] sm:$0xf] %vm493, %v658
    %666 = vrot.lane.b32.xlu0 %v651, 32
    %v667 = vpop.permute.xlu0 %666
    %668 = vrot.lane.b32.xlu0 %v652, 32
    %v669 = vpop.permute.xlu0 %668
    %s672 = scalar_lea.vmem [#allocation5], 48
    %673 = vst.msk [vmem:[%s672] sm:$0xf] %vm493, %v667
    %674 = vst.msk [vmem:[%s672 + $0x4] sm:$0xf] %vm493, %v669
    %s675 = scalar_lea.vmem [#allocation2], 16
    %v676 = vld [vmem:[%s675] sm:$0xf]
    %v677 = vld [vmem:[%s675 + $0x4] sm:$0xf]
    %v678 = vunpack.c.l.bf16 %v676
    %v679 = vunpack.c.l.bf16 %v677
    %v680 = vunpack.c.l.b16 %v649
    %v681 = vunpack.c.l.b16 %v650
    %v682 = vpack.c.b16 %v681, %v680
    %683 = vrot.lane.b32.xlu0 %v682, 32
    %v684 = vpop.permute.xlu0 %683
    %v686 = vsel %vm344, %v684, 0
    %688 = vmatpush.bf16.msra.mxu0 0
    %689 = vmatpush.bf16.msra.mxu0 0
    %690 = vmatpush.bf16.msra.mxu0 0
    %691 = vmatpush.bf16.msra.mxu0 0
    %692 = vmatpush.bf16.msra.mxu0 0
    %693 = vmatpush.bf16.msra.mxu0 0
    %694 = vmatpush.bf16.msra.mxu0 %v341
    %695 = vmatpush.bf16.msra.mxu0 %v340
    %696 = vmatmul.bf16.gmra.mxu0 %v686
    %v697 = vpop.f32.mrf.mxu0
    %v698 = vadd.f32 %v678, %v697
    %v699 = vpop.f32.mrf.mxu0
    %v700 = vadd.f32 %v679, %v699
    %701 = vdwg.mxu0
    %s702 = scalar_lea.vmem [#allocation3], 40
    %v703 = vld [vmem:[%s702] sm:$0xf]
    %v704 = vld [vmem:[%s702 + $0x4] sm:$0xf]
    %v705 = vunpack.c.l.bf16 %v703
    %v706 = vunpack.c.l.bf16 %v704
    %v707 = vunpack.c.l.b16 %v651
    %v708 = vunpack.c.l.b16 %v652
    %v709 = vpack.c.b16 %v708, %v707
    %710 = vrot.lane.b32.xlu0 %v709, 32
    %v711 = vpop.permute.xlu0 %710
    %v713 = vsel %vm344, %v711, 0
    %715 = vmatpush.bf16.msra.mxu0 0
    %716 = vmatpush.bf16.msra.mxu0 0
    %717 = vmatpush.bf16.msra.mxu0 0
    %718 = vmatpush.bf16.msra.mxu0 0
    %719 = vmatpush.bf16.msra.mxu0 0
    %720 = vmatpush.bf16.msra.mxu0 0
    %721 = vmatpush.bf16.msra.mxu0 %v376
    %722 = vmatpush.bf16.msra.mxu0 %v375
    %723 = vmatmul.bf16.gmra.mxu0 %v713
    %v724 = vpop.f32.mrf.mxu0
    %v725 = vadd.f32 %v705, %v724
    %v726 = vpop.f32.mrf.mxu0
    %v727 = vadd.f32 %v706, %v726
    %728 = vdwg.mxu0
    %v729 = vmul.f32 %v698, 0.5
    %v730 = vmul.f32 %v700, 0.5
    %v731 = vtanh.pop %v729
    %v732 = vtanh.pop %v730
    %v733 = vmul.f32 %v731, 0.5
    %v734 = vmul.f32 %v732, 0.5
    %v735 = vadd.f32 %v733, 0.5
    %v736 = vadd.f32 %v734, 0.5
    %v737 = vtanh.pop %v698
    %v738 = vtanh.pop %v700
    %v739 = vmul.f32 %v735, %v591
    %v740 = vmul.f32 %v736, %v592
    %743 = vrot.lane.b32.xlu0 %v737, 64
    %v744 = vpop.permute.xlu0 %743
    %745 = vrot.lane.b32.xlu0 %v738, 64
    %v746 = vpop.permute.xlu0 %745
    %v749 = vmul.f32 %v735, %v744
    %v750 = vmul.f32 %v736, %v746
    %753 = vrot.lane.b32.xlu0 %v749, 32
    %v754 = vpop.permute.xlu0 %753
    %755 = vrot.lane.b32.xlu0 %v750, 32
    %v756 = vpop.permute.xlu0 %755
    %v759 = vadd.f32 %v739, %v754
    %v760 = vadd.f32 %v740, %v756
    %v761 = vtanh.pop %v759
    %v762 = vtanh.pop %v760
    %765 = vrot.lane.b32.xlu0 %v761, 64
    %v766 = vpop.permute.xlu0 %765
    %767 = vrot.lane.b32.xlu0 %v762, 64
    %v768 = vpop.permute.xlu0 %767
    %v771 = vmul.f32 %v735, %v766
    %v772 = vmul.f32 %v736, %v768
    %v773 = vmul.f32 %v725, 0.5
    %v774 = vmul.f32 %v727, 0.5
    %v775 = vtanh.pop %v773
    %v776 = vtanh.pop %v774
    %v777 = vmul.f32 %v775, 0.5
    %v778 = vmul.f32 %v776, 0.5
    %v779 = vadd.f32 %v777, 0.5
    %v780 = vadd.f32 %v778, 0.5
    %v781 = vtanh.pop %v725
    %v782 = vtanh.pop %v727
    %v783 = vmul.f32 %v779, %v635
    %v784 = vmul.f32 %v780, %v636
    %787 = vrot.lane.b32.xlu0 %v781, 64
    %v788 = vpop.permute.xlu0 %787
    %789 = vrot.lane.b32.xlu0 %v782, 64
    %v790 = vpop.permute.xlu0 %789
    %v793 = vmul.f32 %v779, %v788
    %v794 = vmul.f32 %v780, %v790
    %797 = vrot.lane.b32.xlu0 %v793, 32
    %v798 = vpop.permute.xlu0 %797
    %799 = vrot.lane.b32.xlu0 %v794, 32
    %v800 = vpop.permute.xlu0 %799
    %v803 = vadd.f32 %v783, %v798
    %v804 = vadd.f32 %v784, %v800
    %v805 = vtanh.pop %v803
    %v806 = vtanh.pop %v804
    %809 = vrot.lane.b32.xlu0 %v805, 64
    %v810 = vpop.permute.xlu0 %809
    %811 = vrot.lane.b32.xlu0 %v806, 64
    %v812 = vpop.permute.xlu0 %811
    %v815 = vmul.f32 %v779, %v810
    %v816 = vmul.f32 %v780, %v812
    %v817 = vpack.c.bf16 %v771, %v771
    %v818 = vpack.c.bf16 %v772, %v772
    %v819 = vpack.c.bf16 %v815, %v815
    %v820 = vpack.c.bf16 %v816, %v816
    %823 = vrot.lane.b32.xlu0 %v817, 32
    %v824 = vpop.permute.xlu0 %823
    %825 = vrot.lane.b32.xlu0 %v818, 32
    %v826 = vpop.permute.xlu0 %825
    %s829 = scalar_lea.vmem [#allocation4], 16
    %830 = vst.msk [vmem:[%s829] sm:$0xf] %vm493, %v824
    %831 = vst.msk [vmem:[%s829 + $0x4] sm:$0xf] %vm493, %v826
    %834 = vrot.lane.b32.xlu0 %v819, 32
    %v835 = vpop.permute.xlu0 %834
    %836 = vrot.lane.b32.xlu0 %v820, 32
    %v837 = vpop.permute.xlu0 %836
    %s840 = scalar_lea.vmem [#allocation5], 40
    %841 = vst.msk [vmem:[%s840] sm:$0xf] %vm493, %v835
    %842 = vst.msk [vmem:[%s840 + $0x4] sm:$0xf] %vm493, %v837
    %s843 = scalar_lea.vmem [#allocation2], 24
    %v844 = vld [vmem:[%s843] sm:$0xf]
    %v845 = vld [vmem:[%s843 + $0x4] sm:$0xf]
    %v846 = vunpack.c.l.bf16 %v844
    %v847 = vunpack.c.l.bf16 %v845
    %v848 = vunpack.c.l.b16 %v817
    %v849 = vunpack.c.l.b16 %v818
    %v850 = vpack.c.b16 %v849, %v848
    %851 = vrot.lane.b32.xlu0 %v850, 32
    %v852 = vpop.permute.xlu0 %851
    %v854 = vsel %vm344, %v852, 0
    %856 = vmatpush.bf16.msra.mxu0 0
    %857 = vmatpush.bf16.msra.mxu0 0
    %858 = vmatpush.bf16.msra.mxu0 0
    %859 = vmatpush.bf16.msra.mxu0 0
    %860 = vmatpush.bf16.msra.mxu0 0
    %861 = vmatpush.bf16.msra.mxu0 0
    %862 = vmatpush.bf16.msra.mxu0 %v341
    %863 = vmatpush.bf16.msra.mxu0 %v340
    %864 = vmatmul.bf16.gmra.mxu0 %v854
    %v865 = vpop.f32.mrf.mxu0
    %v866 = vadd.f32 %v846, %v865
    %v867 = vpop.f32.mrf.mxu0
    %v868 = vadd.f32 %v847, %v867
    %869 = vdwg.mxu0
    %s870 = scalar_lea.vmem [#allocation3], 32
    %v871 = vld [vmem:[%s870] sm:$0xf]
    %v872 = vld [vmem:[%s870 + $0x4] sm:$0xf]
    %v873 = vunpack.c.l.bf16 %v871
    %v874 = vunpack.c.l.bf16 %v872
    %v875 = vunpack.c.l.b16 %v819
    %v876 = vunpack.c.l.b16 %v820
    %v877 = vpack.c.b16 %v876, %v875
    %878 = vrot.lane.b32.xlu0 %v877, 32
    %v879 = vpop.permute.xlu0 %878
    %v881 = vsel %vm344, %v879, 0
    %883 = vmatpush.bf16.msra.mxu0 0
    %884 = vmatpush.bf16.msra.mxu0 0
    %885 = vmatpush.bf16.msra.mxu0 0
    %886 = vmatpush.bf16.msra.mxu0 0
    %887 = vmatpush.bf16.msra.mxu0 0
    %888 = vmatpush.bf16.msra.mxu0 0
    %889 = vmatpush.bf16.msra.mxu0 %v376
    %890 = vmatpush.bf16.msra.mxu0 %v375
    %891 = vmatmul.bf16.gmra.mxu0 %v881
    %v892 = vpop.f32.mrf.mxu0
    %v893 = vadd.f32 %v873, %v892
    %v894 = vpop.f32.mrf.mxu0
    %v895 = vadd.f32 %v874, %v894
    %896 = vdwg.mxu0
    %v897 = vmul.f32 %v866, 0.5
    %v898 = vmul.f32 %v868, 0.5
    %v899 = vtanh.pop %v897
    %v900 = vtanh.pop %v898
    %v901 = vmul.f32 %v899, 0.5
    %v902 = vmul.f32 %v900, 0.5
    %v903 = vadd.f32 %v901, 0.5
    %v904 = vadd.f32 %v902, 0.5
    %v905 = vtanh.pop %v866
    %v906 = vtanh.pop %v868
    %v907 = vmul.f32 %v903, %v759
    %v908 = vmul.f32 %v904, %v760
    %911 = vrot.lane.b32.xlu0 %v905, 64
    %v912 = vpop.permute.xlu0 %911
    %913 = vrot.lane.b32.xlu0 %v906, 64
    %v914 = vpop.permute.xlu0 %913
    %v917 = vmul.f32 %v903, %v912
    %v918 = vmul.f32 %v904, %v914
    %921 = vrot.lane.b32.xlu0 %v917, 32
    %v922 = vpop.permute.xlu0 %921
    %923 = vrot.lane.b32.xlu0 %v918, 32
    %v924 = vpop.permute.xlu0 %923
    %v927 = vadd.f32 %v907, %v922
    %v928 = vadd.f32 %v908, %v924
    %v929 = vtanh.pop %v927
    %v930 = vtanh.pop %v928
    %933 = vrot.lane.b32.xlu0 %v929, 64
    %v934 = vpop.permute.xlu0 %933
    %935 = vrot.lane.b32.xlu0 %v930, 64
    %v936 = vpop.permute.xlu0 %935
    %v939 = vmul.f32 %v903, %v934
    %v940 = vmul.f32 %v904, %v936
    %v941 = vmul.f32 %v893, 0.5
    %v942 = vmul.f32 %v895, 0.5
    %v943 = vtanh.pop %v941
    %v944 = vtanh.pop %v942
    %v945 = vmul.f32 %v943, 0.5
    %v946 = vmul.f32 %v944, 0.5
    %v947 = vadd.f32 %v945, 0.5
    %v948 = vadd.f32 %v946, 0.5
    %v949 = vtanh.pop %v893
    %v950 = vtanh.pop %v895
    %v951 = vmul.f32 %v947, %v803
    %v952 = vmul.f32 %v948, %v804
    %955 = vrot.lane.b32.xlu0 %v949, 64
    %v956 = vpop.permute.xlu0 %955
    %957 = vrot.lane.b32.xlu0 %v950, 64
    %v958 = vpop.permute.xlu0 %957
    %v961 = vmul.f32 %v947, %v956
    %v962 = vmul.f32 %v948, %v958
    %965 = vrot.lane.b32.xlu0 %v961, 32
    %v966 = vpop.permute.xlu0 %965
    %967 = vrot.lane.b32.xlu0 %v962, 32
    %v968 = vpop.permute.xlu0 %967
    %v971 = vadd.f32 %v951, %v966
    %v972 = vadd.f32 %v952, %v968
    %v973 = vtanh.pop %v971
    %v974 = vtanh.pop %v972
    %977 = vrot.lane.b32.xlu0 %v973, 64
    %v978 = vpop.permute.xlu0 %977
    %979 = vrot.lane.b32.xlu0 %v974, 64
    %v980 = vpop.permute.xlu0 %979
    %v983 = vmul.f32 %v947, %v978
    %v984 = vmul.f32 %v948, %v980
    %v985 = vpack.c.bf16 %v939, %v939
    %v986 = vpack.c.bf16 %v940, %v940
    %v987 = vpack.c.bf16 %v983, %v983
    %v988 = vpack.c.bf16 %v984, %v984
    %991 = vrot.lane.b32.xlu0 %v985, 32
    %v992 = vpop.permute.xlu0 %991
    %993 = vrot.lane.b32.xlu0 %v986, 32
    %v994 = vpop.permute.xlu0 %993
    %s997 = scalar_lea.vmem [#allocation4], 24
    %998 = vst.msk [vmem:[%s997] sm:$0xf] %vm493, %v992
    %999 = vst.msk [vmem:[%s997 + $0x4] sm:$0xf] %vm493, %v994
    %1002 = vrot.lane.b32.xlu0 %v987, 32
    %v1003 = vpop.permute.xlu0 %1002
    %1004 = vrot.lane.b32.xlu0 %v988, 32
    %v1005 = vpop.permute.xlu0 %1004
    %s1008 = scalar_lea.vmem [#allocation5], 32
    %1009 = vst.msk [vmem:[%s1008] sm:$0xf] %vm493, %v1003
    %1010 = vst.msk [vmem:[%s1008 + $0x4] sm:$0xf] %vm493, %v1005
    %s1011 = scalar_lea.vmem [#allocation2], 32
    %v1012 = vld [vmem:[%s1011] sm:$0xf]
    %v1013 = vld [vmem:[%s1011 + $0x4] sm:$0xf]
    %v1014 = vunpack.c.l.bf16 %v1012
    %v1015 = vunpack.c.l.bf16 %v1013
    %v1016 = vunpack.c.l.b16 %v985
    %v1017 = vunpack.c.l.b16 %v986
    %v1018 = vpack.c.b16 %v1017, %v1016
    %1019 = vrot.lane.b32.xlu0 %v1018, 32
    %v1020 = vpop.permute.xlu0 %1019
    %v1022 = vsel %vm344, %v1020, 0
    %1024 = vmatpush.bf16.msra.mxu0 0
    %1025 = vmatpush.bf16.msra.mxu0 0
    %1026 = vmatpush.bf16.msra.mxu0 0
    %1027 = vmatpush.bf16.msra.mxu0 0
    %1028 = vmatpush.bf16.msra.mxu0 0
    %1029 = vmatpush.bf16.msra.mxu0 0
    %1030 = vmatpush.bf16.msra.mxu0 %v341
    %1031 = vmatpush.bf16.msra.mxu0 %v340
    %1032 = vmatmul.bf16.gmra.mxu0 %v1022
    %v1033 = vpop.f32.mrf.mxu0
    %v1034 = vadd.f32 %v1014, %v1033
    %v1035 = vpop.f32.mrf.mxu0
    %v1036 = vadd.f32 %v1015, %v1035
    %1037 = vdwg.mxu0
    %s1038 = scalar_lea.vmem [#allocation3], 24
    %v1039 = vld [vmem:[%s1038] sm:$0xf]
    %v1040 = vld [vmem:[%s1038 + $0x4] sm:$0xf]
    %v1041 = vunpack.c.l.bf16 %v1039
    %v1042 = vunpack.c.l.bf16 %v1040
    %v1043 = vunpack.c.l.b16 %v987
    %v1044 = vunpack.c.l.b16 %v988
    %v1045 = vpack.c.b16 %v1044, %v1043
    %1046 = vrot.lane.b32.xlu0 %v1045, 32
    %v1047 = vpop.permute.xlu0 %1046
    %v1049 = vsel %vm344, %v1047, 0
    %1051 = vmatpush.bf16.msra.mxu0 0
    %1052 = vmatpush.bf16.msra.mxu0 0
    %1053 = vmatpush.bf16.msra.mxu0 0
    %1054 = vmatpush.bf16.msra.mxu0 0
    %1055 = vmatpush.bf16.msra.mxu0 0
    %1056 = vmatpush.bf16.msra.mxu0 0
    %1057 = vmatpush.bf16.msra.mxu0 %v376
    %1058 = vmatpush.bf16.msra.mxu0 %v375
    %1059 = vmatmul.bf16.gmra.mxu0 %v1049
    %v1060 = vpop.f32.mrf.mxu0
    %v1061 = vadd.f32 %v1041, %v1060
    %v1062 = vpop.f32.mrf.mxu0
    %v1063 = vadd.f32 %v1042, %v1062
    %1064 = vdwg.mxu0
    %v1065 = vmul.f32 %v1034, 0.5
    %v1066 = vmul.f32 %v1036, 0.5
    %v1067 = vtanh.pop %v1065
    %v1068 = vtanh.pop %v1066
    %v1069 = vmul.f32 %v1067, 0.5
    %v1070 = vmul.f32 %v1068, 0.5
    %v1071 = vadd.f32 %v1069, 0.5
    %v1072 = vadd.f32 %v1070, 0.5
    %v1073 = vtanh.pop %v1034
    %v1074 = vtanh.pop %v1036
    %v1075 = vmul.f32 %v1071, %v927
    %v1076 = vmul.f32 %v1072, %v928
    %1079 = vrot.lane.b32.xlu0 %v1073, 64
    %v1080 = vpop.permute.xlu0 %1079
    %1081 = vrot.lane.b32.xlu0 %v1074, 64
    %v1082 = vpop.permute.xlu0 %1081
    %v1085 = vmul.f32 %v1071, %v1080
    %v1086 = vmul.f32 %v1072, %v1082
    %1089 = vrot.lane.b32.xlu0 %v1085, 32
    %v1090 = vpop.permute.xlu0 %1089
    %1091 = vrot.lane.b32.xlu0 %v1086, 32
    %v1092 = vpop.permute.xlu0 %1091
    %v1095 = vadd.f32 %v1075, %v1090
    %v1096 = vadd.f32 %v1076, %v1092
    %v1097 = vtanh.pop %v1095
    %v1098 = vtanh.pop %v1096
    %1101 = vrot.lane.b32.xlu0 %v1097, 64
    %v1102 = vpop.permute.xlu0 %1101
    %1103 = vrot.lane.b32.xlu0 %v1098, 64
    %v1104 = vpop.permute.xlu0 %1103
    %v1107 = vmul.f32 %v1071, %v1102
    %v1108 = vmul.f32 %v1072, %v1104
    %v1109 = vmul.f32 %v1061, 0.5
    %v1110 = vmul.f32 %v1063, 0.5
    %v1111 = vtanh.pop %v1109
    %v1112 = vtanh.pop %v1110
    %v1113 = vmul.f32 %v1111, 0.5
    %v1114 = vmul.f32 %v1112, 0.5
    %v1115 = vadd.f32 %v1113, 0.5
    %v1116 = vadd.f32 %v1114, 0.5
    %v1117 = vtanh.pop %v1061
    %v1118 = vtanh.pop %v1063
    %v1119 = vmul.f32 %v1115, %v971
    %v1120 = vmul.f32 %v1116, %v972
    %1123 = vrot.lane.b32.xlu0 %v1117, 64
    %v1124 = vpop.permute.xlu0 %1123
    %1125 = vrot.lane.b32.xlu0 %v1118, 64
    %v1126 = vpop.permute.xlu0 %1125
    %v1129 = vmul.f32 %v1115, %v1124
    %v1130 = vmul.f32 %v1116, %v1126
    %1133 = vrot.lane.b32.xlu0 %v1129, 32
    %v1134 = vpop.permute.xlu0 %1133
    %1135 = vrot.lane.b32.xlu0 %v1130, 32
    %v1136 = vpop.permute.xlu0 %1135
    %v1139 = vadd.f32 %v1119, %v1134
    %v1140 = vadd.f32 %v1120, %v1136
    %v1141 = vtanh.pop %v1139
    %v1142 = vtanh.pop %v1140
    %1145 = vrot.lane.b32.xlu0 %v1141, 64
    %v1146 = vpop.permute.xlu0 %1145
    %1147 = vrot.lane.b32.xlu0 %v1142, 64
    %v1148 = vpop.permute.xlu0 %1147
    %v1151 = vmul.f32 %v1115, %v1146
    %v1152 = vmul.f32 %v1116, %v1148
    %v1153 = vpack.c.bf16 %v1107, %v1107
    %v1154 = vpack.c.bf16 %v1108, %v1108
    %v1155 = vpack.c.bf16 %v1151, %v1151
    %v1156 = vpack.c.bf16 %v1152, %v1152
    %1159 = vrot.lane.b32.xlu0 %v1153, 32
    %v1160 = vpop.permute.xlu0 %1159
    %1161 = vrot.lane.b32.xlu0 %v1154, 32
    %v1162 = vpop.permute.xlu0 %1161
    %s1165 = scalar_lea.vmem [#allocation4], 32
    %1166 = vst.msk [vmem:[%s1165] sm:$0xf] %vm493, %v1160
    %1167 = vst.msk [vmem:[%s1165 + $0x4] sm:$0xf] %vm493, %v1162
    %1170 = vrot.lane.b32.xlu0 %v1155, 32
    %v1171 = vpop.permute.xlu0 %1170
    %1172 = vrot.lane.b32.xlu0 %v1156, 32
    %v1173 = vpop.permute.xlu0 %1172
    %s1176 = scalar_lea.vmem [#allocation5], 24
    %1177 = vst.msk [vmem:[%s1176] sm:$0xf] %vm493, %v1171
    %1178 = vst.msk [vmem:[%s1176 + $0x4] sm:$0xf] %vm493, %v1173
    %s1179 = scalar_lea.vmem [#allocation2], 40
    %v1180 = vld [vmem:[%s1179] sm:$0xf]
    %v1181 = vld [vmem:[%s1179 + $0x4] sm:$0xf]
    %v1182 = vunpack.c.l.bf16 %v1180
    %v1183 = vunpack.c.l.bf16 %v1181
    %v1184 = vunpack.c.l.b16 %v1153
    %v1185 = vunpack.c.l.b16 %v1154
    %v1186 = vpack.c.b16 %v1185, %v1184
    %1187 = vrot.lane.b32.xlu0 %v1186, 32
    %v1188 = vpop.permute.xlu0 %1187
    %v1190 = vsel %vm344, %v1188, 0
    %1192 = vmatpush.bf16.msra.mxu0 0
    %1193 = vmatpush.bf16.msra.mxu0 0
    %1194 = vmatpush.bf16.msra.mxu0 0
    %1195 = vmatpush.bf16.msra.mxu0 0
    %1196 = vmatpush.bf16.msra.mxu0 0
    %1197 = vmatpush.bf16.msra.mxu0 0
    %1198 = vmatpush.bf16.msra.mxu0 %v341
    %1199 = vmatpush.bf16.msra.mxu0 %v340
    %1200 = vmatmul.bf16.gmra.mxu0 %v1190
    %v1201 = vpop.f32.mrf.mxu0
    %v1202 = vadd.f32 %v1182, %v1201
    %v1203 = vpop.f32.mrf.mxu0
    %v1204 = vadd.f32 %v1183, %v1203
    %1205 = vdwg.mxu0
    %s1206 = scalar_lea.vmem [#allocation3], 16
    %v1207 = vld [vmem:[%s1206] sm:$0xf]
    %v1208 = vld [vmem:[%s1206 + $0x4] sm:$0xf]
    %v1209 = vunpack.c.l.bf16 %v1207
    %v1210 = vunpack.c.l.bf16 %v1208
    %v1211 = vunpack.c.l.b16 %v1155
    %v1212 = vunpack.c.l.b16 %v1156
    %v1213 = vpack.c.b16 %v1212, %v1211
    %1214 = vrot.lane.b32.xlu0 %v1213, 32
    %v1215 = vpop.permute.xlu0 %1214
    %v1217 = vsel %vm344, %v1215, 0
    %1219 = vmatpush.bf16.msra.mxu0 0
    %1220 = vmatpush.bf16.msra.mxu0 0
    %1221 = vmatpush.bf16.msra.mxu0 0
    %1222 = vmatpush.bf16.msra.mxu0 0
    %1223 = vmatpush.bf16.msra.mxu0 0
    %1224 = vmatpush.bf16.msra.mxu0 0
    %1225 = vmatpush.bf16.msra.mxu0 %v376
    %1226 = vmatpush.bf16.msra.mxu0 %v375
    %1227 = vmatmul.bf16.gmra.mxu0 %v1217
    %v1228 = vpop.f32.mrf.mxu0
    %v1229 = vadd.f32 %v1209, %v1228
    %v1230 = vpop.f32.mrf.mxu0
    %v1231 = vadd.f32 %v1210, %v1230
    %1232 = vdwg.mxu0
    %v1233 = vmul.f32 %v1202, 0.5
    %v1234 = vmul.f32 %v1204, 0.5
    %v1235 = vtanh.pop %v1233
    %v1236 = vtanh.pop %v1234
    %v1237 = vmul.f32 %v1235, 0.5
    %v1238 = vmul.f32 %v1236, 0.5
    %v1239 = vadd.f32 %v1237, 0.5
    %v1240 = vadd.f32 %v1238, 0.5
    %v1241 = vtanh.pop %v1202
    %v1242 = vtanh.pop %v1204
    %v1243 = vmul.f32 %v1239, %v1095
    %v1244 = vmul.f32 %v1240, %v1096
    %1247 = vrot.lane.b32.xlu0 %v1241, 64
    %v1248 = vpop.permute.xlu0 %1247
    %1249 = vrot.lane.b32.xlu0 %v1242, 64
    %v1250 = vpop.permute.xlu0 %1249
    %v1253 = vmul.f32 %v1239, %v1248
    %v1254 = vmul.f32 %v1240, %v1250
    %1257 = vrot.lane.b32.xlu0 %v1253, 32
    %v1258 = vpop.permute.xlu0 %1257
    %1259 = vrot.lane.b32.xlu0 %v1254, 32
    %v1260 = vpop.permute.xlu0 %1259
    %v1263 = vadd.f32 %v1243, %v1258
    %v1264 = vadd.f32 %v1244, %v1260
    %v1265 = vtanh.pop %v1263
    %v1266 = vtanh.pop %v1264
    %1269 = vrot.lane.b32.xlu0 %v1265, 64
    %v1270 = vpop.permute.xlu0 %1269
    %1271 = vrot.lane.b32.xlu0 %v1266, 64
    %v1272 = vpop.permute.xlu0 %1271
    %v1275 = vmul.f32 %v1239, %v1270
    %v1276 = vmul.f32 %v1240, %v1272
    %v1277 = vmul.f32 %v1229, 0.5
    %v1278 = vmul.f32 %v1231, 0.5
    %v1279 = vtanh.pop %v1277
    %v1280 = vtanh.pop %v1278
    %v1281 = vmul.f32 %v1279, 0.5
    %v1282 = vmul.f32 %v1280, 0.5
    %v1283 = vadd.f32 %v1281, 0.5
    %v1284 = vadd.f32 %v1282, 0.5
    %v1285 = vtanh.pop %v1229
    %v1286 = vtanh.pop %v1231
    %v1287 = vmul.f32 %v1283, %v1139
    %v1288 = vmul.f32 %v1284, %v1140
    %1291 = vrot.lane.b32.xlu0 %v1285, 64
    %v1292 = vpop.permute.xlu0 %1291
    %1293 = vrot.lane.b32.xlu0 %v1286, 64
    %v1294 = vpop.permute.xlu0 %1293
    %v1297 = vmul.f32 %v1283, %v1292
    %v1298 = vmul.f32 %v1284, %v1294
    %1301 = vrot.lane.b32.xlu0 %v1297, 32
    %v1302 = vpop.permute.xlu0 %1301
    %1303 = vrot.lane.b32.xlu0 %v1298, 32
    %v1304 = vpop.permute.xlu0 %1303
    %v1307 = vadd.f32 %v1287, %v1302
    %v1308 = vadd.f32 %v1288, %v1304
    %v1309 = vtanh.pop %v1307
    %v1310 = vtanh.pop %v1308
    %1313 = vrot.lane.b32.xlu0 %v1309, 64
    %v1314 = vpop.permute.xlu0 %1313
    %1315 = vrot.lane.b32.xlu0 %v1310, 64
    %v1316 = vpop.permute.xlu0 %1315
    %v1319 = vmul.f32 %v1283, %v1314
    %v1320 = vmul.f32 %v1284, %v1316
    %v1321 = vpack.c.bf16 %v1275, %v1275
    %v1322 = vpack.c.bf16 %v1276, %v1276
    %v1323 = vpack.c.bf16 %v1319, %v1319
    %v1324 = vpack.c.bf16 %v1320, %v1320
    %1327 = vrot.lane.b32.xlu0 %v1321, 32
    %v1328 = vpop.permute.xlu0 %1327
    %1329 = vrot.lane.b32.xlu0 %v1322, 32
    %v1330 = vpop.permute.xlu0 %1329
    %s1333 = scalar_lea.vmem [#allocation4], 40
    %1334 = vst.msk [vmem:[%s1333] sm:$0xf] %vm493, %v1328
    %1335 = vst.msk [vmem:[%s1333 + $0x4] sm:$0xf] %vm493, %v1330
    %1338 = vrot.lane.b32.xlu0 %v1323, 32
    %v1339 = vpop.permute.xlu0 %1338
    %1340 = vrot.lane.b32.xlu0 %v1324, 32
    %v1341 = vpop.permute.xlu0 %1340
    %s1344 = scalar_lea.vmem [#allocation5], 16
    %1345 = vst.msk [vmem:[%s1344] sm:$0xf] %vm493, %v1339
    %1346 = vst.msk [vmem:[%s1344 + $0x4] sm:$0xf] %vm493, %v1341
    %s1347 = scalar_lea.vmem [#allocation2], 48
    %v1348 = vld [vmem:[%s1347] sm:$0xf]
    %v1349 = vld [vmem:[%s1347 + $0x4] sm:$0xf]
    %v1350 = vunpack.c.l.bf16 %v1348
    %v1351 = vunpack.c.l.bf16 %v1349
    %v1352 = vunpack.c.l.b16 %v1321
    %v1353 = vunpack.c.l.b16 %v1322
    %v1354 = vpack.c.b16 %v1353, %v1352
    %1355 = vrot.lane.b32.xlu0 %v1354, 32
    %v1356 = vpop.permute.xlu0 %1355
    %v1358 = vsel %vm344, %v1356, 0
    %1360 = vmatpush.bf16.msra.mxu0 0
    %1361 = vmatpush.bf16.msra.mxu0 0
    %1362 = vmatpush.bf16.msra.mxu0 0
    %1363 = vmatpush.bf16.msra.mxu0 0
    %1364 = vmatpush.bf16.msra.mxu0 0
    %1365 = vmatpush.bf16.msra.mxu0 0
    %1366 = vmatpush.bf16.msra.mxu0 %v341
    %1367 = vmatpush.bf16.msra.mxu0 %v340
    %1368 = vmatmul.bf16.gmra.mxu0 %v1358
    %v1369 = vpop.f32.mrf.mxu0
    %v1370 = vadd.f32 %v1350, %v1369
    %v1371 = vpop.f32.mrf.mxu0
    %v1372 = vadd.f32 %v1351, %v1371
    %1373 = vdwg.mxu0
    %s1374 = scalar_lea.vmem [#allocation3], 8
    %v1375 = vld [vmem:[%s1374] sm:$0xf]
    %v1376 = vld [vmem:[%s1374 + $0x4] sm:$0xf]
    %v1377 = vunpack.c.l.bf16 %v1375
    %v1378 = vunpack.c.l.bf16 %v1376
    %v1379 = vunpack.c.l.b16 %v1323
    %v1380 = vunpack.c.l.b16 %v1324
    %v1381 = vpack.c.b16 %v1380, %v1379
    %1382 = vrot.lane.b32.xlu0 %v1381, 32
    %v1383 = vpop.permute.xlu0 %1382
    %v1385 = vsel %vm344, %v1383, 0
    %1387 = vmatpush.bf16.msra.mxu0 0
    %1388 = vmatpush.bf16.msra.mxu0 0
    %1389 = vmatpush.bf16.msra.mxu0 0
    %1390 = vmatpush.bf16.msra.mxu0 0
    %1391 = vmatpush.bf16.msra.mxu0 0
    %1392 = vmatpush.bf16.msra.mxu0 0
    %1393 = vmatpush.bf16.msra.mxu0 %v376
    %1394 = vmatpush.bf16.msra.mxu0 %v375
    %1395 = vmatmul.bf16.gmra.mxu0 %v1385
    %v1396 = vpop.f32.mrf.mxu0
    %v1397 = vadd.f32 %v1377, %v1396
    %v1398 = vpop.f32.mrf.mxu0
    %v1399 = vadd.f32 %v1378, %v1398
    %1400 = vdwg.mxu0
    %v1401 = vmul.f32 %v1370, 0.5
    %v1402 = vmul.f32 %v1372, 0.5
    %v1403 = vtanh.pop %v1401
    %v1404 = vtanh.pop %v1402
    %v1405 = vmul.f32 %v1403, 0.5
    %v1406 = vmul.f32 %v1404, 0.5
    %v1407 = vadd.f32 %v1405, 0.5
    %v1408 = vadd.f32 %v1406, 0.5
    %v1409 = vtanh.pop %v1370
    %v1410 = vtanh.pop %v1372
    %v1411 = vmul.f32 %v1407, %v1263
    %v1412 = vmul.f32 %v1408, %v1264
    %1415 = vrot.lane.b32.xlu0 %v1409, 64
    %v1416 = vpop.permute.xlu0 %1415
    %1417 = vrot.lane.b32.xlu0 %v1410, 64
    %v1418 = vpop.permute.xlu0 %1417
    %v1421 = vmul.f32 %v1407, %v1416
    %v1422 = vmul.f32 %v1408, %v1418
    %1425 = vrot.lane.b32.xlu0 %v1421, 32
    %v1426 = vpop.permute.xlu0 %1425
    %1427 = vrot.lane.b32.xlu0 %v1422, 32
    %v1428 = vpop.permute.xlu0 %1427
    %v1431 = vadd.f32 %v1411, %v1426
    %v1432 = vadd.f32 %v1412, %v1428
    %v1433 = vtanh.pop %v1431
    %v1434 = vtanh.pop %v1432
    %1437 = vrot.lane.b32.xlu0 %v1433, 64
    %v1438 = vpop.permute.xlu0 %1437
    %1439 = vrot.lane.b32.xlu0 %v1434, 64
    %v1440 = vpop.permute.xlu0 %1439
    %v1443 = vmul.f32 %v1407, %v1438
    %v1444 = vmul.f32 %v1408, %v1440
    %v1445 = vmul.f32 %v1397, 0.5
    %v1446 = vmul.f32 %v1399, 0.5
    %v1447 = vtanh.pop %v1445
    %v1448 = vtanh.pop %v1446
    %v1449 = vmul.f32 %v1447, 0.5
    %v1450 = vmul.f32 %v1448, 0.5
    %v1451 = vadd.f32 %v1449, 0.5
    %v1452 = vadd.f32 %v1450, 0.5
    %v1453 = vtanh.pop %v1397
    %v1454 = vtanh.pop %v1399
    %v1455 = vmul.f32 %v1451, %v1307
    %v1456 = vmul.f32 %v1452, %v1308
    %1459 = vrot.lane.b32.xlu0 %v1453, 64
    %v1460 = vpop.permute.xlu0 %1459
    %1461 = vrot.lane.b32.xlu0 %v1454, 64
    %v1462 = vpop.permute.xlu0 %1461
    %v1465 = vmul.f32 %v1451, %v1460
    %v1466 = vmul.f32 %v1452, %v1462
    %1469 = vrot.lane.b32.xlu0 %v1465, 32
    %v1470 = vpop.permute.xlu0 %1469
    %1471 = vrot.lane.b32.xlu0 %v1466, 32
    %v1472 = vpop.permute.xlu0 %1471
    %v1475 = vadd.f32 %v1455, %v1470
    %v1476 = vadd.f32 %v1456, %v1472
    %v1477 = vtanh.pop %v1475
    %v1478 = vtanh.pop %v1476
    %1481 = vrot.lane.b32.xlu0 %v1477, 64
    %v1482 = vpop.permute.xlu0 %1481
    %1483 = vrot.lane.b32.xlu0 %v1478, 64
    %v1484 = vpop.permute.xlu0 %1483
    %v1487 = vmul.f32 %v1451, %v1482
    %v1488 = vmul.f32 %v1452, %v1484
    %v1489 = vpack.c.bf16 %v1443, %v1443
    %v1490 = vpack.c.bf16 %v1444, %v1444
    %v1491 = vpack.c.bf16 %v1487, %v1487
    %v1492 = vpack.c.bf16 %v1488, %v1488
    %1495 = vrot.lane.b32.xlu0 %v1489, 32
    %v1496 = vpop.permute.xlu0 %1495
    %1497 = vrot.lane.b32.xlu0 %v1490, 32
    %v1498 = vpop.permute.xlu0 %1497
    %s1501 = scalar_lea.vmem [#allocation4], 48
    %1502 = vst.msk [vmem:[%s1501] sm:$0xf] %vm493, %v1496
    %1503 = vst.msk [vmem:[%s1501 + $0x4] sm:$0xf] %vm493, %v1498
    %1506 = vrot.lane.b32.xlu0 %v1491, 32
    %v1507 = vpop.permute.xlu0 %1506
    %1508 = vrot.lane.b32.xlu0 %v1492, 32
    %v1509 = vpop.permute.xlu0 %1508
    %s1512 = scalar_lea.vmem [#allocation5], 8
    %1513 = vst.msk [vmem:[%s1512] sm:$0xf] %vm493, %v1507
    %1514 = vst.msk [vmem:[%s1512 + $0x4] sm:$0xf] %vm493, %v1509
    %s1515 = scalar_lea.vmem [#allocation2], 56
    %v1516 = vld [vmem:[%s1515] sm:$0xf]
    %v1517 = vld [vmem:[%s1515 + $0x4] sm:$0xf]
    %v1518 = vunpack.c.l.bf16 %v1516
    %v1519 = vunpack.c.l.bf16 %v1517
    %v1520 = vunpack.c.l.b16 %v1489
    %v1521 = vunpack.c.l.b16 %v1490
    %v1522 = vpack.c.b16 %v1521, %v1520
    %1523 = vrot.lane.b32.xlu0 %v1522, 32
    %v1524 = vpop.permute.xlu0 %1523
    %v1526 = vsel %vm344, %v1524, 0
    %1528 = vmatpush.bf16.msra.mxu0 0
    %1529 = vmatpush.bf16.msra.mxu0 0
    %1530 = vmatpush.bf16.msra.mxu0 0
    %1531 = vmatpush.bf16.msra.mxu0 0
    %1532 = vmatpush.bf16.msra.mxu0 0
    %1533 = vmatpush.bf16.msra.mxu0 0
    %1534 = vmatpush.bf16.msra.mxu0 %v341
    %1535 = vmatpush.bf16.msra.mxu0 %v340
    %1536 = vmatmul.bf16.gmra.mxu0 %v1526
    %v1537 = vpop.f32.mrf.mxu0
    %v1538 = vadd.f32 %v1518, %v1537
    %v1539 = vpop.f32.mrf.mxu0
    %v1540 = vadd.f32 %v1519, %v1539
    %1541 = vdwg.mxu0
    %v1542 = vld [vmem:[#allocation3] sm:$0xf]
    %v1543 = vld [vmem:[#allocation3 + $0x4] sm:$0xf]
    %v1544 = vunpack.c.l.bf16 %v1542
    %v1545 = vunpack.c.l.bf16 %v1543
    %v1546 = vunpack.c.l.b16 %v1491
    %v1547 = vunpack.c.l.b16 %v1492
    %v1548 = vpack.c.b16 %v1547, %v1546
    %1549 = vrot.lane.b32.xlu0 %v1548, 32
    %v1550 = vpop.permute.xlu0 %1549
    %v1552 = vsel %vm344, %v1550, 0
    %1554 = vmatpush.bf16.msra.mxu0 0
    %1555 = vmatpush.bf16.msra.mxu0 0
    %1556 = vmatpush.bf16.msra.mxu0 0
    %1557 = vmatpush.bf16.msra.mxu0 0
    %1558 = vmatpush.bf16.msra.mxu0 0
    %1559 = vmatpush.bf16.msra.mxu0 0
    %1560 = vmatpush.bf16.msra.mxu0 %v376
    %1561 = vmatpush.bf16.msra.mxu0 %v375
    %1562 = vmatmul.bf16.gmra.mxu0 %v1552
    %v1563 = vpop.f32.mrf.mxu0
    %v1564 = vadd.f32 %v1544, %v1563
    %v1565 = vpop.f32.mrf.mxu0
    %v1566 = vadd.f32 %v1545, %v1565
    %1567 = vdwg.mxu0
    %v1568 = vmul.f32 %v1538, 0.5
    %v1569 = vmul.f32 %v1540, 0.5
    %v1570 = vtanh.pop %v1568
    %v1571 = vtanh.pop %v1569
    %v1572 = vmul.f32 %v1570, 0.5
    %v1573 = vmul.f32 %v1571, 0.5
    %v1574 = vadd.f32 %v1572, 0.5
    %v1575 = vadd.f32 %v1573, 0.5
    %v1576 = vtanh.pop %v1538
    %v1577 = vtanh.pop %v1540
    %v1578 = vmul.f32 %v1574, %v1431
    %v1579 = vmul.f32 %v1575, %v1432
    %1582 = vrot.lane.b32.xlu0 %v1576, 64
    %v1583 = vpop.permute.xlu0 %1582
    %1584 = vrot.lane.b32.xlu0 %v1577, 64
    %v1585 = vpop.permute.xlu0 %1584
    %v1588 = vmul.f32 %v1574, %v1583
    %v1589 = vmul.f32 %v1575, %v1585
    %1592 = vrot.lane.b32.xlu0 %v1588, 32
    %v1593 = vpop.permute.xlu0 %1592
    %1594 = vrot.lane.b32.xlu0 %v1589, 32
    %v1595 = vpop.permute.xlu0 %1594
    %v1598 = vadd.f32 %v1578, %v1593
    %v1599 = vadd.f32 %v1579, %v1595
    %v1600 = vtanh.pop %v1598
    %v1601 = vtanh.pop %v1599
    %1604 = vrot.lane.b32.xlu0 %v1600, 64
    %v1605 = vpop.permute.xlu0 %1604
    %1606 = vrot.lane.b32.xlu0 %v1601, 64
    %v1607 = vpop.permute.xlu0 %1606
    %v1610 = vmul.f32 %v1574, %v1605
    %v1611 = vmul.f32 %v1575, %v1607
    %v1612 = vmul.f32 %v1564, 0.5
    %v1613 = vmul.f32 %v1566, 0.5
    %v1614 = vtanh.pop %v1612
    %v1615 = vtanh.pop %v1613
    %v1616 = vmul.f32 %v1614, 0.5
    %v1617 = vmul.f32 %v1615, 0.5
    %v1618 = vadd.f32 %v1616, 0.5
    %v1619 = vadd.f32 %v1617, 0.5
    %v1620 = vtanh.pop %v1564
    %v1621 = vtanh.pop %v1566
    %v1622 = vmul.f32 %v1618, %v1475
    %v1623 = vmul.f32 %v1619, %v1476
    %1626 = vrot.lane.b32.xlu0 %v1620, 64
    %v1627 = vpop.permute.xlu0 %1626
    %1628 = vrot.lane.b32.xlu0 %v1621, 64
    %v1629 = vpop.permute.xlu0 %1628
    %v1632 = vmul.f32 %v1618, %v1627
    %v1633 = vmul.f32 %v1619, %v1629
    %1636 = vrot.lane.b32.xlu0 %v1632, 32
    %v1637 = vpop.permute.xlu0 %1636
    %1638 = vrot.lane.b32.xlu0 %v1633, 32
    %v1639 = vpop.permute.xlu0 %1638
    %v1642 = vadd.f32 %v1622, %v1637
    %v1643 = vadd.f32 %v1623, %v1639
    %v1644 = vtanh.pop %v1642
    %v1645 = vtanh.pop %v1643
    %1648 = vrot.lane.b32.xlu0 %v1644, 64
    %v1649 = vpop.permute.xlu0 %1648
    %1650 = vrot.lane.b32.xlu0 %v1645, 64
    %v1651 = vpop.permute.xlu0 %1650
    %v1654 = vmul.f32 %v1618, %v1649
    %v1655 = vmul.f32 %v1619, %v1651
    %v1656 = vpack.c.bf16 %v1610, %v1610
    %v1657 = vpack.c.bf16 %v1611, %v1611
    %v1658 = vpack.c.bf16 %v1654, %v1654
    %v1659 = vpack.c.bf16 %v1655, %v1655
    %1662 = vrot.lane.b32.xlu0 %v1656, 32
    %v1663 = vpop.permute.xlu0 %1662
    %1664 = vrot.lane.b32.xlu0 %v1657, 32
    %v1665 = vpop.permute.xlu0 %1664
    %s1668 = scalar_lea.vmem [#allocation4], 56
    %1669 = vst.msk [vmem:[%s1668] sm:$0xf] %vm493, %v1663
    %1670 = vst.msk [vmem:[%s1668 + $0x4] sm:$0xf] %vm493, %v1665
    %1673 = vrot.lane.b32.xlu0 %v1658, 32
    %v1674 = vpop.permute.xlu0 %1673
    %1675 = vrot.lane.b32.xlu0 %v1659, 32
    %v1676 = vpop.permute.xlu0 %1675
    %1679 = vst.msk [vmem:[#allocation5] sm:$0xf] %vm493, %v1674
    %1680 = vst.msk [vmem:[#allocation5 + $0x4] sm:$0xf] %vm493, %v1676
    %v1681 = vld [vmem:[#allocation4] sm:$0xf]
    %v1682 = vld [vmem:[#allocation4 + $0x4] sm:$0xf]
    %v1683 = vld [vmem:[#allocation4 + $0x8] sm:$0xf]
    %v1684 = vld [vmem:[#allocation4 + $0xc] sm:$0xf]
    %v1685 = vld [vmem:[#allocation4 + $0x10] sm:$0xf]
    %v1686 = vld [vmem:[#allocation4 + $0x14] sm:$0xf]
    %v1687 = vld [vmem:[#allocation4 + $0x18] sm:$0xf]
    %v1688 = vld [vmem:[#allocation4 + $0x1c] sm:$0xf]
    %v1689 = vld [vmem:[#allocation4 + $0x20] sm:$0xf]
    %v1690 = vld [vmem:[#allocation4 + $0x24] sm:$0xf]
    %v1691 = vld [vmem:[#allocation4 + $0x28] sm:$0xf]
    %v1692 = vld [vmem:[#allocation4 + $0x2c] sm:$0xf]
    %v1693 = vld [vmem:[#allocation4 + $0x30] sm:$0xf]
    %v1694 = vld [vmem:[#allocation4 + $0x34] sm:$0xf]
    %v1695 = vld [vmem:[#allocation4 + $0x38] sm:$0xf]
    %v1696 = vld [vmem:[#allocation4 + $0x3c] sm:$0xf]
    %v1697 = vld [vmem:[%s7] sm:$0xf]
    %v1698 = vld [vmem:[%s7 + $0x4] sm:$0xf]
    %v1699 = vld [vmem:[%s7 + $0x8] sm:$0xf]
    %v1700 = vld [vmem:[%s7 + $0xc] sm:$0xf]
    %v1701 = vld [vmem:[#allocation5] sm:$0xf]
    %v1702 = vld [vmem:[#allocation5 + $0x4] sm:$0xf]
    %v1703 = vld [vmem:[#allocation5 + $0x8] sm:$0xf]
    %v1704 = vld [vmem:[#allocation5 + $0xc] sm:$0xf]
    %v1705 = vld [vmem:[#allocation5 + $0x10] sm:$0xf]
    %v1706 = vld [vmem:[#allocation5 + $0x14] sm:$0xf]
    %v1707 = vld [vmem:[#allocation5 + $0x18] sm:$0xf]
    %v1708 = vld [vmem:[#allocation5 + $0x1c] sm:$0xf]
    %v1709 = vld [vmem:[#allocation5 + $0x20] sm:$0xf]
    %v1710 = vld [vmem:[#allocation5 + $0x24] sm:$0xf]
    %v1711 = vld [vmem:[#allocation5 + $0x28] sm:$0xf]
    %v1712 = vld [vmem:[#allocation5 + $0x2c] sm:$0xf]
    %v1713 = vld [vmem:[#allocation5 + $0x30] sm:$0xf]
    %v1714 = vld [vmem:[#allocation5 + $0x34] sm:$0xf]
    %v1715 = vld [vmem:[#allocation5 + $0x38] sm:$0xf]
    %v1716 = vld [vmem:[#allocation5 + $0x3c] sm:$0xf]
    %v1717 = vld [vmem:[%s8] sm:$0xf]
    %v1718 = vld [vmem:[%s8 + $0x4] sm:$0xf]
    %v1719 = vld [vmem:[%s8 + $0x8] sm:$0xf]
    %v1720 = vld [vmem:[%s8 + $0xc] sm:$0xf]
    %v1737 = vunpack.c.l.b16 %v1701
    %v1738 = vunpack.c.l.b16 %v1702
    %v1739 = vunpack.c.l.b16 %v1703
    %v1740 = vunpack.c.l.b16 %v1704
    %v1741 = vunpack.c.l.b16 %v1705
    %v1742 = vunpack.c.l.b16 %v1706
    %v1743 = vunpack.c.l.b16 %v1707
    %v1744 = vunpack.c.l.b16 %v1708
    %v1745 = vunpack.c.l.b16 %v1709
    %v1746 = vunpack.c.l.b16 %v1710
    %v1747 = vunpack.c.l.b16 %v1711
    %v1748 = vunpack.c.l.b16 %v1712
    %v1749 = vunpack.c.l.b16 %v1713
    %v1750 = vunpack.c.l.b16 %v1714
    %v1751 = vunpack.c.l.b16 %v1715
    %v1752 = vunpack.c.l.b16 %v1716
    %v1753 = vpack.c.b16 %v1738, %v1737
    %v1754 = vpack.c.b16 %v1740, %v1739
    %v1755 = vpack.c.b16 %v1742, %v1741
    %v1756 = vpack.c.b16 %v1744, %v1743
    %v1757 = vpack.c.b16 %v1746, %v1745
    %v1758 = vpack.c.b16 %v1748, %v1747
    %v1759 = vpack.c.b16 %v1750, %v1749
    %v1760 = vpack.c.b16 %v1752, %v1751
    %v1765 = vunpack.c.l.b16 %v1717
    %v1766 = vunpack.c.l.b16 %v1718
    %v1767 = vunpack.c.l.b16 %v1719
    %v1768 = vunpack.c.l.b16 %v1720
    %v1769 = vpack.c.b16 %v1766, %v1765
    %v1770 = vpack.c.b16 %v1768, %v1767
    %v1774 = vsel %vm344, %v1753, 0
    %v1777 = vsel %vm344, %v1754, 0
    %v1780 = vsel %vm344, %v1755, 0
    %v1783 = vsel %vm344, %v1756, 0
    %v1786 = vsel %vm344, %v1757, 0
    %v1789 = vsel %vm344, %v1758, 0
    %v1792 = vsel %vm344, %v1759, 0
    %v1795 = vsel %vm344, %v1760, 0
    %1797 = vmatpush.bf16.msra.mxu0 0
    %1798 = vmatpush.bf16.msra.mxu0 0
    %1799 = vmatpush.bf16.msra.mxu0 0
    %1800 = vmatpush.bf16.msra.mxu0 0
    %1801 = vmatpush.bf16.msra.mxu0 0
    %1802 = vmatpush.bf16.msra.mxu0 0
    %1803 = vmatpush.bf16.msra.mxu0 %v1770
    %1804 = vmatpush.bf16.msra.mxu0 %v1769
    %1805 = vmatmul.bf16.gmra.mxu0 %v1774
    %v1806 = vpop.f32.mrf.mxu0
    %v1807 = vadd.f32 0.0, %v1806
    %v1808 = vpop.f32.mrf.mxu0
    %v1809 = vadd.f32 0.0, %v1808
    %1810 = vmatmul.bf16.gmra.mxu0 %v1777
    %v1811 = vpop.f32.mrf.mxu0
    %v1812 = vadd.f32 0.0, %v1811
    %v1813 = vpop.f32.mrf.mxu0
    %v1814 = vadd.f32 0.0, %v1813
    %1815 = vmatmul.bf16.gmra.mxu0 %v1780
    %v1816 = vpop.f32.mrf.mxu0
    %v1817 = vadd.f32 0.0, %v1816
    %v1818 = vpop.f32.mrf.mxu0
    %v1819 = vadd.f32 0.0, %v1818
    %1820 = vmatmul.bf16.gmra.mxu0 %v1783
    %v1821 = vpop.f32.mrf.mxu0
    %v1822 = vadd.f32 0.0, %v1821
    %v1823 = vpop.f32.mrf.mxu0
    %v1824 = vadd.f32 0.0, %v1823
    %1825 = vmatmul.bf16.gmra.mxu0 %v1786
    %v1826 = vpop.f32.mrf.mxu0
    %v1827 = vadd.f32 0.0, %v1826
    %v1828 = vpop.f32.mrf.mxu0
    %v1829 = vadd.f32 0.0, %v1828
    %1830 = vmatmul.bf16.gmra.mxu0 %v1789
    %v1831 = vpop.f32.mrf.mxu0
    %v1832 = vadd.f32 0.0, %v1831
    %v1833 = vpop.f32.mrf.mxu0
    %v1834 = vadd.f32 0.0, %v1833
    %1835 = vmatmul.bf16.gmra.mxu0 %v1792
    %v1836 = vpop.f32.mrf.mxu0
    %v1837 = vadd.f32 0.0, %v1836
    %v1838 = vpop.f32.mrf.mxu0
    %v1839 = vadd.f32 0.0, %v1838
    %1840 = vmatmul.bf16.gmra.mxu0 %v1795
    %v1841 = vpop.f32.mrf.mxu0
    %v1842 = vadd.f32 0.0, %v1841
    %v1843 = vpop.f32.mrf.mxu0
    %v1844 = vadd.f32 0.0, %v1843
    %1845 = vdwg.mxu0
    %v1862 = vunpack.c.l.b16 %v1681
    %v1863 = vunpack.c.l.b16 %v1682
    %v1864 = vunpack.c.l.b16 %v1683
    %v1865 = vunpack.c.l.b16 %v1684
    %v1866 = vunpack.c.l.b16 %v1685
    %v1867 = vunpack.c.l.b16 %v1686
    %v1868 = vunpack.c.l.b16 %v1687
    %v1869 = vunpack.c.l.b16 %v1688
    %v1870 = vunpack.c.l.b16 %v1689
    %v1871 = vunpack.c.l.b16 %v1690
    %v1872 = vunpack.c.l.b16 %v1691
    %v1873 = vunpack.c.l.b16 %v1692
    %v1874 = vunpack.c.l.b16 %v1693
    %v1875 = vunpack.c.l.b16 %v1694
    %v1876 = vunpack.c.l.b16 %v1695
    %v1877 = vunpack.c.l.b16 %v1696
    %v1878 = vpack.c.b16 %v1863, %v1862
    %v1879 = vpack.c.b16 %v1865, %v1864
    %v1880 = vpack.c.b16 %v1867, %v1866
    %v1881 = vpack.c.b16 %v1869, %v1868
    %v1882 = vpack.c.b16 %v1871, %v1870
    %v1883 = vpack.c.b16 %v1873, %v1872
    %v1884 = vpack.c.b16 %v1875, %v1874
    %v1885 = vpack.c.b16 %v1877, %v1876
    %v1890 = vunpack.c.l.b16 %v1697
    %v1891 = vunpack.c.l.b16 %v1698
    %v1892 = vunpack.c.l.b16 %v1699
    %v1893 = vunpack.c.l.b16 %v1700
    %v1894 = vpack.c.b16 %v1891, %v1890
    %v1895 = vpack.c.b16 %v1893, %v1892
    %v1899 = vsel %vm344, %v1878, 0
    %v1902 = vsel %vm344, %v1879, 0
    %v1905 = vsel %vm344, %v1880, 0
    %v1908 = vsel %vm344, %v1881, 0
    %v1911 = vsel %vm344, %v1882, 0
    %v1914 = vsel %vm344, %v1883, 0
    %v1917 = vsel %vm344, %v1884, 0
    %v1920 = vsel %vm344, %v1885, 0
    %1922 = vmatpush.bf16.msra.mxu0 0
    %1923 = vmatpush.bf16.msra.mxu0 0
    %1924 = vmatpush.bf16.msra.mxu0 0
    %1925 = vmatpush.bf16.msra.mxu0 0
    %1926 = vmatpush.bf16.msra.mxu0 0
    %1927 = vmatpush.bf16.msra.mxu0 0
    %1928 = vmatpush.bf16.msra.mxu0 %v1895
    %1929 = vmatpush.bf16.msra.mxu0 %v1894
    %1930 = vmatmul.bf16.gmra.mxu0 %v1899
    %v1931 = vpop.f32.mrf.mxu0
    %v1932 = vadd.f32 %v1807, %v1931
    %v1933 = vpop.f32.mrf.mxu0
    %v1934 = vadd.f32 %v1809, %v1933
    %1935 = vmatmul.bf16.gmra.mxu0 %v1902
    %v1936 = vpop.f32.mrf.mxu0
    %v1937 = vadd.f32 %v1812, %v1936
    %v1938 = vpop.f32.mrf.mxu0
    %v1939 = vadd.f32 %v1814, %v1938
    %1940 = vmatmul.bf16.gmra.mxu0 %v1905
    %v1941 = vpop.f32.mrf.mxu0
    %v1942 = vadd.f32 %v1817, %v1941
    %v1943 = vpop.f32.mrf.mxu0
    %v1944 = vadd.f32 %v1819, %v1943
    %1945 = vmatmul.bf16.gmra.mxu0 %v1908
    %v1946 = vpop.f32.mrf.mxu0
    %v1947 = vadd.f32 %v1822, %v1946
    %v1948 = vpop.f32.mrf.mxu0
    %v1949 = vadd.f32 %v1824, %v1948
    %1950 = vmatmul.bf16.gmra.mxu0 %v1911
    %v1951 = vpop.f32.mrf.mxu0
    %v1952 = vadd.f32 %v1827, %v1951
    %v1953 = vpop.f32.mrf.mxu0
    %v1954 = vadd.f32 %v1829, %v1953
    %1955 = vmatmul.bf16.gmra.mxu0 %v1914
    %v1956 = vpop.f32.mrf.mxu0
    %v1957 = vadd.f32 %v1832, %v1956
    %v1958 = vpop.f32.mrf.mxu0
    %v1959 = vadd.f32 %v1834, %v1958
    %1960 = vmatmul.bf16.gmra.mxu0 %v1917
    %v1961 = vpop.f32.mrf.mxu0
    %v1962 = vadd.f32 %v1837, %v1961
    %v1963 = vpop.f32.mrf.mxu0
    %v1964 = vadd.f32 %v1839, %v1963
    %1965 = vmatmul.bf16.gmra.mxu0 %v1920
    %v1966 = vpop.f32.mrf.mxu0
    %v1967 = vadd.f32 %v1842, %v1966
    %v1968 = vpop.f32.mrf.mxu0
    %v1969 = vadd.f32 %v1844, %v1968
    %1970 = vdwg.mxu0
    %v1971 = vld [vmem:[%s9] sm:$0x1]
    %v1973 = vperm.slane %v1971, 0
    %v1975 = vadd.f32 %v1932, %v1973
    %v1976 = vadd.f32 %v1934, %v1973
    %v1977 = vadd.f32 %v1937, %v1973
    %v1978 = vadd.f32 %v1939, %v1973
    %v1979 = vadd.f32 %v1942, %v1973
    %v1980 = vadd.f32 %v1944, %v1973
    %v1981 = vadd.f32 %v1947, %v1973
    %v1982 = vadd.f32 %v1949, %v1973
    %v1983 = vadd.f32 %v1952, %v1973
    %v1984 = vadd.f32 %v1954, %v1973
    %v1985 = vadd.f32 %v1957, %v1973
    %v1986 = vadd.f32 %v1959, %v1973
    %v1987 = vadd.f32 %v1962, %v1973
    %v1988 = vadd.f32 %v1964, %v1973
    %v1989 = vadd.f32 %v1967, %v1973
    %v1990 = vadd.f32 %v1969, %v1973
    %1991 = vst [vmem:[#allocation9] sm:$0xff] %v1975
    %1992 = vst [vmem:[#allocation9 + $0x8] sm:$0xff] %v1976
    %1993 = vst [vmem:[#allocation9 + $0x10] sm:$0xff] %v1977
    %1994 = vst [vmem:[#allocation9 + $0x18] sm:$0xff] %v1978
    %1995 = vst [vmem:[#allocation9 + $0x20] sm:$0xff] %v1979
    %1996 = vst [vmem:[#allocation9 + $0x28] sm:$0xff] %v1980
    %1997 = vst [vmem:[#allocation9 + $0x30] sm:$0xff] %v1981
    %1998 = vst [vmem:[#allocation9 + $0x38] sm:$0xff] %v1982
    %1999 = vst [vmem:[#allocation9 + $0x40] sm:$0xff] %v1983
    %2000 = vst [vmem:[#allocation9 + $0x48] sm:$0xff] %v1984
    %2001 = vst [vmem:[#allocation9 + $0x50] sm:$0xff] %v1985
    %2002 = vst [vmem:[#allocation9 + $0x58] sm:$0xff] %v1986
    %2003 = vst [vmem:[#allocation9 + $0x60] sm:$0xff] %v1987
    %2004 = vst [vmem:[#allocation9 + $0x68] sm:$0xff] %v1988
    %2005 = vst [vmem:[#allocation9 + $0x70] sm:$0xff] %v1989
    %2006 = vst [vmem:[#allocation9 + $0x78] sm:$0xff] %v1990
    // Predicated region
    $region46: #{tpu_custom_call.1} parent=1 // pred_check
      _
    $region47: #{tpu_custom_call.1} parent=1 // pred_check_branch
      %2008 = sbr.rel (0) target = $region49
    $region48: #{tpu_custom_call.1} parent=1 // pred_region
      %2010 = vsyncadd [#allocation8], 0
      %s2011 = sshll.u32 [#allocation9], 4
      %s2012 = int_to_ptr.vmem [resolvable:$true] %s2011
      %s2013 = sshll.u32 %s10, 4
      %s2014 = int_to_ptr.hbm [resolvable:$true] %s2013
      %2019 = dma.vmem_to_hbm [thread:$0]  %s2012, 2048, %s2014, [#allocation8], 128, 128, 8
    $region49: #{tpu_custom_call.1} parent=1 // pred_fallthru
      _
    // Predicated region
    $region50: #{tpu_custom_call.1} parent=1 // pred_check
      _
    $region51: #{tpu_custom_call.1} parent=1 // pred_check_branch
      %2021 = sbr.rel (0) target = $region53
    $region52: #{tpu_custom_call.1} parent=1 // pred_region
      %2023 = dma.done [#allocation8], 2048
    $region53: #{tpu_custom_call.1} parent=1 // pred_fallthru
      _
    %2024 = vsyncpa [#allocation7], 1
    %2025 = vsyncpa [#allocation8], 1

</llo_original>
